<compile_context>
chip_gen: v7x
topology: tpu7x:2x2x1
jax: 0.10.0
libtpu: 0.0.40
codegen_flags: <defaults>
</compile_context>

<pallas_src>
import jax
import jax.numpy as jnp
import numpy as np
from jax import lax
from jax.experimental import pallas as pl
from jax.experimental.pallas import tpu as pltpu

_UNROLL = 8  # unroll factor for the scalar gather / DMA-issue loops


# --------------------------------------------------------------------------- #
# Shared compute helpers
# --------------------------------------------------------------------------- #
def _cn_count(ai, aj):
    """Common-neighbor count from byte-packed adjacency rows.

    ai/aj hold 4 adjacency entries per int32 word, each byte in {0, 1}:
    bytewise AND == bytewise product, and the sum of the four bytes is the
    per-word CN contribution.  The arithmetic shift (w >> 24) is safe ONLY
    because the packed bytes are 0/1, so the sign bit is never set.  Counts are
    reduced in int32 (exact) and only the (TE, 1) result is cast to f32
    (exact for counts up to 2**24).
    """
    w = ai & aj                                               # (TE, NP) int32
    cnt = (w & 0xFF) + ((w >> 8) & 0xFF) + ((w >> 16) & 0xFF) + (w >> 24)
    return jnp.sum(cnt, axis=-1, keepdims=True).astype(jnp.float32)


def _mlp_head(xi, xj, xcn, beta,
              wij1, bij1, wij2, bij2,
              wc1, bc1, wc2, bc2, wc3, bc3,
              wl1, bl1, wl2, bl2):
    """xijlin / xcnlin / lin MLP stack (eval mode, f32 MXU matmuls)."""
    f32 = jnp.float32
    # xijlin: Linear(in,hid) -> ReLU -> Linear(hid,hid)
    h = jnp.maximum(jnp.dot(xi * xj, wij1[...], preferred_element_type=f32) + bij1[...], 0.0)
    xij = jnp.dot(h, wij2[...], preferred_element_type=f32) + bij2[...]
    # xcnlin: Linear(1,hid) (= broadcast mul-add) -> ReLU -> Linear -> ReLU -> Linear
    h1 = jnp.maximum(xcn * wc1[...] + bc1[...], 0.0)
    h2 = jnp.maximum(jnp.dot(h1, wc2[...], preferred_element_type=f32) + bc2[...], 0.0)
    xcn_out = jnp.dot(h2, wc3[...], preferred_element_type=f32) + bc3[...]
    # combine + lin: Linear(hid,hid) -> ReLU -> Linear(hid,out)
    pre = xcn_out * beta + xij
    hl = jnp.maximum(jnp.dot(pre, wl1[...], preferred_element_type=f32) + bl1[...], 0.0)
    return jnp.dot(hl, wl2[...], preferred_element_type=f32) + bl2[...]


# --------------------------------------------------------------------------- #
# Path 1: everything VMEM-resident (small graphs) -- no HBM gather DMAs at all.
# --------------------------------------------------------------------------- #
def _scn_kernel_resident(
    ei_ref,                                   # (2*E_pad,) int32, SMEM (scalar prefetch)
    x_ref,                                    # (N, in_ch) f32, VMEM resident
    adj_ref,                                  # (N, NP) int32, VMEM resident, byte-packed
    wij1, bij1, wij2, bij2,
    wc1, bc1, wc2, bc2, wc3, bc3,
    wl1, bl1, wl2, bl2,
    beta_ref,                                 # (1, 1) f32, SMEM
    out_ref,                                  # (TE, out_ch)
    xi_buf, xj_buf,                           # (TE, in_ch) f32 VMEM scratch
    ai_buf, aj_buf,                           # (TE, NP) int32 VMEM scratch
):
    te = xi_buf.shape[0]
    e_pad = ei_ref.shape[0] // 2
    e0 = pl.program_id(0) * te

    # In-VMEM row gather: 4 dynamic-index vector copies per edge, unrolled so the
    # scheduler can pack the SMEM index reads + address math (no DMAs, no waits).
    def gather(it, carry):
        base = it * _UNROLL
        for u in range(_UNROLL):
            r = base + u
            ni = ei_ref[e0 + r]
            nj = ei_ref[e_pad + e0 + r]
            xi_buf[pl.ds(r, 1), :] = x_ref[pl.ds(ni, 1), :]
            xj_buf[pl.ds(r, 1), :] = x_ref[pl.ds(nj, 1), :]
            ai_buf[pl.ds(r, 1), :] = adj_ref[pl.ds(ni, 1), :]
            aj_buf[pl.ds(r, 1), :] = adj_ref[pl.ds(nj, 1), :]
        return carry

    lax.fori_loop(0, te // _UNROLL, gather, 0)

    xcn = _cn_count(ai_buf[...], aj_buf[...])
    out_ref[...] = _mlp_head(
        xi_buf[...], xj_buf[...], xcn, beta_ref[0, 0],
        wij1, bij1, wij2, bij2, wc1, bc1, wc2, bc2, wc3, bc3,
        wl1, bl1, wl2, bl2,
    ).astype(out_ref.dtype)


# --------------------------------------------------------------------------- #
# Path 2: adjacency in HBM (large graphs) -- full-row gather DMAs, bulk waits,
# cross-grid-step prefetch.  x stays VMEM-resident.
# --------------------------------------------------------------------------- #
def _scn_kernel_hbm(
    ei_ref,                                   # (2*E_pad,) int32, SMEM
    x_ref,                                    # (N, in_ch) f32, VMEM resident
    adj_hbm,                                  # (N, NP) int32, HBM (memory_space=pl.ANY)
    wij1, bij1, wij2, bij2,
    wc1, bc1, wc2, bc2, wc3, bc3,
    wl1, bl1, wl2, bl2,
    beta_ref,                                 # (1, 1) f32, SMEM
    out_ref,                                  # (TE, out_ch)
    xi_buf, xj_buf,                           # (TE, in_ch) f32 VMEM scratch
    ai_buf, aj_buf,                           # (2, TE, NP) int32, double-buffered
    adj_sem,                                  # DMA sems (2, 2): [stream (ai/aj), slot]
):
    te = xi_buf.shape[0]
    e_pad = ei_ref.shape[0] // 2
    step = pl.program_id(0)
    nsteps = pl.num_programs(0)
    slot = step & 1

    # One full packed-row DMA per edge endpoint (NP*4 bytes each), unrolled issue.
    def issue_tile(tile_idx, dst_slot):
        base = tile_idx * te

        def body(it, carry):
            b = it * _UNROLL
            for u in range(_UNROLL):
                r = b + u
                ni = ei_ref[base + r]
                nj = ei_ref[e_pad + base + r]
                pltpu.make_async_copy(
                    adj_hbm.at[pl.ds(ni, 1), :],
                    ai_buf.at[dst_slot, pl.ds(r, 1), :],
                    adj_sem.at[0, dst_slot]).start()
                pltpu.make_async_copy(
                    adj_hbm.at[pl.ds(nj, 1), :],
                    aj_buf.at[dst_slot, pl.ds(r, 1), :],
                    adj_sem.at[1, dst_slot]).start()
            return carry

        lax.fori_loop(0, te // _UNROLL, body, 0)

    # Prime this tile's gathers on the very first step only ...
    @pl.when(step == 0)
    def _():
        issue_tile(step, slot)

    # ... and prefetch the NEXT tile into the other slot (cross-grid-step prefetch)
    # so its HBM latency overlaps this step's x gather + CN + MLP compute.
    @pl.when(step + 1 < nsteps)
    def _():
        issue_tile(step + 1, 1 - slot)

    # Gather xi/xj from VMEM-resident x while the adjacency DMAs are in flight.
    e0 = step * te

    def gather_x(it, carry):
        b = it * _UNROLL
        for u in range(_UNROLL):
            r = b + u
            ni = ei_ref[e0 + r]
            nj = ei_ref[e_pad + e0 + r]
            xi_buf[pl.ds(r, 1), :] = x_ref[pl.ds(ni, 1), :]
            xj_buf[pl.ds(r, 1), :] = x_ref[pl.ds(nj, 1), :]
        return carry

    lax.fori_loop(0, te // _UNROLL, gather_x, 0)

    # ONE bulk wait per stream: dummy descriptor whose byte count (te rows x NP int32)
    # exactly equals the sum of the te issued row copies -- replaces te per-row waits.
    pltpu.make_async_copy(adj_hbm.at[pl.ds(0, te), :], ai_buf.at[slot],
                          adj_sem.at[0, slot]).wait()
    pltpu.make_async_copy(adj_hbm.at[pl.ds(0, te), :], aj_buf.at[slot],
                          adj_sem.at[1, slot]).wait()

    xcn = _cn_count(ai_buf[slot], aj_buf[slot])
    out_ref[...] = _mlp_head(
        xi_buf[...], xj_buf[...], xcn, beta_ref[0, 0],
        wij1, bij1, wij2, bij2, wc1, bc1, wc2, bc2, wc3, bc3,
        wl1, bl1, wl2, bl2,
    ).astype(out_ref.dtype)


# --------------------------------------------------------------------------- #
# Host-side helpers + wrapper
# --------------------------------------------------------------------------- #
def pack_adjacency(adj, pad_cols_to=512):
    """Byte-packs a binary {0,1} adjacency matrix: 4 neighbors per int32 word.

    Columns are zero-padded to a multiple of `pad_cols_to` (128 packed lanes) for a
    lane-dense layout; zero padding never contributes to the CN count.
    """
    assert pad_cols_to % 512 == 0
    a = np.asarray(adj)
    n_rows, n_cols = a.shape
    n_cols_pad = -(-n_cols // pad_cols_to) * pad_cols_to
    a8 = np.zeros((n_rows, n_cols_pad), np.uint8)
    a8[:, :n_cols] = (a != 0).astype(np.uint8)
    packed = a8.reshape(n_rows, n_cols_pad // 4, 4).view(np.int32)[..., 0]
    return jnp.asarray(packed)                                # (n_rows, n_cols_pad // 4)


def scn_link_predictor(x, adj_packed, tar_ei, params, *, tile_e=256, adj_in_vmem=None):
    """Fused SCNLinkPredictor forward.

    x          : (N, in_ch) f32 node features (kept VMEM-resident)
    adj_packed : (N, NP) int32 byte-packed binary adjacency
    tar_ei     : (2, E) int32 target edge endpoints
    """
    n_nodes, in_ch = x.shape
    assert adj_packed.shape[0] == n_nodes
    np2 = adj_packed.shape[1]
    assert tile_e % 8 == 0 and tile_e % _UNROLL == 0

    hid = params["wij1"].shape[1]
    out_ch = params["wl2"].shape[1]

    adj_bytes = n_nodes * np2 * 4
    x_bytes = n_nodes * in_ch * 4
    if adj_in_vmem is None:
        # Keep the packed adjacency resident when it comfortably fits VMEM on every
        # generation (v7x: 64 MiB/TC); otherwise use the HBM row-gather fallback.
        adj_in_vmem = adj_bytes <= 16 * 1024 * 1024
    assert x_bytes <= 8 * 1024 * 1024, "x is kept VMEM-resident in this kernel"

    # Pad E to a multiple of 2*tile_e (even number of edge tiles so the edge axis
    # splits evenly across v7x's two TensorCores).  Padded edges point at node 0
    # (in-bounds) and are sliced off below.
    e = tar_ei.shape[1]
    e_pad = -(-e // (2 * tile_e)) * (2 * tile_e)
    tar_ei = tar_ei.astype(jnp.int32)
    if e_pad != e:
        tar_ei = jnp.pad(tar_ei, ((0, 0), (0, e_pad - e)))
    # Flatten to 1-D for SMEM (a (2, E) SMEM array pads rows 2 -> 8, 4x waste).
    ei_flat = tar_ei.reshape(-1)
    num_tiles = e_pad // tile_e

    full2d = lambda shape: pl.BlockSpec(shape, lambda i, ei: (0, 0))

    weight_specs = [
        full2d((in_ch, hid)), full2d((1, hid)),               # wij1, bij1
        full2d((hid, hid)), full2d((1, hid)),                 # wij2, bij2
        full2d((1, hid)), full2d((1, hid)),                   # wc1, bc1
        full2d((hid, hid)), full2d((1, hid)),                 # wc2, bc2
        full2d((hid, hid)), full2d((1, hid)),                 # wc3, bc3
        full2d((hid, hid)), full2d((1, hid)),                 # wl1, bl1
        full2d((hid, out_ch)), full2d((1, out_ch)),           # wl2, bl2
    ]
    x_spec = full2d((n_nodes, in_ch))                         # x resident in VMEM
    beta_spec = pl.BlockSpec(memory_space=pltpu.MemorySpace.SMEM)
    out_spec = pl.BlockSpec((tile_e, out_ch), lambda i, ei: (i, 0))

    common_scratch = [
        pltpu.VMEM((tile_e, in_ch), jnp.float32),             # xi_buf
        pltpu.VMEM((tile_e, in_ch), jnp.float32),             # xj_buf
    ]

    if adj_in_vmem:
        kernel = _scn_kernel_resident
        adj_spec = full2d((n_nodes, np2))                     # adjacency resident in VMEM
        scratch = common_scratch + [
            pltpu.VMEM((tile_e, np2), jnp.int32),             # ai_buf
            pltpu.VMEM((tile_e, np2), jnp.int32),             # aj_buf
        ]
        # Independent edge tiles -> v7x megacore can split the axis across its 2 TCs.
        semantics = ("parallel",)
    else:
        assert n_nodes >= tile_e, "bulk-wait dummy descriptor needs n_nodes >= tile_e"
        kernel = _scn_kernel_hbm
        adj_spec = pl.BlockSpec(memory_space=pl.ANY)          # adjacency stays in HBM
        scratch = common_scratch + [
            pltpu.VMEM((2, tile_e, np2), jnp.int32),          # ai_buf (double buffer)
            pltpu.VMEM((2, tile_e, np2), jnp.int32),          # aj_buf (double buffer)
            pltpu.SemaphoreType.DMA((2, 2)),                  # [stream, slot]
        ]
        # Cross-grid-step prefetch carries DMA state between steps -> keep sequential.
        semantics = ("arbitrary",)

    grid_spec = pltpu.PrefetchScalarGridSpec(
        num_scalar_prefetch=1,                                # ei_flat -> SMEM before grid
        grid=(num_tiles,),
        in_specs=[x_spec, adj_spec] + weight_specs + [beta_spec],
        out_specs=out_spec,
        scratch_shapes=scratch,
    )

    fn = pl.pallas_call(
        kernel,
        out_shape=jax.ShapeDtypeStruct((e_pad, out_ch), jnp.float32),
        grid_spec=grid_spec,
        compiler_params=pltpu.CompilerParams(
            dimension_semantics=semantics,
            # Above the 16/32 MiB scoped defaults, below v7x's 64 MiB physical VMEM.
            vmem_limit_bytes=48 * 1024 * 1024,
        ),
    )

    out = fn(
        ei_flat, x, adj_packed,
        params["wij1"], params["bij1"], params["wij2"], params["bij2"],
        params["wc1"], params["bc1"], params["wc2"], params["bc2"],
        params["wc3"], params["bc3"],
        params["wl1"], params["bl1"], params["wl2"], params["bl2"],
        params["beta"],
    )
    return out[:e]


def reference_forward(x, adj, tar_ei, p):
    """Plain-JAX reference (mirrors the PyTorch eval-mode forward)."""
    xi = x[tar_ei[0]]
    xj = x[tar_ei[1]]
    ai = adj[tar_ei[0]]
    aj = adj[tar_ei[1]]
    xcn = jnp.sum(ai * aj, axis=-1, keepdims=True)
    xij = jnp.maximum(xi * xj @ p["wij1"] + p["bij1"], 0.0) @ p["wij2"] + p["bij2"]
    h1 = jnp.maximum(xcn @ p["wc1"] + p["bc1"], 0.0)
    h2 = jnp.maximum(h1 @ p["wc2"] + p["bc2"], 0.0)
    xcn_out = h2 @ p["wc3"] + p["bc3"]
    pre = xcn_out * p["beta"][0, 0] + xij
    hl = jnp.maximum(pre @ p["wl1"] + p["bl1"], 0.0)
    return hl @ p["wl2"] + p["bl2"]


def make_params(key, in_ch, hid, out_ch, beta=1.0):
    ks = jax.random.split(key, 9)

    def lin(k, fan_in, fan_out):
        bound = 1.0 / np.sqrt(fan_in)
        kw, kb = jax.random.split(k)
        w = jax.random.uniform(kw, (fan_in, fan_out), jnp.float32, -bound, bound)
        b = jax.random.uniform(kb, (1, fan_out), jnp.float32, -bound, bound)
        return w, b

    p = {}
    p["wij1"], p["bij1"] = lin(ks[0], in_ch, hid)
    p["wij2"], p["bij2"] = lin(ks[1], hid, hid)
    p["wc1"], p["bc1"] = lin(ks[2], 1, hid)
    p["wc2"], p["bc2"] = lin(ks[3], hid, hid)
    p["wc3"], p["bc3"] = lin(ks[4], hid, hid)
    p["wl1"], p["bl1"] = lin(ks[5], hid, hid)
    p["wl2"], p["bl2"] = lin(ks[6], hid, out_ch)
    p["beta"] = jnp.full((1, 1), beta, jnp.float32)
    return p


if __name__ == "__main__":
    # N nodes, E target edges, in_channels, hidden, out_channels.
    N, E, in_ch, hid, out_ch = 1024, 1000, 128, 128, 1
    TILE_E = 256                              # 4 edge tiles (even -> v7x megacore split)

    key = jax.random.PRNGKey(0)
    k_x, k_adj, k_ei, k_p = jax.random.split(key, 4)

    x = jax.random.normal(k_x, (N, in_ch), jnp.float32)
    adj = (jax.random.uniform(k_adj, (N, N)) < 0.05).astype(jnp.float32)
    adj = jnp.maximum(adj, adj.T)             # undirected, entries in {0, 1}
    tar_ei = jax.random.randint(k_ei, (2, E), 0, N, dtype=jnp.int32)

    params = make_params(k_p, in_ch, hid, out_ch, beta=1.0)

    # Pack the binary adjacency once (4 neighbors / int32 word); reused across calls.
    adj_packed = pack_adjacency(adj)

    with jax.default_matmul_precision("highest"):
        ref = reference_forward(x, adj, tar_ei, params)
    ref = jax.block_until_ready(ref)

    # Path 1: small graph -> x and packed adjacency VMEM-resident (no gather DMAs).
    out_res = scn_link_predictor(x, adj_packed, tar_ei, params,
                                 tile_e=TILE_E, adj_in_vmem=True)
    out_res = jax.block_until_ready(out_res)
    np.testing.assert_allclose(np.asarray(out_res), np.asarray(ref),
                               rtol=1e-4, atol=2e-3)

    # Path 2: large-graph fallback -> adjacency in HBM, full-row gather DMAs with one
    # bulk wait per stream and cross-grid-step prefetch.
    out_hbm = scn_link_predictor(x, adj_packed, tar_ei, params,
                                 tile_e=TILE_E, adj_in_vmem=False)
    out_hbm = jax.block_until_ready(out_hbm)
    np.testing.assert_allclose(np.asarray(out_hbm), np.asarray(ref),
                               rtol=1e-4, atol=2e-3)

    print("KERNEL_OK")
</pallas_src>

<mosaic_0001>
module attributes {stable_mosaic.version = 11 : i64} {
  func.func @_scn_kernel_resident(%arg0: i32, %arg1: memref<2048xi32, #tpu.memory_space<smem>>, %arg2: memref<1024x128xf32, #tpu.memory_space<vmem>>, %arg3: memref<1024x256xi32, #tpu.memory_space<vmem>>, %arg4: memref<128x128xf32, #tpu.memory_space<vmem>>, %arg5: memref<1x128xf32, #tpu.memory_space<vmem>>, %arg6: memref<128x128xf32, #tpu.memory_space<vmem>>, %arg7: memref<1x128xf32, #tpu.memory_space<vmem>>, %arg8: memref<1x128xf32, #tpu.memory_space<vmem>>, %arg9: memref<1x128xf32, #tpu.memory_space<vmem>>, %arg10: memref<128x128xf32, #tpu.memory_space<vmem>>, %arg11: memref<1x128xf32, #tpu.memory_space<vmem>>, %arg12: memref<128x128xf32, #tpu.memory_space<vmem>>, %arg13: memref<1x128xf32, #tpu.memory_space<vmem>>, %arg14: memref<128x128xf32, #tpu.memory_space<vmem>>, %arg15: memref<1x128xf32, #tpu.memory_space<vmem>>, %arg16: memref<128x1xf32, #tpu.memory_space<vmem>>, %arg17: memref<1x1xf32, #tpu.memory_space<vmem>>, %arg18: memref<1x1xf32, #tpu.memory_space<smem>>, %arg19: memref<256x1xf32, #tpu.memory_space<vmem>>, %arg20: memref<256x128xf32, #tpu.memory_space<vmem>>, %arg21: memref<256x128xf32, #tpu.memory_space<vmem>>, %arg22: memref<256x256xi32, #tpu.memory_space<vmem>>, %arg23: memref<256x256xi32, #tpu.memory_space<vmem>>) attributes {dimension_semantics = [#tpu.dimension_semantics<parallel>], iteration_bounds = array<i64: 4>, scalar_prefetch = 1 : i64, scratch_operands = 4 : i64, tpu.core_type = #tpu.core_type<tc>, window_params = [{pipeline_mode = #tpu.pipeline_mode<synchronous>, transform_indices = @transform_0, window_bounds = array<i64: 1024, 128>}, {pipeline_mode = #tpu.pipeline_mode<synchronous>, transform_indices = @transform_1, window_bounds = array<i64: 1024, 256>}, {pipeline_mode = #tpu.pipeline_mode<synchronous>, transform_indices = @transform_2, window_bounds = array<i64: 128, 128>}, {pipeline_mode = #tpu.pipeline_mode<synchronous>, transform_indices = @transform_3, window_bounds = array<i64: 1, 128>}, {pipeline_mode = #tpu.pipeline_mode<synchronous>, transform_indices = @transform_4, window_bounds = array<i64: 128, 128>}, {pipeline_mode = #tpu.pipeline_mode<synchronous>, transform_indices = @transform_5, window_bounds = array<i64: 1, 128>}, {pipeline_mode = #tpu.pipeline_mode<synchronous>, transform_indices = @transform_6, window_bounds = array<i64: 1, 128>}, {pipeline_mode = #tpu.pipeline_mode<synchronous>, transform_indices = @transform_7, window_bounds = array<i64: 1, 128>}, {pipeline_mode = #tpu.pipeline_mode<synchronous>, transform_indices = @transform_8, window_bounds = array<i64: 128, 128>}, {pipeline_mode = #tpu.pipeline_mode<synchronous>, transform_indices = @transform_9, window_bounds = array<i64: 1, 128>}, {pipeline_mode = #tpu.pipeline_mode<synchronous>, transform_indices = @transform_10, window_bounds = array<i64: 128, 128>}, {pipeline_mode = #tpu.pipeline_mode<synchronous>, transform_indices = @transform_11, window_bounds = array<i64: 1, 128>}, {pipeline_mode = #tpu.pipeline_mode<synchronous>, transform_indices = @transform_12, window_bounds = array<i64: 128, 128>}, {pipeline_mode = #tpu.pipeline_mode<synchronous>, transform_indices = @transform_13, window_bounds = array<i64: 1, 128>}, {pipeline_mode = #tpu.pipeline_mode<synchronous>, transform_indices = @transform_14, window_bounds = array<i64: 128, 1>}, {pipeline_mode = #tpu.pipeline_mode<synchronous>, transform_indices = @transform_15, window_bounds = array<i64: 1, 1>}, {transform_indices = @transform_16, window_bounds = array<i64: 1, 1>}, {transform_indices = @transform_17, window_bounds = array<i64: 256, 1>}]} {
    %c256_i32 = arith.constant 256 : i32
    %0 = arith.muli %arg0, %c256_i32 : i32
    %c0_i32 = arith.constant 0 : i32
    %c32_i32 = arith.constant 32 : i32
    %1 = arith.addi %c0_i32, %c32_i32 : i32
    %c1_i32 = arith.constant 1 : i32
    scf.for %arg24 = %c0_i32 to %1 step %c1_i32  : i32 {
      %c8_i32_52 = arith.constant 8 : i32
      %76 = arith.muli %arg24, %c8_i32_52 : i32
      %c0_i32_53 = arith.constant 0 : i32
      %77 = arith.addi %76, %c0_i32_53 : i32
      %78 = arith.addi %0, %77 : i32
      %79 = arith.index_cast %78 : i32 to index
      %80 = memref.load %arg1[%79] : memref<2048xi32, #tpu.memory_space<smem>>
      %c1024_i32 = arith.constant 1024 : i32
      %81 = arith.addi %c1024_i32, %0 : i32
      %82 = arith.addi %81, %77 : i32
      %83 = arith.index_cast %82 : i32 to index
      %84 = memref.load %arg1[%83] : memref<2048xi32, #tpu.memory_space<smem>>
      %85 = arith.index_cast %80 : i32 to index
      %c0_54 = arith.constant 0 : index
      %86 = vector.load %arg2[%85, %c0_54] : memref<1024x128xf32, #tpu.memory_space<vmem>>, vector<1x128xf32>
      %87 = arith.index_cast %77 : i32 to index
      %c0_55 = arith.constant 0 : index
      %88 = vector.load %arg20[%87, %c0_55] : memref<256x128xf32, #tpu.memory_space<vmem>>, vector<1x128xf32>
      tpu.vector_store %arg20[%87, %c0_55], %86 {strides = array<i32>} : memref<256x128xf32, #tpu.memory_space<vmem>>, vector<1x128xf32>,
      %89 = arith.index_cast %84 : i32 to index
      %c0_56 = arith.constant 0 : index
      %90 = vector.load %arg2[%89, %c0_56] : memref<1024x128xf32, #tpu.memory_space<vmem>>, vector<1x128xf32>
      %91 = arith.index_cast %77 : i32 to index
      %c0_57 = arith.constant 0 : index
      %92 = vector.load %arg21[%91, %c0_57] : memref<256x128xf32, #tpu.memory_space<vmem>>, vector<1x128xf32>
      tpu.vector_store %arg21[%91, %c0_57], %90 {strides = array<i32>} : memref<256x128xf32, #tpu.memory_space<vmem>>, vector<1x128xf32>,
      %93 = arith.index_cast %80 : i32 to index
      %c0_58 = arith.constant 0 : index
      %94 = vector.load %arg3[%93, %c0_58] : memref<1024x256xi32, #tpu.memory_space<vmem>>, vector<1x256xi32>
      %95 = arith.index_cast %77 : i32 to index
      %c0_59 = arith.constant 0 : index
      %96 = vector.load %arg22[%95, %c0_59] : memref<256x256xi32, #tpu.memory_space<vmem>>, vector<1x256xi32>
      tpu.vector_store %arg22[%95, %c0_59], %94 {strides = array<i32>} : memref<256x256xi32, #tpu.memory_space<vmem>>, vector<1x256xi32>,
      %97 = arith.index_cast %84 : i32 to index
      %c0_60 = arith.constant 0 : index
      %98 = vector.load %arg3[%97, %c0_60] : memref<1024x256xi32, #tpu.memory_space<vmem>>, vector<1x256xi32>
      %99 = arith.index_cast %77 : i32 to index
      %c0_61 = arith.constant 0 : index
      %100 = vector.load %arg23[%99, %c0_61] : memref<256x256xi32, #tpu.memory_space<vmem>>, vector<1x256xi32>
      tpu.vector_store %arg23[%99, %c0_61], %98 {strides = array<i32>} : memref<256x256xi32, #tpu.memory_space<vmem>>, vector<1x256xi32>,
      %c1_i32_62 = arith.constant 1 : i32
      %101 = arith.addi %76, %c1_i32_62 : i32
      %102 = arith.addi %0, %101 : i32
      %103 = arith.index_cast %102 : i32 to index
      %104 = memref.load %arg1[%103] : memref<2048xi32, #tpu.memory_space<smem>>
      %c1024_i32_63 = arith.constant 1024 : i32
      %105 = arith.addi %c1024_i32_63, %0 : i32
      %106 = arith.addi %105, %101 : i32
      %107 = arith.index_cast %106 : i32 to index
      %108 = memref.load %arg1[%107] : memref<2048xi32, #tpu.memory_space<smem>>
      %109 = arith.index_cast %104 : i32 to index
      %c0_64 = arith.constant 0 : index
      %110 = vector.load %arg2[%109, %c0_64] : memref<1024x128xf32, #tpu.memory_space<vmem>>, vector<1x128xf32>
      %111 = arith.index_cast %101 : i32 to index
      %c0_65 = arith.constant 0 : index
      %112 = vector.load %arg20[%111, %c0_65] : memref<256x128xf32, #tpu.memory_space<vmem>>, vector<1x128xf32>
      tpu.vector_store %arg20[%111, %c0_65], %110 {strides = array<i32>} : memref<256x128xf32, #tpu.memory_space<vmem>>, vector<1x128xf32>,
      %113 = arith.index_cast %108 : i32 to index
      %c0_66 = arith.constant 0 : index
      %114 = vector.load %arg2[%113, %c0_66] : memref<1024x128xf32, #tpu.memory_space<vmem>>, vector<1x128xf32>
      %115 = arith.index_cast %101 : i32 to index
      %c0_67 = arith.constant 0 : index
      %116 = vector.load %arg21[%115, %c0_67] : memref<256x128xf32, #tpu.memory_space<vmem>>, vector<1x128xf32>
      tpu.vector_store %arg21[%115, %c0_67], %114 {strides = array<i32>} : memref<256x128xf32, #tpu.memory_space<vmem>>, vector<1x128xf32>,
      %117 = arith.index_cast %104 : i32 to index
      %c0_68 = arith.constant 0 : index
      %118 = vector.load %arg3[%117, %c0_68] : memref<1024x256xi32, #tpu.memory_space<vmem>>, vector<1x256xi32>
      %119 = arith.index_cast %101 : i32 to index
      %c0_69 = arith.constant 0 : index
      %120 = vector.load %arg22[%119, %c0_69] : memref<256x256xi32, #tpu.memory_space<vmem>>, vector<1x256xi32>
      tpu.vector_store %arg22[%119, %c0_69], %118 {strides = array<i32>} : memref<256x256xi32, #tpu.memory_space<vmem>>, vector<1x256xi32>,
      %121 = arith.index_cast %108 : i32 to index
      %c0_70 = arith.constant 0 : index
      %122 = vector.load %arg3[%121, %c0_70] : memref<1024x256xi32, #tpu.memory_space<vmem>>, vector<1x256xi32>
      %123 = arith.index_cast %101 : i32 to index
      %c0_71 = arith.constant 0 : index
      %124 = vector.load %arg23[%123, %c0_71] : memref<256x256xi32, #tpu.memory_space<vmem>>, vector<1x256xi32>
      tpu.vector_store %arg23[%123, %c0_71], %122 {strides = array<i32>} : memref<256x256xi32, #tpu.memory_space<vmem>>, vector<1x256xi32>,
      %c2_i32 = arith.constant 2 : i32
      %125 = arith.addi %76, %c2_i32 : i32
      %126 = arith.addi %0, %125 : i32
      %127 = arith.index_cast %126 : i32 to index
      %128 = memref.load %arg1[%127] : memref<2048xi32, #tpu.memory_space<smem>>
      %c1024_i32_72 = arith.constant 1024 : i32
      %129 = arith.addi %c1024_i32_72, %0 : i32
      %130 = arith.addi %129, %125 : i32
      %131 = arith.index_cast %130 : i32 to index
      %132 = memref.load %arg1[%131] : memref<2048xi32, #tpu.memory_space<smem>>
      %133 = arith.index_cast %128 : i32 to index
      %c0_73 = arith.constant 0 : index
      %134 = vector.load %arg2[%133, %c0_73] : memref<1024x128xf32, #tpu.memory_space<vmem>>, vector<1x128xf32>
      %135 = arith.index_cast %125 : i32 to index
      %c0_74 = arith.constant 0 : index
      %136 = vector.load %arg20[%135, %c0_74] : memref<256x128xf32, #tpu.memory_space<vmem>>, vector<1x128xf32>
      tpu.vector_store %arg20[%135, %c0_74], %134 {strides = array<i32>} : memref<256x128xf32, #tpu.memory_space<vmem>>, vector<1x128xf32>,
      %137 = arith.index_cast %132 : i32 to index
      %c0_75 = arith.constant 0 : index
      %138 = vector.load %arg2[%137, %c0_75] : memref<1024x128xf32, #tpu.memory_space<vmem>>, vector<1x128xf32>
      %139 = arith.index_cast %125 : i32 to index
      %c0_76 = arith.constant 0 : index
      %140 = vector.load %arg21[%139, %c0_76] : memref<256x128xf32, #tpu.memory_space<vmem>>, vector<1x128xf32>
      tpu.vector_store %arg21[%139, %c0_76], %138 {strides = array<i32>} : memref<256x128xf32, #tpu.memory_space<vmem>>, vector<1x128xf32>,
      %141 = arith.index_cast %128 : i32 to index
      %c0_77 = arith.constant 0 : index
      %142 = vector.load %arg3[%141, %c0_77] : memref<1024x256xi32, #tpu.memory_space<vmem>>, vector<1x256xi32>
      %143 = arith.index_cast %125 : i32 to index
      %c0_78 = arith.constant 0 : index
      %144 = vector.load %arg22[%143, %c0_78] : memref<256x256xi32, #tpu.memory_space<vmem>>, vector<1x256xi32>
      tpu.vector_store %arg22[%143, %c0_78], %142 {strides = array<i32>} : memref<256x256xi32, #tpu.memory_space<vmem>>, vector<1x256xi32>,
      %145 = arith.index_cast %132 : i32 to index
      %c0_79 = arith.constant 0 : index
      %146 = vector.load %arg3[%145, %c0_79] : memref<1024x256xi32, #tpu.memory_space<vmem>>, vector<1x256xi32>
      %147 = arith.index_cast %125 : i32 to index
      %c0_80 = arith.constant 0 : index
      %148 = vector.load %arg23[%147, %c0_80] : memref<256x256xi32, #tpu.memory_space<vmem>>, vector<1x256xi32>
      tpu.vector_store %arg23[%147, %c0_80], %146 {strides = array<i32>} : memref<256x256xi32, #tpu.memory_space<vmem>>, vector<1x256xi32>,
      %c3_i32 = arith.constant 3 : i32
      %149 = arith.addi %76, %c3_i32 : i32
      %150 = arith.addi %0, %149 : i32
      %151 = arith.index_cast %150 : i32 to index
      %152 = memref.load %arg1[%151] : memref<2048xi32, #tpu.memory_space<smem>>
      %c1024_i32_81 = arith.constant 1024 : i32
      %153 = arith.addi %c1024_i32_81, %0 : i32
      %154 = arith.addi %153, %149 : i32
      %155 = arith.index_cast %154 : i32 to index
      %156 = memref.load %arg1[%155] : memref<2048xi32, #tpu.memory_space<smem>>
      %157 = arith.index_cast %152 : i32 to index
      %c0_82 = arith.constant 0 : index
      %158 = vector.load %arg2[%157, %c0_82] : memref<1024x128xf32, #tpu.memory_space<vmem>>, vector<1x128xf32>
      %159 = arith.index_cast %149 : i32 to index
      %c0_83 = arith.constant 0 : index
      %160 = vector.load %arg20[%159, %c0_83] : memref<256x128xf32, #tpu.memory_space<vmem>>, vector<1x128xf32>
      tpu.vector_store %arg20[%159, %c0_83], %158 {strides = array<i32>} : memref<256x128xf32, #tpu.memory_space<vmem>>, vector<1x128xf32>,
      %161 = arith.index_cast %156 : i32 to index
      %c0_84 = arith.constant 0 : index
      %162 = vector.load %arg2[%161, %c0_84] : memref<1024x128xf32, #tpu.memory_space<vmem>>, vector<1x128xf32>
      %163 = arith.index_cast %149 : i32 to index
      %c0_85 = arith.constant 0 : index
      %164 = vector.load %arg21[%163, %c0_85] : memref<256x128xf32, #tpu.memory_space<vmem>>, vector<1x128xf32>
      tpu.vector_store %arg21[%163, %c0_85], %162 {strides = array<i32>} : memref<256x128xf32, #tpu.memory_space<vmem>>, vector<1x128xf32>,
      %165 = arith.index_cast %152 : i32 to index
      %c0_86 = arith.constant 0 : index
      %166 = vector.load %arg3[%165, %c0_86] : memref<1024x256xi32, #tpu.memory_space<vmem>>, vector<1x256xi32>
      %167 = arith.index_cast %149 : i32 to index
      %c0_87 = arith.constant 0 : index
      %168 = vector.load %arg22[%167, %c0_87] : memref<256x256xi32, #tpu.memory_space<vmem>>, vector<1x256xi32>
      tpu.vector_store %arg22[%167, %c0_87], %166 {strides = array<i32>} : memref<256x256xi32, #tpu.memory_space<vmem>>, vector<1x256xi32>,
      %169 = arith.index_cast %156 : i32 to index
      %c0_88 = arith.constant 0 : index
      %170 = vector.load %arg3[%169, %c0_88] : memref<1024x256xi32, #tpu.memory_space<vmem>>, vector<1x256xi32>
      %171 = arith.index_cast %149 : i32 to index
      %c0_89 = arith.constant 0 : index
      %172 = vector.load %arg23[%171, %c0_89] : memref<256x256xi32, #tpu.memory_space<vmem>>, vector<1x256xi32>
      tpu.vector_store %arg23[%171, %c0_89], %170 {strides = array<i32>} : memref<256x256xi32, #tpu.memory_space<vmem>>, vector<1x256xi32>,
      %c4_i32 = arith.constant 4 : i32
      %173 = arith.addi %76, %c4_i32 : i32
      %174 = arith.addi %0, %173 : i32
      %175 = arith.index_cast %174 : i32 to index
      %176 = memref.load %arg1[%175] : memref<2048xi32, #tpu.memory_space<smem>>
      %c1024_i32_90 = arith.constant 1024 : i32
      %177 = arith.addi %c1024_i32_90, %0 : i32
      %178 = arith.addi %177, %173 : i32
      %179 = arith.index_cast %178 : i32 to index
      %180 = memref.load %arg1[%179] : memref<2048xi32, #tpu.memory_space<smem>>
      %181 = arith.index_cast %176 : i32 to index
      %c0_91 = arith.constant 0 : index
      %182 = vector.load %arg2[%181, %c0_91] : memref<1024x128xf32, #tpu.memory_space<vmem>>, vector<1x128xf32>
      %183 = arith.index_cast %173 : i32 to index
      %c0_92 = arith.constant 0 : index
      %184 = vector.load %arg20[%183, %c0_92] : memref<256x128xf32, #tpu.memory_space<vmem>>, vector<1x128xf32>
      tpu.vector_store %arg20[%183, %c0_92], %182 {strides = array<i32>} : memref<256x128xf32, #tpu.memory_space<vmem>>, vector<1x128xf32>,
      %185 = arith.index_cast %180 : i32 to index
      %c0_93 = arith.constant 0 : index
      %186 = vector.load %arg2[%185, %c0_93] : memref<1024x128xf32, #tpu.memory_space<vmem>>, vector<1x128xf32>
      %187 = arith.index_cast %173 : i32 to index
      %c0_94 = arith.constant 0 : index
      %188 = vector.load %arg21[%187, %c0_94] : memref<256x128xf32, #tpu.memory_space<vmem>>, vector<1x128xf32>
      tpu.vector_store %arg21[%187, %c0_94], %186 {strides = array<i32>} : memref<256x128xf32, #tpu.memory_space<vmem>>, vector<1x128xf32>,
      %189 = arith.index_cast %176 : i32 to index
      %c0_95 = arith.constant 0 : index
      %190 = vector.load %arg3[%189, %c0_95] : memref<1024x256xi32, #tpu.memory_space<vmem>>, vector<1x256xi32>
      %191 = arith.index_cast %173 : i32 to index
      %c0_96 = arith.constant 0 : index
      %192 = vector.load %arg22[%191, %c0_96] : memref<256x256xi32, #tpu.memory_space<vmem>>, vector<1x256xi32>
      tpu.vector_store %arg22[%191, %c0_96], %190 {strides = array<i32>} : memref<256x256xi32, #tpu.memory_space<vmem>>, vector<1x256xi32>,
      %193 = arith.index_cast %180 : i32 to index
      %c0_97 = arith.constant 0 : index
      %194 = vector.load %arg3[%193, %c0_97] : memref<1024x256xi32, #tpu.memory_space<vmem>>, vector<1x256xi32>
      %195 = arith.index_cast %173 : i32 to index
      %c0_98 = arith.constant 0 : index
      %196 = vector.load %arg23[%195, %c0_98] : memref<256x256xi32, #tpu.memory_space<vmem>>, vector<1x256xi32>
      tpu.vector_store %arg23[%195, %c0_98], %194 {strides = array<i32>} : memref<256x256xi32, #tpu.memory_space<vmem>>, vector<1x256xi32>,
      %c5_i32 = arith.constant 5 : i32
      %197 = arith.addi %76, %c5_i32 : i32
      %198 = arith.addi %0, %197 : i32
      %199 = arith.index_cast %198 : i32 to index
      %200 = memref.load %arg1[%199] : memref<2048xi32, #tpu.memory_space<smem>>
      %c1024_i32_99 = arith.constant 1024 : i32
      %201 = arith.addi %c1024_i32_99, %0 : i32
      %202 = arith.addi %201, %197 : i32
      %203 = arith.index_cast %202 : i32 to index
      %204 = memref.load %arg1[%203] : memref<2048xi32, #tpu.memory_space<smem>>
      %205 = arith.index_cast %200 : i32 to index
      %c0_100 = arith.constant 0 : index
      %206 = vector.load %arg2[%205, %c0_100] : memref<1024x128xf32, #tpu.memory_space<vmem>>, vector<1x128xf32>
      %207 = arith.index_cast %197 : i32 to index
      %c0_101 = arith.constant 0 : index
      %208 = vector.load %arg20[%207, %c0_101] : memref<256x128xf32, #tpu.memory_space<vmem>>, vector<1x128xf32>
      tpu.vector_store %arg20[%207, %c0_101], %206 {strides = array<i32>} : memref<256x128xf32, #tpu.memory_space<vmem>>, vector<1x128xf32>,
      %209 = arith.index_cast %204 : i32 to index
      %c0_102 = arith.constant 0 : index
      %210 = vector.load %arg2[%209, %c0_102] : memref<1024x128xf32, #tpu.memory_space<vmem>>, vector<1x128xf32>
      %211 = arith.index_cast %197 : i32 to index
      %c0_103 = arith.constant 0 : index
      %212 = vector.load %arg21[%211, %c0_103] : memref<256x128xf32, #tpu.memory_space<vmem>>, vector<1x128xf32>
      tpu.vector_store %arg21[%211, %c0_103], %210 {strides = array<i32>} : memref<256x128xf32, #tpu.memory_space<vmem>>, vector<1x128xf32>,
      %213 = arith.index_cast %200 : i32 to index
      %c0_104 = arith.constant 0 : index
      %214 = vector.load %arg3[%213, %c0_104] : memref<1024x256xi32, #tpu.memory_space<vmem>>, vector<1x256xi32>
      %215 = arith.index_cast %197 : i32 to index
      %c0_105 = arith.constant 0 : index
      %216 = vector.load %arg22[%215, %c0_105] : memref<256x256xi32, #tpu.memory_space<vmem>>, vector<1x256xi32>
      tpu.vector_store %arg22[%215, %c0_105], %214 {strides = array<i32>} : memref<256x256xi32, #tpu.memory_space<vmem>>, vector<1x256xi32>,
      %217 = arith.index_cast %204 : i32 to index
      %c0_106 = arith.constant 0 : index
      %218 = vector.load %arg3[%217, %c0_106] : memref<1024x256xi32, #tpu.memory_space<vmem>>, vector<1x256xi32>
      %219 = arith.index_cast %197 : i32 to index
      %c0_107 = arith.constant 0 : index
      %220 = vector.load %arg23[%219, %c0_107] : memref<256x256xi32, #tpu.memory_space<vmem>>, vector<1x256xi32>
      tpu.vector_store %arg23[%219, %c0_107], %218 {strides = array<i32>} : memref<256x256xi32, #tpu.memory_space<vmem>>, vector<1x256xi32>,
      %c6_i32 = arith.constant 6 : i32
      %221 = arith.addi %76, %c6_i32 : i32
      %222 = arith.addi %0, %221 : i32
      %223 = arith.index_cast %222 : i32 to index
      %224 = memref.load %arg1[%223] : memref<2048xi32, #tpu.memory_space<smem>>
      %c1024_i32_108 = arith.constant 1024 : i32
      %225 = arith.addi %c1024_i32_108, %0 : i32
      %226 = arith.addi %225, %221 : i32
      %227 = arith.index_cast %226 : i32 to index
      %228 = memref.load %arg1[%227] : memref<2048xi32, #tpu.memory_space<smem>>
      %229 = arith.index_cast %224 : i32 to index
      %c0_109 = arith.constant 0 : index
      %230 = vector.load %arg2[%229, %c0_109] : memref<1024x128xf32, #tpu.memory_space<vmem>>, vector<1x128xf32>
      %231 = arith.index_cast %221 : i32 to index
      %c0_110 = arith.constant 0 : index
      %232 = vector.load %arg20[%231, %c0_110] : memref<256x128xf32, #tpu.memory_space<vmem>>, vector<1x128xf32>
      tpu.vector_store %arg20[%231, %c0_110], %230 {strides = array<i32>} : memref<256x128xf32, #tpu.memory_space<vmem>>, vector<1x128xf32>,
      %233 = arith.index_cast %228 : i32 to index
      %c0_111 = arith.constant 0 : index
      %234 = vector.load %arg2[%233, %c0_111] : memref<1024x128xf32, #tpu.memory_space<vmem>>, vector<1x128xf32>
      %235 = arith.index_cast %221 : i32 to index
      %c0_112 = arith.constant 0 : index
      %236 = vector.load %arg21[%235, %c0_112] : memref<256x128xf32, #tpu.memory_space<vmem>>, vector<1x128xf32>
      tpu.vector_store %arg21[%235, %c0_112], %234 {strides = array<i32>} : memref<256x128xf32, #tpu.memory_space<vmem>>, vector<1x128xf32>,
      %237 = arith.index_cast %224 : i32 to index
      %c0_113 = arith.constant 0 : index
      %238 = vector.load %arg3[%237, %c0_113] : memref<1024x256xi32, #tpu.memory_space<vmem>>, vector<1x256xi32>
      %239 = arith.index_cast %221 : i32 to index
      %c0_114 = arith.constant 0 : index
      %240 = vector.load %arg22[%239, %c0_114] : memref<256x256xi32, #tpu.memory_space<vmem>>, vector<1x256xi32>
      tpu.vector_store %arg22[%239, %c0_114], %238 {strides = array<i32>} : memref<256x256xi32, #tpu.memory_space<vmem>>, vector<1x256xi32>,
      %241 = arith.index_cast %228 : i32 to index
      %c0_115 = arith.constant 0 : index
      %242 = vector.load %arg3[%241, %c0_115] : memref<1024x256xi32, #tpu.memory_space<vmem>>, vector<1x256xi32>
      %243 = arith.index_cast %221 : i32 to index
      %c0_116 = arith.constant 0 : index
      %244 = vector.load %arg23[%243, %c0_116] : memref<256x256xi32, #tpu.memory_space<vmem>>, vector<1x256xi32>
      tpu.vector_store %arg23[%243, %c0_116], %242 {strides = array<i32>} : memref<256x256xi32, #tpu.memory_space<vmem>>, vector<1x256xi32>,
      %c7_i32 = arith.constant 7 : i32
      %245 = arith.addi %76, %c7_i32 : i32
      %246 = arith.addi %0, %245 : i32
      %247 = arith.index_cast %246 : i32 to index
      %248 = memref.load %arg1[%247] : memref<2048xi32, #tpu.memory_space<smem>>
      %c1024_i32_117 = arith.constant 1024 : i32
      %249 = arith.addi %c1024_i32_117, %0 : i32
      %250 = arith.addi %249, %245 : i32
      %251 = arith.index_cast %250 : i32 to index
      %252 = memref.load %arg1[%251] : memref<2048xi32, #tpu.memory_space<smem>>
      %253 = arith.index_cast %248 : i32 to index
      %c0_118 = arith.constant 0 : index
      %254 = vector.load %arg2[%253, %c0_118] : memref<1024x128xf32, #tpu.memory_space<vmem>>, vector<1x128xf32>
      %255 = arith.index_cast %245 : i32 to index
      %c0_119 = arith.constant 0 : index
      %256 = vector.load %arg20[%255, %c0_119] : memref<256x128xf32, #tpu.memory_space<vmem>>, vector<1x128xf32>
      tpu.vector_store %arg20[%255, %c0_119], %254 {strides = array<i32>} : memref<256x128xf32, #tpu.memory_space<vmem>>, vector<1x128xf32>,
      %257 = arith.index_cast %252 : i32 to index
      %c0_120 = arith.constant 0 : index
      %258 = vector.load %arg2[%257, %c0_120] : memref<1024x128xf32, #tpu.memory_space<vmem>>, vector<1x128xf32>
      %259 = arith.index_cast %245 : i32 to index
      %c0_121 = arith.constant 0 : index
      %260 = vector.load %arg21[%259, %c0_121] : memref<256x128xf32, #tpu.memory_space<vmem>>, vector<1x128xf32>
      tpu.vector_store %arg21[%259, %c0_121], %258 {strides = array<i32>} : memref<256x128xf32, #tpu.memory_space<vmem>>, vector<1x128xf32>,
      %261 = arith.index_cast %248 : i32 to index
      %c0_122 = arith.constant 0 : index
      %262 = vector.load %arg3[%261, %c0_122] : memref<1024x256xi32, #tpu.memory_space<vmem>>, vector<1x256xi32>
      %263 = arith.index_cast %245 : i32 to index
      %c0_123 = arith.constant 0 : index
      %264 = vector.load %arg22[%263, %c0_123] : memref<256x256xi32, #tpu.memory_space<vmem>>, vector<1x256xi32>
      tpu.vector_store %arg22[%263, %c0_123], %262 {strides = array<i32>} : memref<256x256xi32, #tpu.memory_space<vmem>>, vector<1x256xi32>,
      %265 = arith.index_cast %252 : i32 to index
      %c0_124 = arith.constant 0 : index
      %266 = vector.load %arg3[%265, %c0_124] : memref<1024x256xi32, #tpu.memory_space<vmem>>, vector<1x256xi32>
      %267 = arith.index_cast %245 : i32 to index
      %c0_125 = arith.constant 0 : index
      %268 = vector.load %arg23[%267, %c0_125] : memref<256x256xi32, #tpu.memory_space<vmem>>, vector<1x256xi32>
      tpu.vector_store %arg23[%267, %c0_125], %266 {strides = array<i32>} : memref<256x256xi32, #tpu.memory_space<vmem>>, vector<1x256xi32>,
    }
    %c32_i32_0 = arith.constant 32 : i32
    %c0 = arith.constant 0 : index
    %c0_1 = arith.constant 0 : index
    %2 = vector.load %arg22[%c0, %c0_1] : memref<256x256xi32, #tpu.memory_space<vmem>>, vector<256x256xi32>
    %c0_2 = arith.constant 0 : index
    %c0_3 = arith.constant 0 : index
    %3 = vector.load %arg23[%c0_2, %c0_3] : memref<256x256xi32, #tpu.memory_space<vmem>>, vector<256x256xi32>
    %4 = arith.andi %2, %3 : vector<256x256xi32>
    %c255_i32 = arith.constant 255 : i32
    %5 = vector.broadcast %c255_i32 : i32 to vector<256x256xi32>
    %6 = arith.andi %4, %5 : vector<256x256xi32>
    %c8_i32 = arith.constant 8 : i32
    %7 = vector.broadcast %c8_i32 : i32 to vector<256x256xi32>
    %8 = arith.shrsi %4, %7 : vector<256x256xi32>
    %c255_i32_4 = arith.constant 255 : i32
    %9 = vector.broadcast %c255_i32_4 : i32 to vector<256x256xi32>
    %10 = arith.andi %8, %9 : vector<256x256xi32>
    %11 = arith.addi %6, %10 : vector<256x256xi32>
    %c16_i32 = arith.constant 16 : i32
    %12 = vector.broadcast %c16_i32 : i32 to vector<256x256xi32>
    %13 = arith.shrsi %4, %12 : vector<256x256xi32>
    %c255_i32_5 = arith.constant 255 : i32
    %14 = vector.broadcast %c255_i32_5 : i32 to vector<256x256xi32>
    %15 = arith.andi %13, %14 : vector<256x256xi32>
    %16 = arith.addi %11, %15 : vector<256x256xi32>
    %c24_i32 = arith.constant 24 : i32
    %17 = vector.broadcast %c24_i32 : i32 to vector<256x256xi32>
    %18 = arith.shrsi %4, %17 : vector<256x256xi32>
    %19 = arith.addi %16, %18 : vector<256x256xi32>
    %cst = arith.constant dense<0> : vector<256xi32>
    %20 = vector.multi_reduction <add>, %19, %cst [1] : vector<256x256xi32> to vector<256xi32>
    %21 = vector.shape_cast %20 : vector<256xi32> to vector<256x1xi32>
    %22 = arith.sitofp %21 : vector<256x1xi32> to vector<256x1xf32>
    %c0_6 = arith.constant 0 : index
    %c0_7 = arith.constant 0 : index
    %23 = vector.load %arg20[%c0_6, %c0_7] : memref<256x128xf32, #tpu.memory_space<vmem>>, vector<256x128xf32>
    %c0_8 = arith.constant 0 : index
    %c0_9 = arith.constant 0 : index
    %24 = vector.load %arg21[%c0_8, %c0_9] : memref<256x128xf32, #tpu.memory_space<vmem>>, vector<256x128xf32>
    %c0_10 = arith.constant 0 : index
    %c0_11 = arith.constant 0 : index
    %25 = memref.load %arg18[%c0_10, %c0_11] : memref<1x1xf32, #tpu.memory_space<smem>>
    %26 = arith.mulf %23, %24 : vector<256x128xf32>
    %c0_12 = arith.constant 0 : index
    %c0_13 = arith.constant 0 : index
    %27 = vector.load %arg4[%c0_12, %c0_13] : memref<128x128xf32, #tpu.memory_space<vmem>>, vector<128x128xf32>
    %cst_14 = arith.constant dense<0.000000e+00> : vector<256x128xf32>
    %28 = tpu.matmul %26, %27, %cst_14 {dimension_numbers = #tpu.dot_dimension_numbers<[1], [0], [0], [1], [0, 0, 1, 1], [], []>} : vector<256x128xf32>, vector<128x128xf32>, vector<256x128xf32> -> vector<256x128xf32>
    %c0_15 = arith.constant 0 : index
    %c0_16 = arith.constant 0 : index
    %29 = vector.load %arg5[%c0_15, %c0_16] : memref<1x128xf32, #tpu.memory_space<vmem>>, vector<1x128xf32>
    %30 = vector.broadcast %29 : vector<1x128xf32> to vector<256x128xf32>
    %31 = arith.addf %28, %30 : vector<256x128xf32>
    %cst_17 = arith.constant 0.000000e+00 : f32
    %32 = vector.broadcast %cst_17 : f32 to vector<256x128xf32>
    %33 = arith.maximumf %31, %32 : vector<256x128xf32>
    %c0_18 = arith.constant 0 : index
    %c0_19 = arith.constant 0 : index
    %34 = vector.load %arg6[%c0_18, %c0_19] : memref<128x128xf32, #tpu.memory_space<vmem>>, vector<128x128xf32>
    %cst_20 = arith.constant dense<0.000000e+00> : vector<256x128xf32>
    %35 = tpu.matmul %33, %34, %cst_20 {dimension_numbers = #tpu.dot_dimension_numbers<[1], [0], [0], [1], [0, 0, 1, 1], [], []>} : vector<256x128xf32>, vector<128x128xf32>, vector<256x128xf32> -> vector<256x128xf32>
    %c0_21 = arith.constant 0 : index
    %c0_22 = arith.constant 0 : index
    %36 = vector.load %arg7[%c0_21, %c0_22] : memref<1x128xf32, #tpu.memory_space<vmem>>, vector<1x128xf32>
    %37 = vector.broadcast %36 : vector<1x128xf32> to vector<256x128xf32>
    %38 = arith.addf %35, %37 : vector<256x128xf32>
    %c0_23 = arith.constant 0 : index
    %c0_24 = arith.constant 0 : index
    %39 = vector.load %arg8[%c0_23, %c0_24] : memref<1x128xf32, #tpu.memory_space<vmem>>, vector<1x128xf32>
    %40 = vector.broadcast %22 : vector<256x1xf32> to vector<256x128xf32>
    %41 = vector.broadcast %39 : vector<1x128xf32> to vector<256x128xf32>
    %42 = arith.mulf %40, %41 : vector<256x128xf32>
    %c0_25 = arith.constant 0 : index
    %c0_26 = arith.constant 0 : index
    %43 = vector.load %arg9[%c0_25, %c0_26] : memref<1x128xf32, #tpu.memory_space<vmem>>, vector<1x128xf32>
    %44 = vector.broadcast %43 : vector<1x128xf32> to vector<256x128xf32>
    %45 = arith.addf %42, %44 : vector<256x128xf32>
    %cst_27 = arith.constant 0.000000e+00 : f32
    %46 = vector.broadcast %cst_27 : f32 to vector<256x128xf32>
    %47 = arith.maximumf %45, %46 : vector<256x128xf32>
    %c0_28 = arith.constant 0 : index
    %c0_29 = arith.constant 0 : index
    %48 = vector.load %arg10[%c0_28, %c0_29] : memref<128x128xf32, #tpu.memory_space<vmem>>, vector<128x128xf32>
    %cst_30 = arith.constant dense<0.000000e+00> : vector<256x128xf32>
    %49 = tpu.matmul %47, %48, %cst_30 {dimension_numbers = #tpu.dot_dimension_numbers<[1], [0], [0], [1], [0, 0, 1, 1], [], []>} : vector<256x128xf32>, vector<128x128xf32>, vector<256x128xf32> -> vector<256x128xf32>
    %c0_31 = arith.constant 0 : index
    %c0_32 = arith.constant 0 : index
    %50 = vector.load %arg11[%c0_31, %c0_32] : memref<1x128xf32, #tpu.memory_space<vmem>>, vector<1x128xf32>
    %51 = vector.broadcast %50 : vector<1x128xf32> to vector<256x128xf32>
    %52 = arith.addf %49, %51 : vector<256x128xf32>
    %cst_33 = arith.constant 0.000000e+00 : f32
    %53 = vector.broadcast %cst_33 : f32 to vector<256x128xf32>
    %54 = arith.maximumf %52, %53 : vector<256x128xf32>
    %c0_34 = arith.constant 0 : index
    %c0_35 = arith.constant 0 : index
    %55 = vector.load %arg12[%c0_34, %c0_35] : memref<128x128xf32, #tpu.memory_space<vmem>>, vector<128x128xf32>
    %cst_36 = arith.constant dense<0.000000e+00> : vector<256x128xf32>
    %56 = tpu.matmul %54, %55, %cst_36 {dimension_numbers = #tpu.dot_dimension_numbers<[1], [0], [0], [1], [0, 0, 1, 1], [], []>} : vector<256x128xf32>, vector<128x128xf32>, vector<256x128xf32> -> vector<256x128xf32>
    %c0_37 = arith.constant 0 : index
    %c0_38 = arith.constant 0 : index
    %57 = vector.load %arg13[%c0_37, %c0_38] : memref<1x128xf32, #tpu.memory_space<vmem>>, vector<1x128xf32>
    %58 = vector.broadcast %57 : vector<1x128xf32> to vector<256x128xf32>
    %59 = arith.addf %56, %58 : vector<256x128xf32>
    %60 = vector.broadcast %25 : f32 to vector<256x128xf32>
    %61 = arith.mulf %59, %60 : vector<256x128xf32>
    %62 = arith.addf %61, %38 : vector<256x128xf32>
    %c0_39 = arith.constant 0 : index
    %c0_40 = arith.constant 0 : index
    %63 = vector.load %arg14[%c0_39, %c0_40] : memref<128x128xf32, #tpu.memory_space<vmem>>, vector<128x128xf32>
    %cst_41 = arith.constant dense<0.000000e+00> : vector<256x128xf32>
    %64 = tpu.matmul %62, %63, %cst_41 {dimension_numbers = #tpu.dot_dimension_numbers<[1], [0], [0], [1], [0, 0, 1, 1], [], []>} : vector<256x128xf32>, vector<128x128xf32>, vector<256x128xf32> -> vector<256x128xf32>
    %c0_42 = arith.constant 0 : index
    %c0_43 = arith.constant 0 : index
    %65 = vector.load %arg15[%c0_42, %c0_43] : memref<1x128xf32, #tpu.memory_space<vmem>>, vector<1x128xf32>
    %66 = vector.broadcast %65 : vector<1x128xf32> to vector<256x128xf32>
    %67 = arith.addf %64, %66 : vector<256x128xf32>
    %cst_44 = arith.constant 0.000000e+00 : f32
    %68 = vector.broadcast %cst_44 : f32 to vector<256x128xf32>
    %69 = arith.maximumf %67, %68 : vector<256x128xf32>
    %c0_45 = arith.constant 0 : index
    %c0_46 = arith.constant 0 : index
    %70 = vector.load %arg16[%c0_45, %c0_46] : memref<128x1xf32, #tpu.memory_space<vmem>>, vector<128x1xf32>
    %cst_47 = arith.constant dense<0.000000e+00> : vector<256x1xf32>
    %71 = tpu.matmul %69, %70, %cst_47 {dimension_numbers = #tpu.dot_dimension_numbers<[1], [0], [0], [1], [0, 0, 1, 1], [], []>} : vector<256x128xf32>, vector<128x1xf32>, vector<256x1xf32> -> vector<256x1xf32>
    %c0_48 = arith.constant 0 : index
    %c0_49 = arith.constant 0 : index
    %72 = vector.load %arg17[%c0_48, %c0_49] : memref<1x1xf32, #tpu.memory_space<vmem>>, vector<1x1xf32>
    %73 = vector.broadcast %72 : vector<1x1xf32> to vector<256x1xf32>
    %74 = arith.addf %71, %73 : vector<256x1xf32>
    %c0_50 = arith.constant 0 : index
    %c0_51 = arith.constant 0 : index
    %75 = vector.load %arg19[%c0_50, %c0_51] : memref<256x1xf32, #tpu.memory_space<vmem>>, vector<256x1xf32>
    tpu.vector_store %arg19[%c0_50, %c0_51], %74 {strides = array<i32>} : memref<256x1xf32, #tpu.memory_space<vmem>>, vector<256x1xf32>,
    return
  }
  func.func @transform_0(%arg0: i32, %arg1: memref<2048xi32, #tpu.memory_space<smem>>) -> (i32, i32) {
    %c0_i32 = arith.constant 0 : i32
    %c0_i32_0 = arith.constant 0 : i32
    %c0_i32_1 = arith.constant 0 : i32
    return %c0_i32, %c0_i32_0 : i32, i32
  }
  func.func @transform_1(%arg0: i32, %arg1: memref<2048xi32, #tpu.memory_space<smem>>) -> (i32, i32) {
    %c0_i32 = arith.constant 0 : i32
    %c0_i32_0 = arith.constant 0 : i32
    %c0_i32_1 = arith.constant 0 : i32
    return %c0_i32, %c0_i32_0 : i32, i32
  }
  func.func @transform_2(%arg0: i32, %arg1: memref<2048xi32, #tpu.memory_space<smem>>) -> (i32, i32) {
    %c0_i32 = arith.constant 0 : i32
    %c0_i32_0 = arith.constant 0 : i32
    %c0_i32_1 = arith.constant 0 : i32
    return %c0_i32, %c0_i32_0 : i32, i32
  }
  func.func @transform_3(%arg0: i32, %arg1: memref<2048xi32, #tpu.memory_space<smem>>) -> (i32, i32) {
    %c0_i32 = arith.constant 0 : i32
    %c0_i32_0 = arith.constant 0 : i32
    %c0_i32_1 = arith.constant 0 : i32
    return %c0_i32, %c0_i32_0 : i32, i32
  }
  func.func @transform_4(%arg0: i32, %arg1: memref<2048xi32, #tpu.memory_space<smem>>) -> (i32, i32) {
    %c0_i32 = arith.constant 0 : i32
    %c0_i32_0 = arith.constant 0 : i32
    %c0_i32_1 = arith.constant 0 : i32
    return %c0_i32, %c0_i32_0 : i32, i32
  }
  func.func @transform_5(%arg0: i32, %arg1: memref<2048xi32, #tpu.memory_space<smem>>) -> (i32, i32) {
    %c0_i32 = arith.constant 0 : i32
    %c0_i32_0 = arith.constant 0 : i32
    %c0_i32_1 = arith.constant 0 : i32
    return %c0_i32, %c0_i32_0 : i32, i32
  }
  func.func @transform_6(%arg0: i32, %arg1: memref<2048xi32, #tpu.memory_space<smem>>) -> (i32, i32) {
    %c0_i32 = arith.constant 0 : i32
    %c0_i32_0 = arith.constant 0 : i32
    %c0_i32_1 = arith.constant 0 : i32
    return %c0_i32, %c0_i32_0 : i32, i32
  }
  func.func @transform_7(%arg0: i32, %arg1: memref<2048xi32, #tpu.memory_space<smem>>) -> (i32, i32) {
    %c0_i32 = arith.constant 0 : i32
    %c0_i32_0 = arith.constant 0 : i32
    %c0_i32_1 = arith.constant 0 : i32
    return %c0_i32, %c0_i32_0 : i32, i32
  }
  func.func @transform_8(%arg0: i32, %arg1: memref<2048xi32, #tpu.memory_space<smem>>) -> (i32, i32) {
    %c0_i32 = arith.constant 0 : i32
    %c0_i32_0 = arith.constant 0 : i32
    %c0_i32_1 = arith.constant 0 : i32
    return %c0_i32, %c0_i32_0 : i32, i32
  }
  func.func @transform_9(%arg0: i32, %arg1: memref<2048xi32, #tpu.memory_space<smem>>) -> (i32, i32) {
    %c0_i32 = arith.constant 0 : i32
    %c0_i32_0 = arith.constant 0 : i32
    %c0_i32_1 = arith.constant 0 : i32
    return %c0_i32, %c0_i32_0 : i32, i32
  }
  func.func @transform_10(%arg0: i32, %arg1: memref<2048xi32, #tpu.memory_space<smem>>) -> (i32, i32) {
    %c0_i32 = arith.constant 0 : i32
    %c0_i32_0 = arith.constant 0 : i32
    %c0_i32_1 = arith.constant 0 : i32
    return %c0_i32, %c0_i32_0 : i32, i32
  }
  func.func @transform_11(%arg0: i32, %arg1: memref<2048xi32, #tpu.memory_space<smem>>) -> (i32, i32) {
    %c0_i32 = arith.constant 0 : i32
    %c0_i32_0 = arith.constant 0 : i32
    %c0_i32_1 = arith.constant 0 : i32
    return %c0_i32, %c0_i32_0 : i32, i32
  }
  func.func @transform_12(%arg0: i32, %arg1: memref<2048xi32, #tpu.memory_space<smem>>) -> (i32, i32) {
    %c0_i32 = arith.constant 0 : i32
    %c0_i32_0 = arith.constant 0 : i32
    %c0_i32_1 = arith.constant 0 : i32
    return %c0_i32, %c0_i32_0 : i32, i32
  }
  func.func @transform_13(%arg0: i32, %arg1: memref<2048xi32, #tpu.memory_space<smem>>) -> (i32, i32) {
    %c0_i32 = arith.constant 0 : i32
    %c0_i32_0 = arith.constant 0 : i32
    %c0_i32_1 = arith.constant 0 : i32
    return %c0_i32, %c0_i32_0 : i32, i32
  }
  func.func @transform_14(%arg0: i32, %arg1: memref<2048xi32, #tpu.memory_space<smem>>) -> (i32, i32) {
    %c0_i32 = arith.constant 0 : i32
    %c0_i32_0 = arith.constant 0 : i32
    %c0_i32_1 = arith.constant 0 : i32
    return %c0_i32, %c0_i32_0 : i32, i32
  }
  func.func @transform_15(%arg0: i32, %arg1: memref<2048xi32, #tpu.memory_space<smem>>) -> (i32, i32) {
    %c0_i32 = arith.constant 0 : i32
    %c0_i32_0 = arith.constant 0 : i32
    %c0_i32_1 = arith.constant 0 : i32
    return %c0_i32, %c0_i32_0 : i32, i32
  }
  func.func @transform_16(%arg0: i32, %arg1: memref<2048xi32, #tpu.memory_space<smem>>) -> (i32, i32) {
    %c0_i32 = arith.constant 0 : i32
    %c0_i32_0 = arith.constant 0 : i32
    %c0_i32_1 = arith.constant 0 : i32
    return %c0_i32, %c0_i32_0 : i32, i32
  }
  func.func @transform_17(%arg0: i32, %arg1: memref<2048xi32, #tpu.memory_space<smem>>) -> (i32, i32) {
    %c0_i32 = arith.constant 0 : i32
    %c0_i32_0 = arith.constant 0 : i32
    return %arg0, %c0_i32 : i32, i32
  }
}

</mosaic_0001>

<llo_original>
// kernel: tpu_custom_call.1
$region0: #{tpu_custom_call.1}
  #allocation0 [shape = 'u32[]', space=smem, size = 0x4, offset = 0x4, fixed_abs, tag = 'smem constant byte address 0x4 - core index']
  #allocation1 [shape = 'u32[144,128]{1,0:T(1,128)}', space=vmem, size = 0x12000, scoped, tag = 'internal scratch']
  #allocation2 [shape = 'f32[256,128]{1,0:T(8,128)}', space=vmem, size = 0x20000, scoped, tag = 'scratch operand']
  #allocation3 [shape = 'f32[256,128]{1,0:T(8,128)}', space=vmem, size = 0x20000, scoped, tag = 'scratch operand']
  #allocation4 [shape = 's32[256,256]{1,0:T(8,128)}', space=vmem, size = 0x40000, scoped, tag = 'scratch operand']
  #allocation5 [shape = 's32[256,256]{1,0:T(8,128)}', space=vmem, size = 0x40000, scoped, tag = 'scratch operand']
  #allocation6 [shape = 's32[1]{0}', space=sflag, size = 0x4, scoped, tag = 'scoped memory for tpu_custom_call.1']
  #allocation7 [shape = 'u8[8192]{0}', space=smem, size = 0x2000, scoped, tag = 'prefetched SMEM operand 0']
  #allocation8 [shape = 'f32[1,1]{1,0:T(1,128)S(1)}', space=vmem, size = 0x200, scoped, tag = 'scoped memory for tpu_custom_call.1']
  #allocation9 [shape = 'f32[1,1]{1,0:T(1,128)S(6)}', space=smem, size = 0x200, scoped, tag = 'scoped memory for tpu_custom_call.1']
  %s0 = inlined_call_operand.vmem [shape: s32[2048], index: 0, kind: input, shape index: {}]
  %s1 = inlined_call_operand.hbm [shape: f32[1024,128], index: 1, kind: input, shape index: {}]
  %s2 = inlined_call_operand.hbm [shape: s32[1024,256], index: 2, kind: input, shape index: {}]
  %s3 = inlined_call_operand.vmem [shape: f32[128,128], index: 3, kind: input, shape index: {}]
  %s4 = inlined_call_operand.vmem [shape: f32[1,128], index: 4, kind: input, shape index: {}]
  %s5 = inlined_call_operand.hbm [shape: f32[128,128], index: 5, kind: input, shape index: {}]
  %s6 = inlined_call_operand.vmem [shape: f32[1,128], index: 6, kind: input, shape index: {}]
  %s7 = inlined_call_operand.vmem [shape: f32[1,128], index: 7, kind: input, shape index: {}]
  %s8 = inlined_call_operand.vmem [shape: f32[1,128], index: 8, kind: input, shape index: {}]
  %s9 = inlined_call_operand.hbm [shape: f32[128,128], index: 9, kind: input, shape index: {}]
  %s10 = inlined_call_operand.vmem [shape: f32[1,128], index: 10, kind: input, shape index: {}]
  %s11 = inlined_call_operand.hbm [shape: f32[128,128], index: 11, kind: input, shape index: {}]
  %s12 = inlined_call_operand.vmem [shape: f32[1,128], index: 12, kind: input, shape index: {}]
  %s13 = inlined_call_operand.hbm [shape: f32[128,128], index: 13, kind: input, shape index: {}]
  %s14 = inlined_call_operand.vmem [shape: f32[1,128], index: 14, kind: input, shape index: {}]
  %s15 = inlined_call_operand.vmem [shape: f32[128,1], index: 15, kind: input, shape index: {}]
  %s16 = inlined_call_operand.<no memory space> [shape: f32[1,1], index: 16, kind: input, shape index: {}]
  %s17 = inlined_call_operand.<no memory space> [shape: f32[1,1], index: 17, kind: input, shape index: {}]
  %s18 = inlined_call_operand.vmem [shape: f32[1024,1], index: 18, kind: output, shape index: {}]
  %s19 = sld [smem:[#allocation0]]
  $region132: #{tpu_custom_call.1} parent=0
    _
  %s21 = ssub.s32 1, %s19
  %s22 = scalar_select 0, %s21, %s19
  %s23 = sshll.u32 %s0, 4
  %s24 = int_to_ptr.vmem [resolvable:$true] %s23
  %26 = dma.vmem_to_smem %s24, 256, [#allocation7], [#allocation6]
  %v27 = vstv %s16
  %28 = vst [vmem:[#allocation8] sm:$0x1] %v27
  %29 = sst [smem:[#allocation9]] %s17
  %30 = dma.done [#allocation6], 256
  %31 = sfence
  $region1: #{tpu_custom_call.1} parent=0
    #allocation10 [shape = 'u8[524288]{0}', space=vmem, size = 0x80000, scoped, tag = 'input window, operand 1, single buffered']
    #allocation11 [shape = 's32[2]{0}', space=sflag, size = 0x8, scoped, tag = 'scoped memory for tpu_custom_call.1']
    #allocation12 [shape = 'u8[1048576]{0}', space=vmem, size = 0x100000, scoped, tag = 'input window, operand 2, single buffered']
    #allocation13 [shape = 's32[1]{0}', space=sflag, size = 0x4, scoped, tag = 'scoped memory for tpu_custom_call.1']
    #allocation14 [shape = 'u8[65536]{0}', space=vmem, size = 0x10000, scoped, tag = 'input window, operand 5, single buffered']
    #allocation15 [shape = 'u8[65536]{0}', space=vmem, size = 0x10000, scoped, tag = 'input window, operand 9, single buffered']
    #allocation16 [shape = 's32[1]{0}', space=sflag, size = 0x4, scoped, tag = 'scoped memory for tpu_custom_call.1']
    #allocation17 [shape = 'u8[65536]{0}', space=vmem, size = 0x10000, scoped, tag = 'input window, operand 11, single buffered']
    #allocation18 [shape = 'u8[65536]{0}', space=vmem, size = 0x10000, scoped, tag = 'input window, operand 13, single buffered']
    #allocation19 [shape = 's32[1]{0}', space=sflag, size = 0x4, scoped, tag = 'scoped memory for tpu_custom_call.1']
    %32 = vsyncpa [#allocation11], 0
    %33 = vsyncpa [#allocation13], 0
    %34 = vsyncpa [#allocation16], 0
    %35 = vsyncpa [#allocation19], 0
    loop: start=0, step=1, limit=6
    $region2: #{tpu_custom_call.1} parent=1 // loop_pre_header
      _
    $region3: #{tpu_custom_call.1} parent=1 // loop_header
      %s37 = sphi 0, %s41
      %p38 = scmp.ge.s32.totalorder %s37, 6
      %s45 = sphi 0, %s45
      %s47 = sphi 0, %s45
      %s48 = sphi 0, %s47
      %s62 = sphi 0, %s48
      %s66 = sphi 0, %s66
      %s68 = sphi 0, %s66
      %s69 = sphi 0, %s68
      %s83 = sphi 0, %s69
      %s87 = sphi 0, %s87
      %s89 = sphi 0, %s87
      %s90 = sphi 0, %s89
      %s104 = sphi 0, %s90
      %s108 = sphi 0, %s108
      %s110 = sphi 0, %s108
      %s111 = sphi 0, %s110
      %s125 = sphi 0, %s111
      %s129 = sphi 0, %s129
      %s131 = sphi 0, %s129
      %s132 = sphi 0, %s131
      %s146 = sphi 0, %s132
      %s150 = sphi 0, %s150
      %s152 = sphi 0, %s150
      %s153 = sphi 0, %s152
      %s167 = sphi 0, %s153
      %s171 = sphi 0, %s171
      %s173 = sphi 0, %s171
      %s174 = sphi 0, %s173
      %s188 = sphi 0, %s174
      %s192 = sphi 0, %s192
      %s194 = sphi 0, %s192
      %s195 = sphi 0, %s194
      %s209 = sphi 0, %s195
      %s213 = sphi 0, %s213
      %s215 = sphi 0, %s213
      %s216 = sphi 0, %s215
      %s230 = sphi 0, %s216
      %s234 = sphi 0, %s234
      %s236 = sphi 0, %s234
      %s237 = sphi 0, %s236
      %s251 = sphi 0, %s237
      %s255 = sphi 0, %s255
      %s257 = sphi 0, %s255
      %s258 = sphi 0, %s257
      %s272 = sphi 0, %s258
      %s276 = sphi 0, %s276
      %s278 = sphi 0, %s276
      %s279 = sphi 0, %s278
      %s293 = sphi 0, %s279
      %s297 = sphi 0, %s297
      %s299 = sphi 0, %s297
      %s300 = sphi 0, %s299
      %s314 = sphi 0, %s300
      %s318 = sphi 0, %s318
      %s320 = sphi 0, %s318
      %s321 = sphi 0, %s320
      %s335 = sphi 0, %s321
      %s339 = sphi 0, %s339
      %s341 = sphi 0, %s339
      %s342 = sphi 0, %s341
      %s356 = sphi 0, %s342
      %s360 = sphi 0, %s360
      %s362 = sphi 0, %s360
      %s363 = sphi 0, %s362
      %s377 = sphi 0, %s363
      %s381 = sphi 0, %s381
      %s383 = sphi 0, %s381
      %s384 = sphi 0, %s383
      %s398 = sphi 0, %s384
      %s404 = sphi 0, %s406
      %s407 = sphi 0, %s404
      %s408 = sphi 0, %s407
      %s424 = sphi 0, %s408
    $region4: #{tpu_custom_call.1} parent=1 // loop_header_branch
      %40 = sbr.rel (%p38) target = $region8
    $region5: #{tpu_custom_call.1} parent=1 // loop_body
      %s42 = ssub.s32 %s37, 1
      %s43 = ssub.s32 %s37, 2
      %s44 = sadd.s32 %s37, 1
      %s46 = sadd.s32 %s45, 1
      %p49 = scmp.eq.s32.totalorder %s37, 3
      %p50 = scmp.ne.s32.totalorder %s45, %s47
      %p51 = scmp.eq.s32.totalorder %s37, 0
      %p52 = por %p50, %p51
      %p53 = scmp.ne.s32.totalorder %s45, %s47
      %p54 = scmp.eq.s32.totalorder %s42, 3
      %p55 = por %p53, %p54
      %p56 = scmp.ne.s32.totalorder %s47, %s48
      %p57 = scmp.eq.s32.totalorder %s42, 0
      %p58 = por %p56, %p57
      %p59 = scmp.ne.s32.totalorder %s47, %s48
      %p60 = scmp.eq.s32.totalorder %s43, 3
      %p61 = por %p59, %p60
      %p63 = scmp.ne.s32.totalorder %s48, %s62
      %p64 = scmp.eq.s32.totalorder %s43, 0
      %p65 = por %p63, %p64
      %s67 = sadd.s32 %s66, 1
      %p70 = scmp.eq.s32.totalorder %s37, 3
      %p71 = scmp.ne.s32.totalorder %s66, %s68
      %p72 = scmp.eq.s32.totalorder %s37, 0
      %p73 = por %p71, %p72
      %p74 = scmp.ne.s32.totalorder %s66, %s68
      %p75 = scmp.eq.s32.totalorder %s42, 3
      %p76 = por %p74, %p75
      %p77 = scmp.ne.s32.totalorder %s68, %s69
      %p78 = scmp.eq.s32.totalorder %s42, 0
      %p79 = por %p77, %p78
      %p80 = scmp.ne.s32.totalorder %s68, %s69
      %p81 = scmp.eq.s32.totalorder %s43, 3
      %p82 = por %p80, %p81
      %p84 = scmp.ne.s32.totalorder %s69, %s83
      %p85 = scmp.eq.s32.totalorder %s43, 0
      %p86 = por %p84, %p85
      %s88 = sadd.s32 %s87, 1
      %p91 = scmp.eq.s32.totalorder %s37, 3
      %p92 = scmp.ne.s32.totalorder %s87, %s89
      %p93 = scmp.eq.s32.totalorder %s37, 0
      %p94 = por %p92, %p93
      %p95 = scmp.ne.s32.totalorder %s87, %s89
      %p96 = scmp.eq.s32.totalorder %s42, 3
      %p97 = por %p95, %p96
      %p98 = scmp.ne.s32.totalorder %s89, %s90
      %p99 = scmp.eq.s32.totalorder %s42, 0
      %p100 = por %p98, %p99
      %p101 = scmp.ne.s32.totalorder %s89, %s90
      %p102 = scmp.eq.s32.totalorder %s43, 3
      %p103 = por %p101, %p102
      %p105 = scmp.ne.s32.totalorder %s90, %s104
      %p106 = scmp.eq.s32.totalorder %s43, 0
      %p107 = por %p105, %p106
      %s109 = sadd.s32 %s108, 1
      %p112 = scmp.eq.s32.totalorder %s37, 3
      %p113 = scmp.ne.s32.totalorder %s108, %s110
      %p114 = scmp.eq.s32.totalorder %s37, 0
      %p115 = por %p113, %p114
      %p116 = scmp.ne.s32.totalorder %s108, %s110
      %p117 = scmp.eq.s32.totalorder %s42, 3
      %p118 = por %p116, %p117
      %p119 = scmp.ne.s32.totalorder %s110, %s111
      %p120 = scmp.eq.s32.totalorder %s42, 0
      %p121 = por %p119, %p120
      %p122 = scmp.ne.s32.totalorder %s110, %s111
      %p123 = scmp.eq.s32.totalorder %s43, 3
      %p124 = por %p122, %p123
      %p126 = scmp.ne.s32.totalorder %s111, %s125
      %p127 = scmp.eq.s32.totalorder %s43, 0
      %p128 = por %p126, %p127
      %s130 = sadd.s32 %s129, 1
      %p133 = scmp.eq.s32.totalorder %s37, 3
      %p134 = scmp.ne.s32.totalorder %s129, %s131
      %p135 = scmp.eq.s32.totalorder %s37, 0
      %p136 = por %p134, %p135
      %p137 = scmp.ne.s32.totalorder %s129, %s131
      %p138 = scmp.eq.s32.totalorder %s42, 3
      %p139 = por %p137, %p138
      %p140 = scmp.ne.s32.totalorder %s131, %s132
      %p141 = scmp.eq.s32.totalorder %s42, 0
      %p142 = por %p140, %p141
      %p143 = scmp.ne.s32.totalorder %s131, %s132
      %p144 = scmp.eq.s32.totalorder %s43, 3
      %p145 = por %p143, %p144
      %p147 = scmp.ne.s32.totalorder %s132, %s146
      %p148 = scmp.eq.s32.totalorder %s43, 0
      %p149 = por %p147, %p148
      %s151 = sadd.s32 %s150, 1
      %p154 = scmp.eq.s32.totalorder %s37, 3
      %p155 = scmp.ne.s32.totalorder %s150, %s152
      %p156 = scmp.eq.s32.totalorder %s37, 0
      %p157 = por %p155, %p156
      %p158 = scmp.ne.s32.totalorder %s150, %s152
      %p159 = scmp.eq.s32.totalorder %s42, 3
      %p160 = por %p158, %p159
      %p161 = scmp.ne.s32.totalorder %s152, %s153
      %p162 = scmp.eq.s32.totalorder %s42, 0
      %p163 = por %p161, %p162
      %p164 = scmp.ne.s32.totalorder %s152, %s153
      %p165 = scmp.eq.s32.totalorder %s43, 3
      %p166 = por %p164, %p165
      %p168 = scmp.ne.s32.totalorder %s153, %s167
      %p169 = scmp.eq.s32.totalorder %s43, 0
      %p170 = por %p168, %p169
      %s172 = sadd.s32 %s171, 1
      %p175 = scmp.eq.s32.totalorder %s37, 3
      %p176 = scmp.ne.s32.totalorder %s171, %s173
      %p177 = scmp.eq.s32.totalorder %s37, 0
      %p178 = por %p176, %p177
      %p179 = scmp.ne.s32.totalorder %s171, %s173
      %p180 = scmp.eq.s32.totalorder %s42, 3
      %p181 = por %p179, %p180
      %p182 = scmp.ne.s32.totalorder %s173, %s174
      %p183 = scmp.eq.s32.totalorder %s42, 0
      %p184 = por %p182, %p183
      %p185 = scmp.ne.s32.totalorder %s173, %s174
      %p186 = scmp.eq.s32.totalorder %s43, 3
      %p187 = por %p185, %p186
      %p189 = scmp.ne.s32.totalorder %s174, %s188
      %p190 = scmp.eq.s32.totalorder %s43, 0
      %p191 = por %p189, %p190
      %s193 = sadd.s32 %s192, 1
      %p196 = scmp.eq.s32.totalorder %s37, 3
      %p197 = scmp.ne.s32.totalorder %s192, %s194
      %p198 = scmp.eq.s32.totalorder %s37, 0
      %p199 = por %p197, %p198
      %p200 = scmp.ne.s32.totalorder %s192, %s194
      %p201 = scmp.eq.s32.totalorder %s42, 3
      %p202 = por %p200, %p201
      %p203 = scmp.ne.s32.totalorder %s194, %s195
      %p204 = scmp.eq.s32.totalorder %s42, 0
      %p205 = por %p203, %p204
      %p206 = scmp.ne.s32.totalorder %s194, %s195
      %p207 = scmp.eq.s32.totalorder %s43, 3
      %p208 = por %p206, %p207
      %p210 = scmp.ne.s32.totalorder %s195, %s209
      %p211 = scmp.eq.s32.totalorder %s43, 0
      %p212 = por %p210, %p211
      %s214 = sadd.s32 %s213, 1
      %p217 = scmp.eq.s32.totalorder %s37, 3
      %p218 = scmp.ne.s32.totalorder %s213, %s215
      %p219 = scmp.eq.s32.totalorder %s37, 0
      %p220 = por %p218, %p219
      %p221 = scmp.ne.s32.totalorder %s213, %s215
      %p222 = scmp.eq.s32.totalorder %s42, 3
      %p223 = por %p221, %p222
      %p224 = scmp.ne.s32.totalorder %s215, %s216
      %p225 = scmp.eq.s32.totalorder %s42, 0
      %p226 = por %p224, %p225
      %p227 = scmp.ne.s32.totalorder %s215, %s216
      %p228 = scmp.eq.s32.totalorder %s43, 3
      %p229 = por %p227, %p228
      %p231 = scmp.ne.s32.totalorder %s216, %s230
      %p232 = scmp.eq.s32.totalorder %s43, 0
      %p233 = por %p231, %p232
      %s235 = sadd.s32 %s234, 1
      %p238 = scmp.eq.s32.totalorder %s37, 3
      %p239 = scmp.ne.s32.totalorder %s234, %s236
      %p240 = scmp.eq.s32.totalorder %s37, 0
      %p241 = por %p239, %p240
      %p242 = scmp.ne.s32.totalorder %s234, %s236
      %p243 = scmp.eq.s32.totalorder %s42, 3
      %p244 = por %p242, %p243
      %p245 = scmp.ne.s32.totalorder %s236, %s237
      %p246 = scmp.eq.s32.totalorder %s42, 0
      %p247 = por %p245, %p246
      %p248 = scmp.ne.s32.totalorder %s236, %s237
      %p249 = scmp.eq.s32.totalorder %s43, 3
      %p250 = por %p248, %p249
      %p252 = scmp.ne.s32.totalorder %s237, %s251
      %p253 = scmp.eq.s32.totalorder %s43, 0
      %p254 = por %p252, %p253
      %s256 = sadd.s32 %s255, 1
      %p259 = scmp.eq.s32.totalorder %s37, 3
      %p260 = scmp.ne.s32.totalorder %s255, %s257
      %p261 = scmp.eq.s32.totalorder %s37, 0
      %p262 = por %p260, %p261
      %p263 = scmp.ne.s32.totalorder %s255, %s257
      %p264 = scmp.eq.s32.totalorder %s42, 3
      %p265 = por %p263, %p264
      %p266 = scmp.ne.s32.totalorder %s257, %s258
      %p267 = scmp.eq.s32.totalorder %s42, 0
      %p268 = por %p266, %p267
      %p269 = scmp.ne.s32.totalorder %s257, %s258
      %p270 = scmp.eq.s32.totalorder %s43, 3
      %p271 = por %p269, %p270
      %p273 = scmp.ne.s32.totalorder %s258, %s272
      %p274 = scmp.eq.s32.totalorder %s43, 0
      %p275 = por %p273, %p274
      %s277 = sadd.s32 %s276, 1
      %p280 = scmp.eq.s32.totalorder %s37, 3
      %p281 = scmp.ne.s32.totalorder %s276, %s278
      %p282 = scmp.eq.s32.totalorder %s37, 0
      %p283 = por %p281, %p282
      %p284 = scmp.ne.s32.totalorder %s276, %s278
      %p285 = scmp.eq.s32.totalorder %s42, 3
      %p286 = por %p284, %p285
      %p287 = scmp.ne.s32.totalorder %s278, %s279
      %p288 = scmp.eq.s32.totalorder %s42, 0
      %p289 = por %p287, %p288
      %p290 = scmp.ne.s32.totalorder %s278, %s279
      %p291 = scmp.eq.s32.totalorder %s43, 3
      %p292 = por %p290, %p291
      %p294 = scmp.ne.s32.totalorder %s279, %s293
      %p295 = scmp.eq.s32.totalorder %s43, 0
      %p296 = por %p294, %p295
      %s298 = sadd.s32 %s297, 1
      %p301 = scmp.eq.s32.totalorder %s37, 3
      %p302 = scmp.ne.s32.totalorder %s297, %s299
      %p303 = scmp.eq.s32.totalorder %s37, 0
      %p304 = por %p302, %p303
      %p305 = scmp.ne.s32.totalorder %s297, %s299
      %p306 = scmp.eq.s32.totalorder %s42, 3
      %p307 = por %p305, %p306
      %p308 = scmp.ne.s32.totalorder %s299, %s300
      %p309 = scmp.eq.s32.totalorder %s42, 0
      %p310 = por %p308, %p309
      %p311 = scmp.ne.s32.totalorder %s299, %s300
      %p312 = scmp.eq.s32.totalorder %s43, 3
      %p313 = por %p311, %p312
      %p315 = scmp.ne.s32.totalorder %s300, %s314
      %p316 = scmp.eq.s32.totalorder %s43, 0
      %p317 = por %p315, %p316
      %s319 = sadd.s32 %s318, 1
      %p322 = scmp.eq.s32.totalorder %s37, 3
      %p323 = scmp.ne.s32.totalorder %s318, %s320
      %p324 = scmp.eq.s32.totalorder %s37, 0
      %p325 = por %p323, %p324
      %p326 = scmp.ne.s32.totalorder %s318, %s320
      %p327 = scmp.eq.s32.totalorder %s42, 3
      %p328 = por %p326, %p327
      %p329 = scmp.ne.s32.totalorder %s320, %s321
      %p330 = scmp.eq.s32.totalorder %s42, 0
      %p331 = por %p329, %p330
      %p332 = scmp.ne.s32.totalorder %s320, %s321
      %p333 = scmp.eq.s32.totalorder %s43, 3
      %p334 = por %p332, %p333
      %p336 = scmp.ne.s32.totalorder %s321, %s335
      %p337 = scmp.eq.s32.totalorder %s43, 0
      %p338 = por %p336, %p337
      %s340 = sadd.s32 %s339, 1
      %p343 = scmp.eq.s32.totalorder %s37, 3
      %p344 = scmp.ne.s32.totalorder %s339, %s341
      %p345 = scmp.eq.s32.totalorder %s37, 0
      %p346 = por %p344, %p345
      %p347 = scmp.ne.s32.totalorder %s339, %s341
      %p348 = scmp.eq.s32.totalorder %s42, 3
      %p349 = por %p347, %p348
      %p350 = scmp.ne.s32.totalorder %s341, %s342
      %p351 = scmp.eq.s32.totalorder %s42, 0
      %p352 = por %p350, %p351
      %p353 = scmp.ne.s32.totalorder %s341, %s342
      %p354 = scmp.eq.s32.totalorder %s43, 3
      %p355 = por %p353, %p354
      %p357 = scmp.ne.s32.totalorder %s342, %s356
      %p358 = scmp.eq.s32.totalorder %s43, 0
      %p359 = por %p357, %p358
      %s361 = sadd.s32 %s360, 1
      %p364 = scmp.eq.s32.totalorder %s37, 3
      %p365 = scmp.ne.s32.totalorder %s360, %s362
      %p366 = scmp.eq.s32.totalorder %s37, 0
      %p367 = por %p365, %p366
      %p368 = scmp.ne.s32.totalorder %s360, %s362
      %p369 = scmp.eq.s32.totalorder %s42, 3
      %p370 = por %p368, %p369
      %p371 = scmp.ne.s32.totalorder %s362, %s363
      %p372 = scmp.eq.s32.totalorder %s42, 0
      %p373 = por %p371, %p372
      %p374 = scmp.ne.s32.totalorder %s362, %s363
      %p375 = scmp.eq.s32.totalorder %s43, 3
      %p376 = por %p374, %p375
      %p378 = scmp.ne.s32.totalorder %s363, %s377
      %p379 = scmp.eq.s32.totalorder %s43, 0
      %p380 = por %p378, %p379
      %s382 = sadd.s32 %s381, 1
      %p385 = scmp.eq.s32.totalorder %s37, 3
      %p386 = scmp.ne.s32.totalorder %s381, %s383
      %p387 = scmp.eq.s32.totalorder %s37, 0
      %p388 = por %p386, %p387
      %p389 = scmp.ne.s32.totalorder %s381, %s383
      %p390 = scmp.eq.s32.totalorder %s42, 3
      %p391 = por %p389, %p390
      %p392 = scmp.ne.s32.totalorder %s383, %s384
      %p393 = scmp.eq.s32.totalorder %s42, 0
      %p394 = por %p392, %p393
      %p395 = scmp.ne.s32.totalorder %s383, %s384
      %p396 = scmp.eq.s32.totalorder %s43, 3
      %p397 = por %p395, %p396
      %p399 = scmp.ne.s32.totalorder %s384, %s398
      %p400 = scmp.eq.s32.totalorder %s43, 0
      %p401 = por %p399, %p400
      %s402 = ssub.s32 %s37, %s44
      %p403 = scmp.eq.s32.totalorder %s402, 0
      %s405 = sadd.s32 %s404, 1
      %s406 = scalar_select %p403, %s404, %s405
      %p409 = pneg %p403
      %p410 = scmp.eq.s32.totalorder %s37, 3
      %p411 = por %p409, %p410
      %p412 = scmp.ne.s32.totalorder %s404, %s407
      %p413 = scmp.eq.s32.totalorder %s37, 0
      %p414 = por %p412, %p413
      %p415 = scmp.ne.s32.totalorder %s404, %s407
      %p416 = scmp.eq.s32.totalorder %s42, 3
      %p417 = por %p415, %p416
      %p418 = scmp.ne.s32.totalorder %s407, %s408
      %p419 = scmp.eq.s32.totalorder %s42, 0
      %p420 = por %p418, %p419
      %p421 = scmp.ne.s32.totalorder %s407, %s408
      %p422 = scmp.eq.s32.totalorder %s43, 3
      %p423 = por %p421, %p422
      %p425 = scmp.ne.s32.totalorder %s408, %s424
      %p426 = scmp.eq.s32.totalorder %s43, 0
      %p427 = por %p425, %p426
      %p428 = scmp.le.s32.totalorder 1, %s37
      %p429 = scmp.lt.s32.totalorder %s37, 5
      %p430 = pnand %p428, %p429
      %p431 = pneg %p430
      // Predicated region
      $region9: #{tpu_custom_call.1} parent=5 // pred_check
        _
      $region10: #{tpu_custom_call.1} parent=5 // pred_check_branch
        %433 = sbr.rel (%p430) target = $region12
      $region11: #{tpu_custom_call.1} parent=5 // pred_region
        %s434 = ssub.s32 %s37, 1
        // Predicated region
        $region13: #{tpu_custom_call.1} parent=11 // pred_check
          %p435 = pneg %p58
        $region14: #{tpu_custom_call.1} parent=11 // pred_check_branch
          %437 = sbr.rel (%p435) target = $region16
        $region15: #{tpu_custom_call.1} parent=11 // pred_region
          %s439 = ssub.s32 16384, 16384
          %440 = vsyncadd [#allocation11], %s439
          %s441 = sshll.u32 [#allocation10], 4
          %s442 = int_to_ptr.vmem [resolvable:$true] %s441
          %447 = dma.hbm_to_vmem [thread:$0]  %s1, 16384, %s442, [#allocation11], 128, 128, 8
        $region16: #{tpu_custom_call.1} parent=11 // pred_fallthru
          _
        // Predicated region
        $region17: #{tpu_custom_call.1} parent=11 // pred_check
          %p448 = pneg %p79
        $region18: #{tpu_custom_call.1} parent=11 // pred_check_branch
          %450 = sbr.rel (%p448) target = $region20
        $region19: #{tpu_custom_call.1} parent=11 // pred_region
          %s452 = ssub.s32 32768, 32768
          %453 = vsyncadd [#allocation13], %s452
          %s454 = sshll.u32 [#allocation12], 4
          %s455 = int_to_ptr.vmem [resolvable:$true] %s454
          %460 = dma.hbm_to_vmem [thread:$0]  %s2, 32768, %s455, [#allocation13], 256, 256, 16
        $region20: #{tpu_custom_call.1} parent=11 // pred_fallthru
          _
        // Predicated region
        $region21: #{tpu_custom_call.1} parent=11 // pred_check
          %p461 = pneg %p100
        $region22: #{tpu_custom_call.1} parent=11 // pred_check_branch
          %463 = sbr.rel (%p461) target = $region24
        $region23: #{tpu_custom_call.1} parent=11 // pred_region
          _
        $region24: #{tpu_custom_call.1} parent=11 // pred_fallthru
          _
        // Predicated region
        $region25: #{tpu_custom_call.1} parent=11 // pred_check
          %p464 = pneg %p121
        $region26: #{tpu_custom_call.1} parent=11 // pred_check_branch
          %466 = sbr.rel (%p464) target = $region28
        $region27: #{tpu_custom_call.1} parent=11 // pred_region
          _
        $region28: #{tpu_custom_call.1} parent=11 // pred_fallthru
          _
        // Predicated region
        $region29: #{tpu_custom_call.1} parent=11 // pred_check
          %p467 = pneg %p142
        $region30: #{tpu_custom_call.1} parent=11 // pred_check_branch
          %469 = sbr.rel (%p467) target = $region32
        $region31: #{tpu_custom_call.1} parent=11 // pred_region
          %s471 = ssub.s32 2048, 2048
          %472 = vsyncadd [#allocation13], %s471
          %s473 = sshll.u32 [#allocation14], 4
          %s474 = int_to_ptr.vmem [resolvable:$true] %s473
          %479 = dma.hbm_to_vmem [thread:$0]  %s5, 2048, %s474, [#allocation13], 128, 128, 8
        $region32: #{tpu_custom_call.1} parent=11 // pred_fallthru
          _
        // Predicated region
        $region33: #{tpu_custom_call.1} parent=11 // pred_check
          %p480 = pneg %p163
        $region34: #{tpu_custom_call.1} parent=11 // pred_check_branch
          %482 = sbr.rel (%p480) target = $region36
        $region35: #{tpu_custom_call.1} parent=11 // pred_region
          _
        $region36: #{tpu_custom_call.1} parent=11 // pred_fallthru
          _
        // Predicated region
        $region37: #{tpu_custom_call.1} parent=11 // pred_check
          %p483 = pneg %p184
        $region38: #{tpu_custom_call.1} parent=11 // pred_check_branch
          %485 = sbr.rel (%p483) target = $region40
        $region39: #{tpu_custom_call.1} parent=11 // pred_region
          _
        $region40: #{tpu_custom_call.1} parent=11 // pred_fallthru
          _
        // Predicated region
        $region41: #{tpu_custom_call.1} parent=11 // pred_check
          %p486 = pneg %p205
        $region42: #{tpu_custom_call.1} parent=11 // pred_check_branch
          %488 = sbr.rel (%p486) target = $region44
        $region43: #{tpu_custom_call.1} parent=11 // pred_region
          _
        $region44: #{tpu_custom_call.1} parent=11 // pred_fallthru
          _
        // Predicated region
        $region45: #{tpu_custom_call.1} parent=11 // pred_check
          %p489 = pneg %p226
        $region46: #{tpu_custom_call.1} parent=11 // pred_check_branch
          %491 = sbr.rel (%p489) target = $region48
        $region47: #{tpu_custom_call.1} parent=11 // pred_region
          %s493 = ssub.s32 2048, 2048
          %494 = vsyncadd [#allocation16], %s493
          %s495 = sshll.u32 [#allocation15], 4
          %s496 = int_to_ptr.vmem [resolvable:$true] %s495
          %501 = dma.hbm_to_vmem [thread:$0]  %s9, 2048, %s496, [#allocation16], 128, 128, 8
        $region48: #{tpu_custom_call.1} parent=11 // pred_fallthru
          _
        // Predicated region
        $region49: #{tpu_custom_call.1} parent=11 // pred_check
          %p502 = pneg %p247
        $region50: #{tpu_custom_call.1} parent=11 // pred_check_branch
          %504 = sbr.rel (%p502) target = $region52
        $region51: #{tpu_custom_call.1} parent=11 // pred_region
          _
        $region52: #{tpu_custom_call.1} parent=11 // pred_fallthru
          _
        // Predicated region
        $region53: #{tpu_custom_call.1} parent=11 // pred_check
          %p505 = pneg %p268
        $region54: #{tpu_custom_call.1} parent=11 // pred_check_branch
          %507 = sbr.rel (%p505) target = $region56
        $region55: #{tpu_custom_call.1} parent=11 // pred_region
          %s509 = ssub.s32 2048, 2048
          %510 = vsyncadd [#allocation16], %s509
          %s511 = sshll.u32 [#allocation17], 4
          %s512 = int_to_ptr.vmem [resolvable:$true] %s511
          %517 = dma.hbm_to_vmem [thread:$0]  %s11, 2048, %s512, [#allocation16], 128, 128, 8
        $region56: #{tpu_custom_call.1} parent=11 // pred_fallthru
          _
        // Predicated region
        $region57: #{tpu_custom_call.1} parent=11 // pred_check
          %p518 = pneg %p289
        $region58: #{tpu_custom_call.1} parent=11 // pred_check_branch
          %520 = sbr.rel (%p518) target = $region60
        $region59: #{tpu_custom_call.1} parent=11 // pred_region
          _
        $region60: #{tpu_custom_call.1} parent=11 // pred_fallthru
          _
        // Predicated region
        $region61: #{tpu_custom_call.1} parent=11 // pred_check
          %p521 = pneg %p310
        $region62: #{tpu_custom_call.1} parent=11 // pred_check_branch
          %523 = sbr.rel (%p521) target = $region64
        $region63: #{tpu_custom_call.1} parent=11 // pred_region
          %s525 = ssub.s32 2048, 2048
          %526 = vsyncadd [#allocation19], %s525
          %s527 = sshll.u32 [#allocation18], 4
          %s528 = int_to_ptr.vmem [resolvable:$true] %s527
          %533 = dma.hbm_to_vmem [thread:$0]  %s13, 2048, %s528, [#allocation19], 128, 128, 8
        $region64: #{tpu_custom_call.1} parent=11 // pred_fallthru
          _
        // Predicated region
        $region65: #{tpu_custom_call.1} parent=11 // pred_check
          %p534 = pneg %p331
        $region66: #{tpu_custom_call.1} parent=11 // pred_check_branch
          %536 = sbr.rel (%p534) target = $region68
        $region67: #{tpu_custom_call.1} parent=11 // pred_region
          _
        $region68: #{tpu_custom_call.1} parent=11 // pred_fallthru
          _
        // Predicated region
        $region69: #{tpu_custom_call.1} parent=11 // pred_check
          %p537 = pneg %p352
        $region70: #{tpu_custom_call.1} parent=11 // pred_check_branch
          %539 = sbr.rel (%p537) target = $region72
        $region71: #{tpu_custom_call.1} parent=11 // pred_region
          _
        $region72: #{tpu_custom_call.1} parent=11 // pred_fallthru
          _
        // Predicated region
        $region73: #{tpu_custom_call.1} parent=11 // pred_check
          %p540 = pneg %p373
        $region74: #{tpu_custom_call.1} parent=11 // pred_check_branch
          %542 = sbr.rel (%p540) target = $region76
        $region75: #{tpu_custom_call.1} parent=11 // pred_region
          _
        $region76: #{tpu_custom_call.1} parent=11 // pred_fallthru
          _
        // Predicated region
        $region77: #{tpu_custom_call.1} parent=11 // pred_check
          %p543 = pneg %p394
        $region78: #{tpu_custom_call.1} parent=11 // pred_check_branch
          %545 = sbr.rel (%p543) target = $region80
        $region79: #{tpu_custom_call.1} parent=11 // pred_region
          _
        $region80: #{tpu_custom_call.1} parent=11 // pred_fallthru
          _
      $region12: #{tpu_custom_call.1} parent=5 // pred_fallthru
        _
      %p546 = scmp.lt.s32.totalorder %s37, 4
      // Predicated region
      $region81: #{tpu_custom_call.1} parent=5 // pred_check
        %p547 = pneg %p546
      $region82: #{tpu_custom_call.1} parent=5 // pred_check_branch
        %549 = sbr.rel (%p547) target = $region84
      $region83: #{tpu_custom_call.1} parent=5 // pred_region
        _
      $region84: #{tpu_custom_call.1} parent=5 // pred_fallthru
        _
      %p550 = scmp.le.s32.totalorder 1, %s37
      %p551 = scmp.lt.s32.totalorder %s37, 5
      %p552 = pnand %p550, %p551
      %p553 = pneg %p552
      // Predicated region
      $region85: #{tpu_custom_call.1} parent=5 // pred_check
        _
      $region86: #{tpu_custom_call.1} parent=5 // pred_check_branch
        %555 = sbr.rel (%p552) target = $region88
      $region87: #{tpu_custom_call.1} parent=5 // pred_region
        %s556 = ssub.s32 %s37, 1
        // Predicated region
        $region89: #{tpu_custom_call.1} parent=87 // pred_check
          %p557 = pneg %p58
        $region90: #{tpu_custom_call.1} parent=87 // pred_check_branch
          %559 = sbr.rel (%p557) target = $region92
        $region91: #{tpu_custom_call.1} parent=87 // pred_region
          %560 = dma.done [#allocation11], 16384
        $region92: #{tpu_custom_call.1} parent=87 // pred_fallthru
          _
        // Predicated region
        $region93: #{tpu_custom_call.1} parent=87 // pred_check
          %p561 = pneg %p79
        $region94: #{tpu_custom_call.1} parent=87 // pred_check_branch
          %563 = sbr.rel (%p561) target = $region96
        $region95: #{tpu_custom_call.1} parent=87 // pred_region
          %564 = dma.done [#allocation13], 32768
        $region96: #{tpu_custom_call.1} parent=87 // pred_fallthru
          _
        // Predicated region
        $region97: #{tpu_custom_call.1} parent=87 // pred_check
          %p565 = pneg %p142
        $region98: #{tpu_custom_call.1} parent=87 // pred_check_branch
          %567 = sbr.rel (%p565) target = $region100
        $region99: #{tpu_custom_call.1} parent=87 // pred_region
          %568 = dma.done [#allocation13], 2048
        $region100: #{tpu_custom_call.1} parent=87 // pred_fallthru
          _
        // Predicated region
        $region101: #{tpu_custom_call.1} parent=87 // pred_check
          %p569 = pneg %p226
        $region102: #{tpu_custom_call.1} parent=87 // pred_check_branch
          %571 = sbr.rel (%p569) target = $region104
        $region103: #{tpu_custom_call.1} parent=87 // pred_region
          %572 = dma.done [#allocation16], 2048
        $region104: #{tpu_custom_call.1} parent=87 // pred_fallthru
          _
        // Predicated region
        $region105: #{tpu_custom_call.1} parent=87 // pred_check
          %p573 = pneg %p268
        $region106: #{tpu_custom_call.1} parent=87 // pred_check_branch
          %575 = sbr.rel (%p573) target = $region108
        $region107: #{tpu_custom_call.1} parent=87 // pred_region
          %576 = dma.done [#allocation16], 2048
        $region108: #{tpu_custom_call.1} parent=87 // pred_fallthru
          _
        // Predicated region
        $region109: #{tpu_custom_call.1} parent=87 // pred_check
          %p577 = pneg %p310
        $region110: #{tpu_custom_call.1} parent=87 // pred_check_branch
          %579 = sbr.rel (%p577) target = $region112
        $region111: #{tpu_custom_call.1} parent=87 // pred_region
          %580 = dma.done [#allocation19], 2048
        $region112: #{tpu_custom_call.1} parent=87 // pred_fallthru
          _
        %p581 = pneg %p58
        %p582 = pneg %p55
        %p583 = pneg %p79
        %p584 = pneg %p76
        %p585 = pneg %p100
        %p586 = pneg %p97
        %p587 = pneg %p121
        %p588 = pneg %p118
        %p589 = pneg %p142
        %p590 = pneg %p139
        %p591 = pneg %p163
        %p592 = pneg %p160
        %p593 = pneg %p184
        %p594 = pneg %p181
        %p595 = pneg %p205
        %p596 = pneg %p202
        %p597 = pneg %p226
        %p598 = pneg %p223
        %p599 = pneg %p247
        %p600 = pneg %p244
        %p601 = pneg %p268
        %p602 = pneg %p265
        %p603 = pneg %p289
        %p604 = pneg %p286
        %p605 = pneg %p310
        %p606 = pneg %p307
        %p607 = pneg %p331
        %p608 = pneg %p328
        %p609 = pneg %p352
        %p610 = pneg %p349
        %p611 = pneg %p373
        %p612 = pneg %p370
        %p613 = pneg %p394
        %p614 = pneg %p391
        %p615 = pneg %p420
        %p616 = pneg %p417
        %s617 = smul.u32 32, %s42
        %p618 = scmp.lt.s32.totalorder %s617, 127
        %s619 = scalar_select %p618, %s617, 127
        %s620 = smul.addr %s619, 8
        %s621 = scalar_lea.vmem %s18, %s620
        %s622 = smul.u32 32, %s42
        %p623 = scmp.lt.s32.totalorder %s622, 127
        %s624 = scalar_select %p623, %s622, 127
        %s625 = smul.addr %s624, 8
        %s626 = scalar_lea.vmem %s18, %s625
        %s627 = smul.u32 32, %s42
        %s628 = smul.u32 %s42, 256
        loop: start=0, step=1, limit=32
        $region113: #{tpu_custom_call.1} parent=87 // loop_pre_header
          _
        $region114: #{tpu_custom_call.1} parent=87 // loop_header
          %s630 = sphi 0, %s634
          %p631 = scmp.ge.s32.totalorder %s630, 32
        $region115: #{tpu_custom_call.1} parent=87 // loop_header_branch
          %633 = sbr.rel (%p631) target = $region119
        $region116: #{tpu_custom_call.1} parent=87 // loop_body
          %s635 = smul.u32 %s630, 8
          %s636 = sadd.s32 %s628, %s635
          %s637 = sld [smem:[#allocation7 + %s636]]
          %s638 = sadd.s32 %s628, 1024
          %s639 = sadd.s32 %s638, %s635
          %s640 = sld [smem:[#allocation7 + %s639]]
          %s641 = scalar_lea.vmem [#allocation10], %s637
          %v642 = vld [vmem:[%s641] sm:$0x1]
          %s643 = scalar_lea.vmem [#allocation2], %s635
          %644 = vst [vmem:[%s643] sm:$0x1] %v642
          %s645 = scalar_lea.vmem [#allocation10], %s640
          %v646 = vld [vmem:[%s645] sm:$0x1]
          %s647 = scalar_lea.vmem [#allocation3], %s635
          %648 = vst [vmem:[%s647] sm:$0x1] %v646
          %s649 = sshra.s32 %s637, 3
          %s650 = sand.u32 %s637, 7
          %s651 = sshra.s32 %s637, 3
          %s652 = sand.u32 %s637, 7
          %s653 = smul.u32 %s649, 2
          %s654 = smul.u32 %s653, 8
          %s655 = sadd.s32 %s654, %s652
          %s656 = scalar_lea.vmem [#allocation12], %s655
          %v657 = vld [vmem:[%s656] ss:$8 sm:$0x3]
          %s658 = sshra.s32 %s635, 3
          %s659 = sand.u32 %s635, 7
          %s660 = smul.u32 %s658, 2
          %s661 = smul.addr %s660, 8
          %s662 = scalar_lea.vmem [#allocation4], %s661
          %v663 = vlaneseq
          %vm664 = vcmp.ge.s32.totalorder %v663, 0
          %vm665 = vcmp.lt.s32.totalorder %v663, 256
          %vm666 = vmand %vm664, %vm665
          %667 = vst.msk [vmem:[%s662] ss:$8 sm:$0x3] %vm666, %v657
          %668 = vst.msk [vmem:[%s662] ss:$8 sm:$0x0] %vm666, %v657
          %s669 = sshra.s32 %s640, 3
          %s670 = sand.u32 %s640, 7
          %s671 = sshra.s32 %s640, 3
          %s672 = sand.u32 %s640, 7
          %s673 = smul.u32 %s669, 2
          %s674 = smul.u32 %s673, 8
          %s675 = sadd.s32 %s674, %s672
          %s676 = scalar_lea.vmem [#allocation12], %s675
          %v677 = vld [vmem:[%s676] ss:$8 sm:$0x3]
          %s678 = smul.addr %s660, 8
          %s679 = scalar_lea.vmem [#allocation5], %s678
          %680 = vst.msk [vmem:[%s679] ss:$8 sm:$0x3] %vm666, %v677
          %681 = vst.msk [vmem:[%s679] ss:$8 sm:$0x0] %vm666, %v677
          %s682 = sadd.s32 %s635, 1
          %s683 = sadd.s32 %s628, %s682
          %s684 = sld [smem:[#allocation7 + %s683]]
          %s685 = sadd.s32 %s638, %s682
          %s686 = sld [smem:[#allocation7 + %s685]]
          %s687 = scalar_lea.vmem [#allocation10], %s684
          %v688 = vld [vmem:[%s687] sm:$0x1]
          %s689 = scalar_lea.vmem [#allocation2], %s682
          %690 = vst [vmem:[%s689] sm:$0x1] %v688
          %s691 = scalar_lea.vmem [#allocation10], %s686
          %v692 = vld [vmem:[%s691] sm:$0x1]
          %s693 = scalar_lea.vmem [#allocation3], %s682
          %694 = vst [vmem:[%s693] sm:$0x1] %v692
          %s695 = sshra.s32 %s684, 3
          %s696 = sand.u32 %s684, 7
          %s697 = sshra.s32 %s684, 3
          %s698 = sand.u32 %s684, 7
          %s699 = smul.u32 %s695, 2
          %s700 = smul.u32 %s699, 8
          %s701 = sadd.s32 %s700, %s698
          %s702 = scalar_lea.vmem [#allocation12], %s701
          %v703 = vld [vmem:[%s702] ss:$8 sm:$0x3]
          %s704 = sshra.s32 %s682, 3
          %s705 = sand.u32 %s682, 7
          %s706 = sshra.s32 %s682, 3
          %s707 = sand.u32 %s682, 7
          %s708 = smul.u32 %s704, 2
          %s709 = smul.u32 %s708, 8
          %s710 = sadd.s32 %s709, %s707
          %s711 = scalar_lea.vmem [#allocation4], %s710
          %712 = vst.msk [vmem:[%s711] ss:$8 sm:$0x3] %vm666, %v703
          %713 = vst.msk [vmem:[%s711] ss:$8 sm:$0x0] %vm666, %v703
          %s714 = sshra.s32 %s686, 3
          %s715 = sand.u32 %s686, 7
          %s716 = sshra.s32 %s686, 3
          %s717 = sand.u32 %s686, 7
          %s718 = smul.u32 %s714, 2
          %s719 = smul.u32 %s718, 8
          %s720 = sadd.s32 %s719, %s717
          %s721 = scalar_lea.vmem [#allocation12], %s720
          %v722 = vld [vmem:[%s721] ss:$8 sm:$0x3]
          %s723 = scalar_lea.vmem [#allocation5], %s710
          %724 = vst.msk [vmem:[%s723] ss:$8 sm:$0x3] %vm666, %v722
          %725 = vst.msk [vmem:[%s723] ss:$8 sm:$0x0] %vm666, %v722
          %s726 = sadd.s32 %s635, 2
          %s727 = sadd.s32 %s628, %s726
          %s728 = sld [smem:[#allocation7 + %s727]]
          %s729 = sadd.s32 %s638, %s726
          %s730 = sld [smem:[#allocation7 + %s729]]
          %s731 = scalar_lea.vmem [#allocation10], %s728
          %v732 = vld [vmem:[%s731] sm:$0x1]
          %s733 = scalar_lea.vmem [#allocation2], %s726
          %734 = vst [vmem:[%s733] sm:$0x1] %v732
          %s735 = scalar_lea.vmem [#allocation10], %s730
          %v736 = vld [vmem:[%s735] sm:$0x1]
          %s737 = scalar_lea.vmem [#allocation3], %s726
          %738 = vst [vmem:[%s737] sm:$0x1] %v736
          %s739 = sshra.s32 %s728, 3
          %s740 = sand.u32 %s728, 7
          %s741 = sshra.s32 %s728, 3
          %s742 = sand.u32 %s728, 7
          %s743 = smul.u32 %s739, 2
          %s744 = smul.u32 %s743, 8
          %s745 = sadd.s32 %s744, %s742
          %s746 = scalar_lea.vmem [#allocation12], %s745
          %v747 = vld [vmem:[%s746] ss:$8 sm:$0x3]
          %s748 = sshra.s32 %s726, 3
          %s749 = sand.u32 %s726, 7
          %s750 = sshra.s32 %s726, 3
          %s751 = sand.u32 %s726, 7
          %s752 = smul.u32 %s748, 2
          %s753 = smul.u32 %s752, 8
          %s754 = sadd.s32 %s753, %s751
          %s755 = scalar_lea.vmem [#allocation4], %s754
          %756 = vst.msk [vmem:[%s755] ss:$8 sm:$0x3] %vm666, %v747
          %757 = vst.msk [vmem:[%s755] ss:$8 sm:$0x0] %vm666, %v747
          %s758 = sshra.s32 %s730, 3
          %s759 = sand.u32 %s730, 7
          %s760 = sshra.s32 %s730, 3
          %s761 = sand.u32 %s730, 7
          %s762 = smul.u32 %s758, 2
          %s763 = smul.u32 %s762, 8
          %s764 = sadd.s32 %s763, %s761
          %s765 = scalar_lea.vmem [#allocation12], %s764
          %v766 = vld [vmem:[%s765] ss:$8 sm:$0x3]
          %s767 = scalar_lea.vmem [#allocation5], %s754
          %768 = vst.msk [vmem:[%s767] ss:$8 sm:$0x3] %vm666, %v766
          %769 = vst.msk [vmem:[%s767] ss:$8 sm:$0x0] %vm666, %v766
          %s770 = sadd.s32 %s635, 3
          %s771 = sadd.s32 %s628, %s770
          %s772 = sld [smem:[#allocation7 + %s771]]
          %s773 = sadd.s32 %s638, %s770
          %s774 = sld [smem:[#allocation7 + %s773]]
          %s775 = scalar_lea.vmem [#allocation10], %s772
          %v776 = vld [vmem:[%s775] sm:$0x1]
          %s777 = scalar_lea.vmem [#allocation2], %s770
          %778 = vst [vmem:[%s777] sm:$0x1] %v776
          %s779 = scalar_lea.vmem [#allocation10], %s774
          %v780 = vld [vmem:[%s779] sm:$0x1]
          %s781 = scalar_lea.vmem [#allocation3], %s770
          %782 = vst [vmem:[%s781] sm:$0x1] %v780
          %s783 = sshra.s32 %s772, 3
          %s784 = sand.u32 %s772, 7
          %s785 = sshra.s32 %s772, 3
          %s786 = sand.u32 %s772, 7
          %s787 = smul.u32 %s783, 2
          %s788 = smul.u32 %s787, 8
          %s789 = sadd.s32 %s788, %s786
          %s790 = scalar_lea.vmem [#allocation12], %s789
          %v791 = vld [vmem:[%s790] ss:$8 sm:$0x3]
          %s792 = sshra.s32 %s770, 3
          %s793 = sand.u32 %s770, 7
          %s794 = sshra.s32 %s770, 3
          %s795 = sand.u32 %s770, 7
          %s796 = smul.u32 %s792, 2
          %s797 = smul.u32 %s796, 8
          %s798 = sadd.s32 %s797, %s795
          %s799 = scalar_lea.vmem [#allocation4], %s798
          %800 = vst.msk [vmem:[%s799] ss:$8 sm:$0x3] %vm666, %v791
          %801 = vst.msk [vmem:[%s799] ss:$8 sm:$0x0] %vm666, %v791
          %s802 = sshra.s32 %s774, 3
          %s803 = sand.u32 %s774, 7
          %s804 = sshra.s32 %s774, 3
          %s805 = sand.u32 %s774, 7
          %s806 = smul.u32 %s802, 2
          %s807 = smul.u32 %s806, 8
          %s808 = sadd.s32 %s807, %s805
          %s809 = scalar_lea.vmem [#allocation12], %s808
          %v810 = vld [vmem:[%s809] ss:$8 sm:$0x3]
          %s811 = scalar_lea.vmem [#allocation5], %s798
          %812 = vst.msk [vmem:[%s811] ss:$8 sm:$0x3] %vm666, %v810
          %813 = vst.msk [vmem:[%s811] ss:$8 sm:$0x0] %vm666, %v810
          %s814 = sadd.s32 %s635, 4
          %s815 = sadd.s32 %s628, %s814
          %s816 = sld [smem:[#allocation7 + %s815]]
          %s817 = sadd.s32 %s638, %s814
          %s818 = sld [smem:[#allocation7 + %s817]]
          %s819 = scalar_lea.vmem [#allocation10], %s816
          %v820 = vld [vmem:[%s819] sm:$0x1]
          %s821 = scalar_lea.vmem [#allocation2], %s814
          %822 = vst [vmem:[%s821] sm:$0x1] %v820
          %s823 = scalar_lea.vmem [#allocation10], %s818
          %v824 = vld [vmem:[%s823] sm:$0x1]
          %s825 = scalar_lea.vmem [#allocation3], %s814
          %826 = vst [vmem:[%s825] sm:$0x1] %v824
          %s827 = sshra.s32 %s816, 3
          %s828 = sand.u32 %s816, 7
          %s829 = sshra.s32 %s816, 3
          %s830 = sand.u32 %s816, 7
          %s831 = smul.u32 %s827, 2
          %s832 = smul.u32 %s831, 8
          %s833 = sadd.s32 %s832, %s830
          %s834 = scalar_lea.vmem [#allocation12], %s833
          %v835 = vld [vmem:[%s834] ss:$8 sm:$0x3]
          %s836 = sshra.s32 %s814, 3
          %s837 = sand.u32 %s814, 7
          %s838 = sshra.s32 %s814, 3
          %s839 = sand.u32 %s814, 7
          %s840 = smul.u32 %s836, 2
          %s841 = smul.u32 %s840, 8
          %s842 = sadd.s32 %s841, %s839
          %s843 = scalar_lea.vmem [#allocation4], %s842
          %844 = vst.msk [vmem:[%s843] ss:$8 sm:$0x3] %vm666, %v835
          %845 = vst.msk [vmem:[%s843] ss:$8 sm:$0x0] %vm666, %v835
          %s846 = sshra.s32 %s818, 3
          %s847 = sand.u32 %s818, 7
          %s848 = sshra.s32 %s818, 3
          %s849 = sand.u32 %s818, 7
          %s850 = smul.u32 %s846, 2
          %s851 = smul.u32 %s850, 8
          %s852 = sadd.s32 %s851, %s849
          %s853 = scalar_lea.vmem [#allocation12], %s852
          %v854 = vld [vmem:[%s853] ss:$8 sm:$0x3]
          %s855 = scalar_lea.vmem [#allocation5], %s842
          %856 = vst.msk [vmem:[%s855] ss:$8 sm:$0x3] %vm666, %v854
          %857 = vst.msk [vmem:[%s855] ss:$8 sm:$0x0] %vm666, %v854
          %s858 = sadd.s32 %s635, 5
          %s859 = sadd.s32 %s628, %s858
          %s860 = sld [smem:[#allocation7 + %s859]]
          %s861 = sadd.s32 %s638, %s858
          %s862 = sld [smem:[#allocation7 + %s861]]
          %s863 = scalar_lea.vmem [#allocation10], %s860
          %v864 = vld [vmem:[%s863] sm:$0x1]
          %s865 = scalar_lea.vmem [#allocation2], %s858
          %866 = vst [vmem:[%s865] sm:$0x1] %v864
          %s867 = scalar_lea.vmem [#allocation10], %s862
          %v868 = vld [vmem:[%s867] sm:$0x1]
          %s869 = scalar_lea.vmem [#allocation3], %s858
          %870 = vst [vmem:[%s869] sm:$0x1] %v868
          %s871 = sshra.s32 %s860, 3
          %s872 = sand.u32 %s860, 7
          %s873 = sshra.s32 %s860, 3
          %s874 = sand.u32 %s860, 7
          %s875 = smul.u32 %s871, 2
          %s876 = smul.u32 %s875, 8
          %s877 = sadd.s32 %s876, %s874
          %s878 = scalar_lea.vmem [#allocation12], %s877
          %v879 = vld [vmem:[%s878] ss:$8 sm:$0x3]
          %s880 = sshra.s32 %s858, 3
          %s881 = sand.u32 %s858, 7
          %s882 = sshra.s32 %s858, 3
          %s883 = sand.u32 %s858, 7
          %s884 = smul.u32 %s880, 2
          %s885 = smul.u32 %s884, 8
          %s886 = sadd.s32 %s885, %s883
          %s887 = scalar_lea.vmem [#allocation4], %s886
          %888 = vst.msk [vmem:[%s887] ss:$8 sm:$0x3] %vm666, %v879
          %889 = vst.msk [vmem:[%s887] ss:$8 sm:$0x0] %vm666, %v879
          %s890 = sshra.s32 %s862, 3
          %s891 = sand.u32 %s862, 7
          %s892 = sshra.s32 %s862, 3
          %s893 = sand.u32 %s862, 7
          %s894 = smul.u32 %s890, 2
          %s895 = smul.u32 %s894, 8
          %s896 = sadd.s32 %s895, %s893
          %s897 = scalar_lea.vmem [#allocation12], %s896
          %v898 = vld [vmem:[%s897] ss:$8 sm:$0x3]
          %s899 = scalar_lea.vmem [#allocation5], %s886
          %900 = vst.msk [vmem:[%s899] ss:$8 sm:$0x3] %vm666, %v898
          %901 = vst.msk [vmem:[%s899] ss:$8 sm:$0x0] %vm666, %v898
          %s902 = sadd.s32 %s635, 6
          %s903 = sadd.s32 %s628, %s902
          %s904 = sld [smem:[#allocation7 + %s903]]
          %s905 = sadd.s32 %s638, %s902
          %s906 = sld [smem:[#allocation7 + %s905]]
          %s907 = scalar_lea.vmem [#allocation10], %s904
          %v908 = vld [vmem:[%s907] sm:$0x1]
          %s909 = scalar_lea.vmem [#allocation2], %s902
          %910 = vst [vmem:[%s909] sm:$0x1] %v908
          %s911 = scalar_lea.vmem [#allocation10], %s906
          %v912 = vld [vmem:[%s911] sm:$0x1]
          %s913 = scalar_lea.vmem [#allocation3], %s902
          %914 = vst [vmem:[%s913] sm:$0x1] %v912
          %s915 = sshra.s32 %s904, 3
          %s916 = sand.u32 %s904, 7
          %s917 = sshra.s32 %s904, 3
          %s918 = sand.u32 %s904, 7
          %s919 = smul.u32 %s915, 2
          %s920 = smul.u32 %s919, 8
          %s921 = sadd.s32 %s920, %s918
          %s922 = scalar_lea.vmem [#allocation12], %s921
          %v923 = vld [vmem:[%s922] ss:$8 sm:$0x3]
          %s924 = sshra.s32 %s902, 3
          %s925 = sand.u32 %s902, 7
          %s926 = sshra.s32 %s902, 3
          %s927 = sand.u32 %s902, 7
          %s928 = smul.u32 %s924, 2
          %s929 = smul.u32 %s928, 8
          %s930 = sadd.s32 %s929, %s927
          %s931 = scalar_lea.vmem [#allocation4], %s930
          %932 = vst.msk [vmem:[%s931] ss:$8 sm:$0x3] %vm666, %v923
          %933 = vst.msk [vmem:[%s931] ss:$8 sm:$0x0] %vm666, %v923
          %s934 = sshra.s32 %s906, 3
          %s935 = sand.u32 %s906, 7
          %s936 = sshra.s32 %s906, 3
          %s937 = sand.u32 %s906, 7
          %s938 = smul.u32 %s934, 2
          %s939 = smul.u32 %s938, 8
          %s940 = sadd.s32 %s939, %s937
          %s941 = scalar_lea.vmem [#allocation12], %s940
          %v942 = vld [vmem:[%s941] ss:$8 sm:$0x3]
          %s943 = scalar_lea.vmem [#allocation5], %s930
          %944 = vst.msk [vmem:[%s943] ss:$8 sm:$0x3] %vm666, %v942
          %945 = vst.msk [vmem:[%s943] ss:$8 sm:$0x0] %vm666, %v942
          %s946 = sadd.s32 %s635, 7
          %s947 = sadd.s32 %s628, %s946
          %s948 = sld [smem:[#allocation7 + %s947]]
          %s949 = sadd.s32 %s638, %s946
          %s950 = sld [smem:[#allocation7 + %s949]]
          %s951 = scalar_lea.vmem [#allocation10], %s948
          %v952 = vld [vmem:[%s951] sm:$0x1]
          %s953 = scalar_lea.vmem [#allocation2], %s946
          %954 = vst [vmem:[%s953] sm:$0x1] %v952
          %s955 = scalar_lea.vmem [#allocation10], %s950
          %v956 = vld [vmem:[%s955] sm:$0x1]
          %s957 = scalar_lea.vmem [#allocation3], %s946
          %958 = vst [vmem:[%s957] sm:$0x1] %v956
          %s959 = sshra.s32 %s948, 3
          %s960 = sand.u32 %s948, 7
          %s961 = sshra.s32 %s948, 3
          %s962 = sand.u32 %s948, 7
          %s963 = smul.u32 %s959, 2
          %s964 = smul.u32 %s963, 8
          %s965 = sadd.s32 %s964, %s962
          %s966 = scalar_lea.vmem [#allocation12], %s965
          %v967 = vld [vmem:[%s966] ss:$8 sm:$0x3]
          %s968 = sshra.s32 %s946, 3
          %s969 = sand.u32 %s946, 7
          %s970 = sshra.s32 %s946, 3
          %s971 = sand.u32 %s946, 7
          %s972 = smul.u32 %s968, 2
          %s973 = smul.u32 %s972, 8
          %s974 = sadd.s32 %s973, %s971
          %s975 = scalar_lea.vmem [#allocation4], %s974
          %976 = vst.msk [vmem:[%s975] ss:$8 sm:$0x3] %vm666, %v967
          %977 = vst.msk [vmem:[%s975] ss:$8 sm:$0x0] %vm666, %v967
          %s978 = sshra.s32 %s950, 3
          %s979 = sand.u32 %s950, 7
          %s980 = sshra.s32 %s950, 3
          %s981 = sand.u32 %s950, 7
          %s982 = smul.u32 %s978, 2
          %s983 = smul.u32 %s982, 8
          %s984 = sadd.s32 %s983, %s981
          %s985 = scalar_lea.vmem [#allocation12], %s984
          %v986 = vld [vmem:[%s985] ss:$8 sm:$0x3]
          %s987 = scalar_lea.vmem [#allocation5], %s974
          %988 = vst.msk [vmem:[%s987] ss:$8 sm:$0x3] %vm666, %v986
          %989 = vst.msk [vmem:[%s987] ss:$8 sm:$0x0] %vm666, %v986
        $region117: #{tpu_custom_call.1} parent=87 // loop_footer
          %s634 = sadd.s32 1, %s630
        $region118: #{tpu_custom_call.1} parent=87 // loop_footer_branch
          %629 = sbr.rel target = $region114
        $region119: #{tpu_custom_call.1} parent=87 // loop_exit
          _
        %v990 = vld [vmem:[#allocation4] sm:$0xff]
        %v991 = vld [vmem:[#allocation4 + $0x8] sm:$0xff]
        %v992 = vld [vmem:[#allocation4 + $0x10] sm:$0xff]
        %v993 = vld [vmem:[#allocation4 + $0x18] sm:$0xff]
        %v994 = vld [vmem:[#allocation4 + $0x20] sm:$0xff]
        %v995 = vld [vmem:[#allocation4 + $0x28] sm:$0xff]
        %v996 = vld [vmem:[#allocation4 + $0x30] sm:$0xff]
        %v997 = vld [vmem:[#allocation4 + $0x38] sm:$0xff]
        %v998 = vld [vmem:[#allocation4 + $0x40] sm:$0xff]
        %v999 = vld [vmem:[#allocation4 + $0x48] sm:$0xff]
        %v1000 = vld [vmem:[#allocation4 + $0x50] sm:$0xff]
        %v1001 = vld [vmem:[#allocation4 + $0x58] sm:$0xff]
        %v1002 = vld [vmem:[#allocation4 + $0x60] sm:$0xff]
        %v1003 = vld [vmem:[#allocation4 + $0x68] sm:$0xff]
        %v1004 = vld [vmem:[#allocation4 + $0x70] sm:$0xff]
        %v1005 = vld [vmem:[#allocation4 + $0x78] sm:$0xff]
        %v1006 = vld [vmem:[#allocation4 + $0x80] sm:$0xff]
        %v1007 = vld [vmem:[#allocation4 + $0x88] sm:$0xff]
        %v1008 = vld [vmem:[#allocation4 + $0x90] sm:$0xff]
        %v1009 = vld [vmem:[#allocation4 + $0x98] sm:$0xff]
        %v1010 = vld [vmem:[#allocation4 + $0xa0] sm:$0xff]
        %v1011 = vld [vmem:[#allocation4 + $0xa8] sm:$0xff]
        %v1012 = vld [vmem:[#allocation4 + $0xb0] sm:$0xff]
        %v1013 = vld [vmem:[#allocation4 + $0xb8] sm:$0xff]
        %v1014 = vld [vmem:[#allocation4 + $0xc0] sm:$0xff]
        %v1015 = vld [vmem:[#allocation4 + $0xc8] sm:$0xff]
        %v1016 = vld [vmem:[#allocation4 + $0xd0] sm:$0xff]
        %v1017 = vld [vmem:[#allocation4 + $0xd8] sm:$0xff]
        %v1018 = vld [vmem:[#allocation4 + $0xe0] sm:$0xff]
        %v1019 = vld [vmem:[#allocation4 + $0xe8] sm:$0xff]
        %v1020 = vld [vmem:[#allocation4 + $0xf0] sm:$0xff]
        %v1021 = vld [vmem:[#allocation4 + $0xf8] sm:$0xff]
        %v1022 = vld [vmem:[#allocation4 + $0x100] sm:$0xff]
        %v1023 = vld [vmem:[#allocation4 + $0x108] sm:$0xff]
        %v1024 = vld [vmem:[#allocation4 + $0x110] sm:$0xff]
        %v1025 = vld [vmem:[#allocation4 + $0x118] sm:$0xff]
        %v1026 = vld [vmem:[#allocation4 + $0x120] sm:$0xff]
        %v1027 = vld [vmem:[#allocation4 + $0x128] sm:$0xff]
        %v1028 = vld [vmem:[#allocation4 + $0x130] sm:$0xff]
        %v1029 = vld [vmem:[#allocation4 + $0x138] sm:$0xff]
        %v1030 = vld [vmem:[#allocation4 + $0x140] sm:$0xff]
        %v1031 = vld [vmem:[#allocation4 + $0x148] sm:$0xff]
        %v1032 = vld [vmem:[#allocation4 + $0x150] sm:$0xff]
        %v1033 = vld [vmem:[#allocation4 + $0x158] sm:$0xff]
        %v1034 = vld [vmem:[#allocation4 + $0x160] sm:$0xff]
        %v1035 = vld [vmem:[#allocation4 + $0x168] sm:$0xff]
        %v1036 = vld [vmem:[#allocation4 + $0x170] sm:$0xff]
        %v1037 = vld [vmem:[#allocation4 + $0x178] sm:$0xff]
        %v1038 = vld [vmem:[#allocation4 + $0x180] sm:$0xff]
        %v1039 = vld [vmem:[#allocation4 + $0x188] sm:$0xff]
        %v1040 = vld [vmem:[#allocation4 + $0x190] sm:$0xff]
        %v1041 = vld [vmem:[#allocation4 + $0x198] sm:$0xff]
        %v1042 = vld [vmem:[#allocation4 + $0x1a0] sm:$0xff]
        %v1043 = vld [vmem:[#allocation4 + $0x1a8] sm:$0xff]
        %v1044 = vld [vmem:[#allocation4 + $0x1b0] sm:$0xff]
        %v1045 = vld [vmem:[#allocation4 + $0x1b8] sm:$0xff]
        %v1046 = vld [vmem:[#allocation4 + $0x1c0] sm:$0xff]
        %v1047 = vld [vmem:[#allocation4 + $0x1c8] sm:$0xff]
        %v1048 = vld [vmem:[#allocation4 + $0x1d0] sm:$0xff]
        %v1049 = vld [vmem:[#allocation4 + $0x1d8] sm:$0xff]
        %v1050 = vld [vmem:[#allocation4 + $0x1e0] sm:$0xff]
        %v1051 = vld [vmem:[#allocation4 + $0x1e8] sm:$0xff]
        %v1052 = vld [vmem:[#allocation4 + $0x1f0] sm:$0xff]
        %v1053 = vld [vmem:[#allocation4 + $0x1f8] sm:$0xff]
        %v1054 = vld [vmem:[#allocation5] sm:$0xff]
        %v1055 = vld [vmem:[#allocation5 + $0x8] sm:$0xff]
        %v1056 = vld [vmem:[#allocation5 + $0x10] sm:$0xff]
        %v1057 = vld [vmem:[#allocation5 + $0x18] sm:$0xff]
        %v1058 = vld [vmem:[#allocation5 + $0x20] sm:$0xff]
        %v1059 = vld [vmem:[#allocation5 + $0x28] sm:$0xff]
        %v1060 = vld [vmem:[#allocation5 + $0x30] sm:$0xff]
        %v1061 = vld [vmem:[#allocation5 + $0x38] sm:$0xff]
        %v1062 = vld [vmem:[#allocation5 + $0x40] sm:$0xff]
        %v1063 = vld [vmem:[#allocation5 + $0x48] sm:$0xff]
        %v1064 = vld [vmem:[#allocation5 + $0x50] sm:$0xff]
        %v1065 = vld [vmem:[#allocation5 + $0x58] sm:$0xff]
        %v1066 = vld [vmem:[#allocation5 + $0x60] sm:$0xff]
        %v1067 = vld [vmem:[#allocation5 + $0x68] sm:$0xff]
        %v1068 = vld [vmem:[#allocation5 + $0x70] sm:$0xff]
        %v1069 = vld [vmem:[#allocation5 + $0x78] sm:$0xff]
        %v1070 = vld [vmem:[#allocation5 + $0x80] sm:$0xff]
        %v1071 = vld [vmem:[#allocation5 + $0x88] sm:$0xff]
        %v1072 = vld [vmem:[#allocation5 + $0x90] sm:$0xff]
        %v1073 = vld [vmem:[#allocation5 + $0x98] sm:$0xff]
        %v1074 = vld [vmem:[#allocation5 + $0xa0] sm:$0xff]
        %v1075 = vld [vmem:[#allocation5 + $0xa8] sm:$0xff]
        %v1076 = vld [vmem:[#allocation5 + $0xb0] sm:$0xff]
        %v1077 = vld [vmem:[#allocation5 + $0xb8] sm:$0xff]
        %v1078 = vld [vmem:[#allocation5 + $0xc0] sm:$0xff]
        %v1079 = vld [vmem:[#allocation5 + $0xc8] sm:$0xff]
        %v1080 = vld [vmem:[#allocation5 + $0xd0] sm:$0xff]
        %v1081 = vld [vmem:[#allocation5 + $0xd8] sm:$0xff]
        %v1082 = vld [vmem:[#allocation5 + $0xe0] sm:$0xff]
        %v1083 = vld [vmem:[#allocation5 + $0xe8] sm:$0xff]
        %v1084 = vld [vmem:[#allocation5 + $0xf0] sm:$0xff]
        %v1085 = vld [vmem:[#allocation5 + $0xf8] sm:$0xff]
        %v1086 = vld [vmem:[#allocation5 + $0x100] sm:$0xff]
        %v1087 = vld [vmem:[#allocation5 + $0x108] sm:$0xff]
        %v1088 = vld [vmem:[#allocation5 + $0x110] sm:$0xff]
        %v1089 = vld [vmem:[#allocation5 + $0x118] sm:$0xff]
        %v1090 = vld [vmem:[#allocation5 + $0x120] sm:$0xff]
        %v1091 = vld [vmem:[#allocation5 + $0x128] sm:$0xff]
        %v1092 = vld [vmem:[#allocation5 + $0x130] sm:$0xff]
        %v1093 = vld [vmem:[#allocation5 + $0x138] sm:$0xff]
        %v1094 = vld [vmem:[#allocation5 + $0x140] sm:$0xff]
        %v1095 = vld [vmem:[#allocation5 + $0x148] sm:$0xff]
        %v1096 = vld [vmem:[#allocation5 + $0x150] sm:$0xff]
        %v1097 = vld [vmem:[#allocation5 + $0x158] sm:$0xff]
        %v1098 = vld [vmem:[#allocation5 + $0x160] sm:$0xff]
        %v1099 = vld [vmem:[#allocation5 + $0x168] sm:$0xff]
        %v1100 = vld [vmem:[#allocation5 + $0x170] sm:$0xff]
        %v1101 = vld [vmem:[#allocation5 + $0x178] sm:$0xff]
        %v1102 = vld [vmem:[#allocation5 + $0x180] sm:$0xff]
        %v1103 = vld [vmem:[#allocation5 + $0x188] sm:$0xff]
        %v1104 = vld [vmem:[#allocation5 + $0x190] sm:$0xff]
        %v1105 = vld [vmem:[#allocation5 + $0x198] sm:$0xff]
        %v1106 = vld [vmem:[#allocation5 + $0x1a0] sm:$0xff]
        %v1107 = vld [vmem:[#allocation5 + $0x1a8] sm:$0xff]
        %v1108 = vld [vmem:[#allocation5 + $0x1b0] sm:$0xff]
        %v1109 = vld [vmem:[#allocation5 + $0x1b8] sm:$0xff]
        %v1110 = vld [vmem:[#allocation5 + $0x1c0] sm:$0xff]
        %v1111 = vld [vmem:[#allocation5 + $0x1c8] sm:$0xff]
        %v1112 = vld [vmem:[#allocation5 + $0x1d0] sm:$0xff]
        %v1113 = vld [vmem:[#allocation5 + $0x1d8] sm:$0xff]
        %v1114 = vld [vmem:[#allocation5 + $0x1e0] sm:$0xff]
        %v1115 = vld [vmem:[#allocation5 + $0x1e8] sm:$0xff]
        %v1116 = vld [vmem:[#allocation5 + $0x1f0] sm:$0xff]
        %v1117 = vld [vmem:[#allocation5 + $0x1f8] sm:$0xff]
        %v1118 = vand.u32 %v990, %v1054
        %v1119 = vand.u32 %v991, %v1055
        %v1120 = vand.u32 %v992, %v1056
        %v1121 = vand.u32 %v993, %v1057
        %v1122 = vand.u32 %v994, %v1058
        %v1123 = vand.u32 %v995, %v1059
        %v1124 = vand.u32 %v996, %v1060
        %v1125 = vand.u32 %v997, %v1061
        %v1126 = vand.u32 %v998, %v1062
        %v1127 = vand.u32 %v999, %v1063
        %v1128 = vand.u32 %v1000, %v1064
        %v1129 = vand.u32 %v1001, %v1065
        %v1130 = vand.u32 %v1002, %v1066
        %v1131 = vand.u32 %v1003, %v1067
        %v1132 = vand.u32 %v1004, %v1068
        %v1133 = vand.u32 %v1005, %v1069
        %v1134 = vand.u32 %v1006, %v1070
        %v1135 = vand.u32 %v1007, %v1071
        %v1136 = vand.u32 %v1008, %v1072
        %v1137 = vand.u32 %v1009, %v1073
        %v1138 = vand.u32 %v1010, %v1074
        %v1139 = vand.u32 %v1011, %v1075
        %v1140 = vand.u32 %v1012, %v1076
        %v1141 = vand.u32 %v1013, %v1077
        %v1142 = vand.u32 %v1014, %v1078
        %v1143 = vand.u32 %v1015, %v1079
        %v1144 = vand.u32 %v1016, %v1080
        %v1145 = vand.u32 %v1017, %v1081
        %v1146 = vand.u32 %v1018, %v1082
        %v1147 = vand.u32 %v1019, %v1083
        %v1148 = vand.u32 %v1020, %v1084
        %v1149 = vand.u32 %v1021, %v1085
        %v1150 = vand.u32 %v1022, %v1086
        %v1151 = vand.u32 %v1023, %v1087
        %v1152 = vand.u32 %v1024, %v1088
        %v1153 = vand.u32 %v1025, %v1089
        %v1154 = vand.u32 %v1026, %v1090
        %v1155 = vand.u32 %v1027, %v1091
        %v1156 = vand.u32 %v1028, %v1092
        %v1157 = vand.u32 %v1029, %v1093
        %v1158 = vand.u32 %v1030, %v1094
        %v1159 = vand.u32 %v1031, %v1095
        %v1160 = vand.u32 %v1032, %v1096
        %v1161 = vand.u32 %v1033, %v1097
        %v1162 = vand.u32 %v1034, %v1098
        %v1163 = vand.u32 %v1035, %v1099
        %v1164 = vand.u32 %v1036, %v1100
        %v1165 = vand.u32 %v1037, %v1101
        %v1166 = vand.u32 %v1038, %v1102
        %v1167 = vand.u32 %v1039, %v1103
        %v1168 = vand.u32 %v1040, %v1104
        %v1169 = vand.u32 %v1041, %v1105
        %v1170 = vand.u32 %v1042, %v1106
        %v1171 = vand.u32 %v1043, %v1107
        %v1172 = vand.u32 %v1044, %v1108
        %v1173 = vand.u32 %v1045, %v1109
        %v1174 = vand.u32 %v1046, %v1110
        %v1175 = vand.u32 %v1047, %v1111
        %v1176 = vand.u32 %v1048, %v1112
        %v1177 = vand.u32 %v1049, %v1113
        %v1178 = vand.u32 %v1050, %v1114
        %v1179 = vand.u32 %v1051, %v1115
        %v1180 = vand.u32 %v1052, %v1116
        %v1181 = vand.u32 %v1053, %v1117
        %v1182 = vand.u32 %v1118, 255
        %v1183 = vand.u32 %v1119, 255
        %v1184 = vand.u32 %v1120, 255
        %v1185 = vand.u32 %v1121, 255
        %v1186 = vand.u32 %v1122, 255
        %v1187 = vand.u32 %v1123, 255
        %v1188 = vand.u32 %v1124, 255
        %v1189 = vand.u32 %v1125, 255
        %v1190 = vand.u32 %v1126, 255
        %v1191 = vand.u32 %v1127, 255
        %v1192 = vand.u32 %v1128, 255
        %v1193 = vand.u32 %v1129, 255
        %v1194 = vand.u32 %v1130, 255
        %v1195 = vand.u32 %v1131, 255
        %v1196 = vand.u32 %v1132, 255
        %v1197 = vand.u32 %v1133, 255
        %v1198 = vand.u32 %v1134, 255
        %v1199 = vand.u32 %v1135, 255
        %v1200 = vand.u32 %v1136, 255
        %v1201 = vand.u32 %v1137, 255
        %v1202 = vand.u32 %v1138, 255
        %v1203 = vand.u32 %v1139, 255
        %v1204 = vand.u32 %v1140, 255
        %v1205 = vand.u32 %v1141, 255
        %v1206 = vand.u32 %v1142, 255
        %v1207 = vand.u32 %v1143, 255
        %v1208 = vand.u32 %v1144, 255
        %v1209 = vand.u32 %v1145, 255
        %v1210 = vand.u32 %v1146, 255
        %v1211 = vand.u32 %v1147, 255
        %v1212 = vand.u32 %v1148, 255
        %v1213 = vand.u32 %v1149, 255
        %v1214 = vand.u32 %v1150, 255
        %v1215 = vand.u32 %v1151, 255
        %v1216 = vand.u32 %v1152, 255
        %v1217 = vand.u32 %v1153, 255
        %v1218 = vand.u32 %v1154, 255
        %v1219 = vand.u32 %v1155, 255
        %v1220 = vand.u32 %v1156, 255
        %v1221 = vand.u32 %v1157, 255
        %v1222 = vand.u32 %v1158, 255
        %v1223 = vand.u32 %v1159, 255
        %v1224 = vand.u32 %v1160, 255
        %v1225 = vand.u32 %v1161, 255
        %v1226 = vand.u32 %v1162, 255
        %v1227 = vand.u32 %v1163, 255
        %v1228 = vand.u32 %v1164, 255
        %v1229 = vand.u32 %v1165, 255
        %v1230 = vand.u32 %v1166, 255
        %v1231 = vand.u32 %v1167, 255
        %v1232 = vand.u32 %v1168, 255
        %v1233 = vand.u32 %v1169, 255
        %v1234 = vand.u32 %v1170, 255
        %v1235 = vand.u32 %v1171, 255
        %v1236 = vand.u32 %v1172, 255
        %v1237 = vand.u32 %v1173, 255
        %v1238 = vand.u32 %v1174, 255
        %v1239 = vand.u32 %v1175, 255
        %v1240 = vand.u32 %v1176, 255
        %v1241 = vand.u32 %v1177, 255
        %v1242 = vand.u32 %v1178, 255
        %v1243 = vand.u32 %v1179, 255
        %v1244 = vand.u32 %v1180, 255
        %v1245 = vand.u32 %v1181, 255
        %v1246 = vshra.s32 %v1118, 8
        %v1247 = vshra.s32 %v1119, 8
        %v1248 = vshra.s32 %v1120, 8
        %v1249 = vshra.s32 %v1121, 8
        %v1250 = vshra.s32 %v1122, 8
        %v1251 = vshra.s32 %v1123, 8
        %v1252 = vshra.s32 %v1124, 8
        %v1253 = vshra.s32 %v1125, 8
        %v1254 = vshra.s32 %v1126, 8
        %v1255 = vshra.s32 %v1127, 8
        %v1256 = vshra.s32 %v1128, 8
        %v1257 = vshra.s32 %v1129, 8
        %v1258 = vshra.s32 %v1130, 8
        %v1259 = vshra.s32 %v1131, 8
        %v1260 = vshra.s32 %v1132, 8
        %v1261 = vshra.s32 %v1133, 8
        %v1262 = vshra.s32 %v1134, 8
        %v1263 = vshra.s32 %v1135, 8
        %v1264 = vshra.s32 %v1136, 8
        %v1265 = vshra.s32 %v1137, 8
        %v1266 = vshra.s32 %v1138, 8
        %v1267 = vshra.s32 %v1139, 8
        %v1268 = vshra.s32 %v1140, 8
        %v1269 = vshra.s32 %v1141, 8
        %v1270 = vshra.s32 %v1142, 8
        %v1271 = vshra.s32 %v1143, 8
        %v1272 = vshra.s32 %v1144, 8
        %v1273 = vshra.s32 %v1145, 8
        %v1274 = vshra.s32 %v1146, 8
        %v1275 = vshra.s32 %v1147, 8
        %v1276 = vshra.s32 %v1148, 8
        %v1277 = vshra.s32 %v1149, 8
        %v1278 = vshra.s32 %v1150, 8
        %v1279 = vshra.s32 %v1151, 8
        %v1280 = vshra.s32 %v1152, 8
        %v1281 = vshra.s32 %v1153, 8
        %v1282 = vshra.s32 %v1154, 8
        %v1283 = vshra.s32 %v1155, 8
        %v1284 = vshra.s32 %v1156, 8
        %v1285 = vshra.s32 %v1157, 8
        %v1286 = vshra.s32 %v1158, 8
        %v1287 = vshra.s32 %v1159, 8
        %v1288 = vshra.s32 %v1160, 8
        %v1289 = vshra.s32 %v1161, 8
        %v1290 = vshra.s32 %v1162, 8
        %v1291 = vshra.s32 %v1163, 8
        %v1292 = vshra.s32 %v1164, 8
        %v1293 = vshra.s32 %v1165, 8
        %v1294 = vshra.s32 %v1166, 8
        %v1295 = vshra.s32 %v1167, 8
        %v1296 = vshra.s32 %v1168, 8
        %v1297 = vshra.s32 %v1169, 8
        %v1298 = vshra.s32 %v1170, 8
        %v1299 = vshra.s32 %v1171, 8
        %v1300 = vshra.s32 %v1172, 8
        %v1301 = vshra.s32 %v1173, 8
        %v1302 = vshra.s32 %v1174, 8
        %v1303 = vshra.s32 %v1175, 8
        %v1304 = vshra.s32 %v1176, 8
        %v1305 = vshra.s32 %v1177, 8
        %v1306 = vshra.s32 %v1178, 8
        %v1307 = vshra.s32 %v1179, 8
        %v1308 = vshra.s32 %v1180, 8
        %v1309 = vshra.s32 %v1181, 8
        %v1310 = vand.u32 %v1246, 255
        %v1311 = vand.u32 %v1247, 255
        %v1312 = vand.u32 %v1248, 255
        %v1313 = vand.u32 %v1249, 255
        %v1314 = vand.u32 %v1250, 255
        %v1315 = vand.u32 %v1251, 255
        %v1316 = vand.u32 %v1252, 255
        %v1317 = vand.u32 %v1253, 255
        %v1318 = vand.u32 %v1254, 255
        %v1319 = vand.u32 %v1255, 255
        %v1320 = vand.u32 %v1256, 255
        %v1321 = vand.u32 %v1257, 255
        %v1322 = vand.u32 %v1258, 255
        %v1323 = vand.u32 %v1259, 255
        %v1324 = vand.u32 %v1260, 255
        %v1325 = vand.u32 %v1261, 255
        %v1326 = vand.u32 %v1262, 255
        %v1327 = vand.u32 %v1263, 255
        %v1328 = vand.u32 %v1264, 255
        %v1329 = vand.u32 %v1265, 255
        %v1330 = vand.u32 %v1266, 255
        %v1331 = vand.u32 %v1267, 255
        %v1332 = vand.u32 %v1268, 255
        %v1333 = vand.u32 %v1269, 255
        %v1334 = vand.u32 %v1270, 255
        %v1335 = vand.u32 %v1271, 255
        %v1336 = vand.u32 %v1272, 255
        %v1337 = vand.u32 %v1273, 255
        %v1338 = vand.u32 %v1274, 255
        %v1339 = vand.u32 %v1275, 255
        %v1340 = vand.u32 %v1276, 255
        %v1341 = vand.u32 %v1277, 255
        %v1342 = vand.u32 %v1278, 255
        %v1343 = vand.u32 %v1279, 255
        %v1344 = vand.u32 %v1280, 255
        %v1345 = vand.u32 %v1281, 255
        %v1346 = vand.u32 %v1282, 255
        %v1347 = vand.u32 %v1283, 255
        %v1348 = vand.u32 %v1284, 255
        %v1349 = vand.u32 %v1285, 255
        %v1350 = vand.u32 %v1286, 255
        %v1351 = vand.u32 %v1287, 255
        %v1352 = vand.u32 %v1288, 255
        %v1353 = vand.u32 %v1289, 255
        %v1354 = vand.u32 %v1290, 255
        %v1355 = vand.u32 %v1291, 255
        %v1356 = vand.u32 %v1292, 255
        %v1357 = vand.u32 %v1293, 255
        %v1358 = vand.u32 %v1294, 255
        %v1359 = vand.u32 %v1295, 255
        %v1360 = vand.u32 %v1296, 255
        %v1361 = vand.u32 %v1297, 255
        %v1362 = vand.u32 %v1298, 255
        %v1363 = vand.u32 %v1299, 255
        %v1364 = vand.u32 %v1300, 255
        %v1365 = vand.u32 %v1301, 255
        %v1366 = vand.u32 %v1302, 255
        %v1367 = vand.u32 %v1303, 255
        %v1368 = vand.u32 %v1304, 255
        %v1369 = vand.u32 %v1305, 255
        %v1370 = vand.u32 %v1306, 255
        %v1371 = vand.u32 %v1307, 255
        %v1372 = vand.u32 %v1308, 255
        %v1373 = vand.u32 %v1309, 255
        %v1374 = vadd.s32 %v1182, %v1310
        %v1375 = vadd.s32 %v1183, %v1311
        %v1376 = vadd.s32 %v1184, %v1312
        %v1377 = vadd.s32 %v1185, %v1313
        %v1378 = vadd.s32 %v1186, %v1314
        %v1379 = vadd.s32 %v1187, %v1315
        %v1380 = vadd.s32 %v1188, %v1316
        %v1381 = vadd.s32 %v1189, %v1317
        %v1382 = vadd.s32 %v1190, %v1318
        %v1383 = vadd.s32 %v1191, %v1319
        %v1384 = vadd.s32 %v1192, %v1320
        %v1385 = vadd.s32 %v1193, %v1321
        %v1386 = vadd.s32 %v1194, %v1322
        %v1387 = vadd.s32 %v1195, %v1323
        %v1388 = vadd.s32 %v1196, %v1324
        %v1389 = vadd.s32 %v1197, %v1325
        %v1390 = vadd.s32 %v1198, %v1326
        %v1391 = vadd.s32 %v1199, %v1327
        %v1392 = vadd.s32 %v1200, %v1328
        %v1393 = vadd.s32 %v1201, %v1329
        %v1394 = vadd.s32 %v1202, %v1330
        %v1395 = vadd.s32 %v1203, %v1331
        %v1396 = vadd.s32 %v1204, %v1332
        %v1397 = vadd.s32 %v1205, %v1333
        %v1398 = vadd.s32 %v1206, %v1334
        %v1399 = vadd.s32 %v1207, %v1335
        %v1400 = vadd.s32 %v1208, %v1336
        %v1401 = vadd.s32 %v1209, %v1337
        %v1402 = vadd.s32 %v1210, %v1338
        %v1403 = vadd.s32 %v1211, %v1339
        %v1404 = vadd.s32 %v1212, %v1340
        %v1405 = vadd.s32 %v1213, %v1341
        %v1406 = vadd.s32 %v1214, %v1342
        %v1407 = vadd.s32 %v1215, %v1343
        %v1408 = vadd.s32 %v1216, %v1344
        %v1409 = vadd.s32 %v1217, %v1345
        %v1410 = vadd.s32 %v1218, %v1346
        %v1411 = vadd.s32 %v1219, %v1347
        %v1412 = vadd.s32 %v1220, %v1348
        %v1413 = vadd.s32 %v1221, %v1349
        %v1414 = vadd.s32 %v1222, %v1350
        %v1415 = vadd.s32 %v1223, %v1351
        %v1416 = vadd.s32 %v1224, %v1352
        %v1417 = vadd.s32 %v1225, %v1353
        %v1418 = vadd.s32 %v1226, %v1354
        %v1419 = vadd.s32 %v1227, %v1355
        %v1420 = vadd.s32 %v1228, %v1356
        %v1421 = vadd.s32 %v1229, %v1357
        %v1422 = vadd.s32 %v1230, %v1358
        %v1423 = vadd.s32 %v1231, %v1359
        %v1424 = vadd.s32 %v1232, %v1360
        %v1425 = vadd.s32 %v1233, %v1361
        %v1426 = vadd.s32 %v1234, %v1362
        %v1427 = vadd.s32 %v1235, %v1363
        %v1428 = vadd.s32 %v1236, %v1364
        %v1429 = vadd.s32 %v1237, %v1365
        %v1430 = vadd.s32 %v1238, %v1366
        %v1431 = vadd.s32 %v1239, %v1367
        %v1432 = vadd.s32 %v1240, %v1368
        %v1433 = vadd.s32 %v1241, %v1369
        %v1434 = vadd.s32 %v1242, %v1370
        %v1435 = vadd.s32 %v1243, %v1371
        %v1436 = vadd.s32 %v1244, %v1372
        %v1437 = vadd.s32 %v1245, %v1373
        %v1438 = vshra.s32 %v1118, 16
        %v1439 = vshra.s32 %v1119, 16
        %v1440 = vshra.s32 %v1120, 16
        %v1441 = vshra.s32 %v1121, 16
        %v1442 = vshra.s32 %v1122, 16
        %v1443 = vshra.s32 %v1123, 16
        %v1444 = vshra.s32 %v1124, 16
        %v1445 = vshra.s32 %v1125, 16
        %v1446 = vshra.s32 %v1126, 16
        %v1447 = vshra.s32 %v1127, 16
        %v1448 = vshra.s32 %v1128, 16
        %v1449 = vshra.s32 %v1129, 16
        %v1450 = vshra.s32 %v1130, 16
        %v1451 = vshra.s32 %v1131, 16
        %v1452 = vshra.s32 %v1132, 16
        %v1453 = vshra.s32 %v1133, 16
        %v1454 = vshra.s32 %v1134, 16
        %v1455 = vshra.s32 %v1135, 16
        %v1456 = vshra.s32 %v1136, 16
        %v1457 = vshra.s32 %v1137, 16
        %v1458 = vshra.s32 %v1138, 16
        %v1459 = vshra.s32 %v1139, 16
        %v1460 = vshra.s32 %v1140, 16
        %v1461 = vshra.s32 %v1141, 16
        %v1462 = vshra.s32 %v1142, 16
        %v1463 = vshra.s32 %v1143, 16
        %v1464 = vshra.s32 %v1144, 16
        %v1465 = vshra.s32 %v1145, 16
        %v1466 = vshra.s32 %v1146, 16
        %v1467 = vshra.s32 %v1147, 16
        %v1468 = vshra.s32 %v1148, 16
        %v1469 = vshra.s32 %v1149, 16
        %v1470 = vshra.s32 %v1150, 16
        %v1471 = vshra.s32 %v1151, 16
        %v1472 = vshra.s32 %v1152, 16
        %v1473 = vshra.s32 %v1153, 16
        %v1474 = vshra.s32 %v1154, 16
        %v1475 = vshra.s32 %v1155, 16
        %v1476 = vshra.s32 %v1156, 16
        %v1477 = vshra.s32 %v1157, 16
        %v1478 = vshra.s32 %v1158, 16
        %v1479 = vshra.s32 %v1159, 16
        %v1480 = vshra.s32 %v1160, 16
        %v1481 = vshra.s32 %v1161, 16
        %v1482 = vshra.s32 %v1162, 16
        %v1483 = vshra.s32 %v1163, 16
        %v1484 = vshra.s32 %v1164, 16
        %v1485 = vshra.s32 %v1165, 16
        %v1486 = vshra.s32 %v1166, 16
        %v1487 = vshra.s32 %v1167, 16
        %v1488 = vshra.s32 %v1168, 16
        %v1489 = vshra.s32 %v1169, 16
        %v1490 = vshra.s32 %v1170, 16
        %v1491 = vshra.s32 %v1171, 16
        %v1492 = vshra.s32 %v1172, 16
        %v1493 = vshra.s32 %v1173, 16
        %v1494 = vshra.s32 %v1174, 16
        %v1495 = vshra.s32 %v1175, 16
        %v1496 = vshra.s32 %v1176, 16
        %v1497 = vshra.s32 %v1177, 16
        %v1498 = vshra.s32 %v1178, 16
        %v1499 = vshra.s32 %v1179, 16
        %v1500 = vshra.s32 %v1180, 16
        %v1501 = vshra.s32 %v1181, 16
        %v1502 = vand.u32 %v1438, 255
        %v1503 = vand.u32 %v1439, 255
        %v1504 = vand.u32 %v1440, 255
        %v1505 = vand.u32 %v1441, 255
        %v1506 = vand.u32 %v1442, 255
        %v1507 = vand.u32 %v1443, 255
        %v1508 = vand.u32 %v1444, 255
        %v1509 = vand.u32 %v1445, 255
        %v1510 = vand.u32 %v1446, 255
        %v1511 = vand.u32 %v1447, 255
        %v1512 = vand.u32 %v1448, 255
        %v1513 = vand.u32 %v1449, 255
        %v1514 = vand.u32 %v1450, 255
        %v1515 = vand.u32 %v1451, 255
        %v1516 = vand.u32 %v1452, 255
        %v1517 = vand.u32 %v1453, 255
        %v1518 = vand.u32 %v1454, 255
        %v1519 = vand.u32 %v1455, 255
        %v1520 = vand.u32 %v1456, 255
        %v1521 = vand.u32 %v1457, 255
        %v1522 = vand.u32 %v1458, 255
        %v1523 = vand.u32 %v1459, 255
        %v1524 = vand.u32 %v1460, 255
        %v1525 = vand.u32 %v1461, 255
        %v1526 = vand.u32 %v1462, 255
        %v1527 = vand.u32 %v1463, 255
        %v1528 = vand.u32 %v1464, 255
        %v1529 = vand.u32 %v1465, 255
        %v1530 = vand.u32 %v1466, 255
        %v1531 = vand.u32 %v1467, 255
        %v1532 = vand.u32 %v1468, 255
        %v1533 = vand.u32 %v1469, 255
        %v1534 = vand.u32 %v1470, 255
        %v1535 = vand.u32 %v1471, 255
        %v1536 = vand.u32 %v1472, 255
        %v1537 = vand.u32 %v1473, 255
        %v1538 = vand.u32 %v1474, 255
        %v1539 = vand.u32 %v1475, 255
        %v1540 = vand.u32 %v1476, 255
        %v1541 = vand.u32 %v1477, 255
        %v1542 = vand.u32 %v1478, 255
        %v1543 = vand.u32 %v1479, 255
        %v1544 = vand.u32 %v1480, 255
        %v1545 = vand.u32 %v1481, 255
        %v1546 = vand.u32 %v1482, 255
        %v1547 = vand.u32 %v1483, 255
        %v1548 = vand.u32 %v1484, 255
        %v1549 = vand.u32 %v1485, 255
        %v1550 = vand.u32 %v1486, 255
        %v1551 = vand.u32 %v1487, 255
        %v1552 = vand.u32 %v1488, 255
        %v1553 = vand.u32 %v1489, 255
        %v1554 = vand.u32 %v1490, 255
        %v1555 = vand.u32 %v1491, 255
        %v1556 = vand.u32 %v1492, 255
        %v1557 = vand.u32 %v1493, 255
        %v1558 = vand.u32 %v1494, 255
        %v1559 = vand.u32 %v1495, 255
        %v1560 = vand.u32 %v1496, 255
        %v1561 = vand.u32 %v1497, 255
        %v1562 = vand.u32 %v1498, 255
        %v1563 = vand.u32 %v1499, 255
        %v1564 = vand.u32 %v1500, 255
        %v1565 = vand.u32 %v1501, 255
        %v1566 = vadd.s32 %v1374, %v1502
        %v1567 = vadd.s32 %v1375, %v1503
        %v1568 = vadd.s32 %v1376, %v1504
        %v1569 = vadd.s32 %v1377, %v1505
        %v1570 = vadd.s32 %v1378, %v1506
        %v1571 = vadd.s32 %v1379, %v1507
        %v1572 = vadd.s32 %v1380, %v1508
        %v1573 = vadd.s32 %v1381, %v1509
        %v1574 = vadd.s32 %v1382, %v1510
        %v1575 = vadd.s32 %v1383, %v1511
        %v1576 = vadd.s32 %v1384, %v1512
        %v1577 = vadd.s32 %v1385, %v1513
        %v1578 = vadd.s32 %v1386, %v1514
        %v1579 = vadd.s32 %v1387, %v1515
        %v1580 = vadd.s32 %v1388, %v1516
        %v1581 = vadd.s32 %v1389, %v1517
        %v1582 = vadd.s32 %v1390, %v1518
        %v1583 = vadd.s32 %v1391, %v1519
        %v1584 = vadd.s32 %v1392, %v1520
        %v1585 = vadd.s32 %v1393, %v1521
        %v1586 = vadd.s32 %v1394, %v1522
        %v1587 = vadd.s32 %v1395, %v1523
        %v1588 = vadd.s32 %v1396, %v1524
        %v1589 = vadd.s32 %v1397, %v1525
        %v1590 = vadd.s32 %v1398, %v1526
        %v1591 = vadd.s32 %v1399, %v1527
        %v1592 = vadd.s32 %v1400, %v1528
        %v1593 = vadd.s32 %v1401, %v1529
        %v1594 = vadd.s32 %v1402, %v1530
        %v1595 = vadd.s32 %v1403, %v1531
        %v1596 = vadd.s32 %v1404, %v1532
        %v1597 = vadd.s32 %v1405, %v1533
        %v1598 = vadd.s32 %v1406, %v1534
        %v1599 = vadd.s32 %v1407, %v1535
        %v1600 = vadd.s32 %v1408, %v1536
        %v1601 = vadd.s32 %v1409, %v1537
        %v1602 = vadd.s32 %v1410, %v1538
        %v1603 = vadd.s32 %v1411, %v1539
        %v1604 = vadd.s32 %v1412, %v1540
        %v1605 = vadd.s32 %v1413, %v1541
        %v1606 = vadd.s32 %v1414, %v1542
        %v1607 = vadd.s32 %v1415, %v1543
        %v1608 = vadd.s32 %v1416, %v1544
        %v1609 = vadd.s32 %v1417, %v1545
        %v1610 = vadd.s32 %v1418, %v1546
        %v1611 = vadd.s32 %v1419, %v1547
        %v1612 = vadd.s32 %v1420, %v1548
        %v1613 = vadd.s32 %v1421, %v1549
        %v1614 = vadd.s32 %v1422, %v1550
        %v1615 = vadd.s32 %v1423, %v1551
        %v1616 = vadd.s32 %v1424, %v1552
        %v1617 = vadd.s32 %v1425, %v1553
        %v1618 = vadd.s32 %v1426, %v1554
        %v1619 = vadd.s32 %v1427, %v1555
        %v1620 = vadd.s32 %v1428, %v1556
        %v1621 = vadd.s32 %v1429, %v1557
        %v1622 = vadd.s32 %v1430, %v1558
        %v1623 = vadd.s32 %v1431, %v1559
        %v1624 = vadd.s32 %v1432, %v1560
        %v1625 = vadd.s32 %v1433, %v1561
        %v1626 = vadd.s32 %v1434, %v1562
        %v1627 = vadd.s32 %v1435, %v1563
        %v1628 = vadd.s32 %v1436, %v1564
        %v1629 = vadd.s32 %v1437, %v1565
        %v1630 = vshra.s32 %v1118, 24
        %v1631 = vshra.s32 %v1119, 24
        %v1632 = vshra.s32 %v1120, 24
        %v1633 = vshra.s32 %v1121, 24
        %v1634 = vshra.s32 %v1122, 24
        %v1635 = vshra.s32 %v1123, 24
        %v1636 = vshra.s32 %v1124, 24
        %v1637 = vshra.s32 %v1125, 24
        %v1638 = vshra.s32 %v1126, 24
        %v1639 = vshra.s32 %v1127, 24
        %v1640 = vshra.s32 %v1128, 24
        %v1641 = vshra.s32 %v1129, 24
        %v1642 = vshra.s32 %v1130, 24
        %v1643 = vshra.s32 %v1131, 24
        %v1644 = vshra.s32 %v1132, 24
        %v1645 = vshra.s32 %v1133, 24
        %v1646 = vshra.s32 %v1134, 24
        %v1647 = vshra.s32 %v1135, 24
        %v1648 = vshra.s32 %v1136, 24
        %v1649 = vshra.s32 %v1137, 24
        %v1650 = vshra.s32 %v1138, 24
        %v1651 = vshra.s32 %v1139, 24
        %v1652 = vshra.s32 %v1140, 24
        %v1653 = vshra.s32 %v1141, 24
        %v1654 = vshra.s32 %v1142, 24
        %v1655 = vshra.s32 %v1143, 24
        %v1656 = vshra.s32 %v1144, 24
        %v1657 = vshra.s32 %v1145, 24
        %v1658 = vshra.s32 %v1146, 24
        %v1659 = vshra.s32 %v1147, 24
        %v1660 = vshra.s32 %v1148, 24
        %v1661 = vshra.s32 %v1149, 24
        %v1662 = vshra.s32 %v1150, 24
        %v1663 = vshra.s32 %v1151, 24
        %v1664 = vshra.s32 %v1152, 24
        %v1665 = vshra.s32 %v1153, 24
        %v1666 = vshra.s32 %v1154, 24
        %v1667 = vshra.s32 %v1155, 24
        %v1668 = vshra.s32 %v1156, 24
        %v1669 = vshra.s32 %v1157, 24
        %v1670 = vshra.s32 %v1158, 24
        %v1671 = vshra.s32 %v1159, 24
        %v1672 = vshra.s32 %v1160, 24
        %v1673 = vshra.s32 %v1161, 24
        %v1674 = vshra.s32 %v1162, 24
        %v1675 = vshra.s32 %v1163, 24
        %v1676 = vshra.s32 %v1164, 24
        %v1677 = vshra.s32 %v1165, 24
        %v1678 = vshra.s32 %v1166, 24
        %v1679 = vshra.s32 %v1167, 24
        %v1680 = vshra.s32 %v1168, 24
        %v1681 = vshra.s32 %v1169, 24
        %v1682 = vshra.s32 %v1170, 24
        %v1683 = vshra.s32 %v1171, 24
        %v1684 = vshra.s32 %v1172, 24
        %v1685 = vshra.s32 %v1173, 24
        %v1686 = vshra.s32 %v1174, 24
        %v1687 = vshra.s32 %v1175, 24
        %v1688 = vshra.s32 %v1176, 24
        %v1689 = vshra.s32 %v1177, 24
        %v1690 = vshra.s32 %v1178, 24
        %v1691 = vshra.s32 %v1179, 24
        %v1692 = vshra.s32 %v1180, 24
        %v1693 = vshra.s32 %v1181, 24
        %v1694 = vadd.s32 %v1566, %v1630
        %v1695 = vadd.s32 %v1567, %v1631
        %v1696 = vadd.s32 %v1568, %v1632
        %v1697 = vadd.s32 %v1569, %v1633
        %v1698 = vadd.s32 %v1570, %v1634
        %v1699 = vadd.s32 %v1571, %v1635
        %v1700 = vadd.s32 %v1572, %v1636
        %v1701 = vadd.s32 %v1573, %v1637
        %v1702 = vadd.s32 %v1574, %v1638
        %v1703 = vadd.s32 %v1575, %v1639
        %v1704 = vadd.s32 %v1576, %v1640
        %v1705 = vadd.s32 %v1577, %v1641
        %v1706 = vadd.s32 %v1578, %v1642
        %v1707 = vadd.s32 %v1579, %v1643
        %v1708 = vadd.s32 %v1580, %v1644
        %v1709 = vadd.s32 %v1581, %v1645
        %v1710 = vadd.s32 %v1582, %v1646
        %v1711 = vadd.s32 %v1583, %v1647
        %v1712 = vadd.s32 %v1584, %v1648
        %v1713 = vadd.s32 %v1585, %v1649
        %v1714 = vadd.s32 %v1586, %v1650
        %v1715 = vadd.s32 %v1587, %v1651
        %v1716 = vadd.s32 %v1588, %v1652
        %v1717 = vadd.s32 %v1589, %v1653
        %v1718 = vadd.s32 %v1590, %v1654
        %v1719 = vadd.s32 %v1591, %v1655
        %v1720 = vadd.s32 %v1592, %v1656
        %v1721 = vadd.s32 %v1593, %v1657
        %v1722 = vadd.s32 %v1594, %v1658
        %v1723 = vadd.s32 %v1595, %v1659
        %v1724 = vadd.s32 %v1596, %v1660
        %v1725 = vadd.s32 %v1597, %v1661
        %v1726 = vadd.s32 %v1598, %v1662
        %v1727 = vadd.s32 %v1599, %v1663
        %v1728 = vadd.s32 %v1600, %v1664
        %v1729 = vadd.s32 %v1601, %v1665
        %v1730 = vadd.s32 %v1602, %v1666
        %v1731 = vadd.s32 %v1603, %v1667
        %v1732 = vadd.s32 %v1604, %v1668
        %v1733 = vadd.s32 %v1605, %v1669
        %v1734 = vadd.s32 %v1606, %v1670
        %v1735 = vadd.s32 %v1607, %v1671
        %v1736 = vadd.s32 %v1608, %v1672
        %v1737 = vadd.s32 %v1609, %v1673
        %v1738 = vadd.s32 %v1610, %v1674
        %v1739 = vadd.s32 %v1611, %v1675
        %v1740 = vadd.s32 %v1612, %v1676
        %v1741 = vadd.s32 %v1613, %v1677
        %v1742 = vadd.s32 %v1614, %v1678
        %v1743 = vadd.s32 %v1615, %v1679
        %v1744 = vadd.s32 %v1616, %v1680
        %v1745 = vadd.s32 %v1617, %v1681
        %v1746 = vadd.s32 %v1618, %v1682
        %v1747 = vadd.s32 %v1619, %v1683
        %v1748 = vadd.s32 %v1620, %v1684
        %v1749 = vadd.s32 %v1621, %v1685
        %v1750 = vadd.s32 %v1622, %v1686
        %v1751 = vadd.s32 %v1623, %v1687
        %v1752 = vadd.s32 %v1624, %v1688
        %v1753 = vadd.s32 %v1625, %v1689
        %v1754 = vadd.s32 %v1626, %v1690
        %v1755 = vadd.s32 %v1627, %v1691
        %v1756 = vadd.s32 %v1628, %v1692
        %v1757 = vadd.s32 %v1629, %v1693
        %v1758 = vadd.s32 %v1694, %v1695
        %v1759 = vand.u32 %v1758, 65535
        %v1760 = vshrl.u32 %v1758, 16
        %v1761 = vcvt.s32.f32 %v1759
        %v1762 = vcvt.s32.f32 %v1760
        %1763 = vadd.xlane.f32.xlu0 %v1761
        %v1764 = vpop.xlane.xlu0 %1763
        %1765 = vadd.xlane.f32.xlu0 %v1762
        %v1766 = vpop.xlane.xlu0 %1765
        %v1767 = vcvt.f32.s32 %v1764
        %v1768 = vcvt.f32.s32 %v1766
        %v1769 = vshll.u32 %v1768, 16
        %v1770 = vadd.s32 %v1769, %v1767
        %v1771 = vadd.s32 %v1696, %v1697
        %v1772 = vand.u32 %v1771, 65535
        %v1773 = vshrl.u32 %v1771, 16
        %v1774 = vcvt.s32.f32 %v1772
        %v1775 = vcvt.s32.f32 %v1773
        %1776 = vadd.xlane.f32.xlu0 %v1774
        %v1777 = vpop.xlane.xlu0 %1776
        %1778 = vadd.xlane.f32.xlu0 %v1775
        %v1779 = vpop.xlane.xlu0 %1778
        %v1780 = vcvt.f32.s32 %v1777
        %v1781 = vcvt.f32.s32 %v1779
        %v1782 = vshll.u32 %v1781, 16
        %v1783 = vadd.s32 %v1782, %v1780
        %v1784 = vadd.s32 %v1698, %v1699
        %v1785 = vand.u32 %v1784, 65535
        %v1786 = vshrl.u32 %v1784, 16
        %v1787 = vcvt.s32.f32 %v1785
        %v1788 = vcvt.s32.f32 %v1786
        %1789 = vadd.xlane.f32.xlu0 %v1787
        %v1790 = vpop.xlane.xlu0 %1789
        %1791 = vadd.xlane.f32.xlu0 %v1788
        %v1792 = vpop.xlane.xlu0 %1791
        %v1793 = vcvt.f32.s32 %v1790
        %v1794 = vcvt.f32.s32 %v1792
        %v1795 = vshll.u32 %v1794, 16
        %v1796 = vadd.s32 %v1795, %v1793
        %v1797 = vadd.s32 %v1700, %v1701
        %v1798 = vand.u32 %v1797, 65535
        %v1799 = vshrl.u32 %v1797, 16
        %v1800 = vcvt.s32.f32 %v1798
        %v1801 = vcvt.s32.f32 %v1799
        %1802 = vadd.xlane.f32.xlu0 %v1800
        %v1803 = vpop.xlane.xlu0 %1802
        %1804 = vadd.xlane.f32.xlu0 %v1801
        %v1805 = vpop.xlane.xlu0 %1804
        %v1806 = vcvt.f32.s32 %v1803
        %v1807 = vcvt.f32.s32 %v1805
        %v1808 = vshll.u32 %v1807, 16
        %v1809 = vadd.s32 %v1808, %v1806
        %v1810 = vadd.s32 %v1702, %v1703
        %v1811 = vand.u32 %v1810, 65535
        %v1812 = vshrl.u32 %v1810, 16
        %v1813 = vcvt.s32.f32 %v1811
        %v1814 = vcvt.s32.f32 %v1812
        %1815 = vadd.xlane.f32.xlu0 %v1813
        %v1816 = vpop.xlane.xlu0 %1815
        %1817 = vadd.xlane.f32.xlu0 %v1814
        %v1818 = vpop.xlane.xlu0 %1817
        %v1819 = vcvt.f32.s32 %v1816
        %v1820 = vcvt.f32.s32 %v1818
        %v1821 = vshll.u32 %v1820, 16
        %v1822 = vadd.s32 %v1821, %v1819
        %v1823 = vadd.s32 %v1704, %v1705
        %v1824 = vand.u32 %v1823, 65535
        %v1825 = vshrl.u32 %v1823, 16
        %v1826 = vcvt.s32.f32 %v1824
        %v1827 = vcvt.s32.f32 %v1825
        %1828 = vadd.xlane.f32.xlu0 %v1826
        %v1829 = vpop.xlane.xlu0 %1828
        %1830 = vadd.xlane.f32.xlu0 %v1827
        %v1831 = vpop.xlane.xlu0 %1830
        %v1832 = vcvt.f32.s32 %v1829
        %v1833 = vcvt.f32.s32 %v1831
        %v1834 = vshll.u32 %v1833, 16
        %v1835 = vadd.s32 %v1834, %v1832
        %v1836 = vadd.s32 %v1706, %v1707
        %v1837 = vand.u32 %v1836, 65535
        %v1838 = vshrl.u32 %v1836, 16
        %v1839 = vcvt.s32.f32 %v1837
        %v1840 = vcvt.s32.f32 %v1838
        %1841 = vadd.xlane.f32.xlu0 %v1839
        %v1842 = vpop.xlane.xlu0 %1841
        %1843 = vadd.xlane.f32.xlu0 %v1840
        %v1844 = vpop.xlane.xlu0 %1843
        %v1845 = vcvt.f32.s32 %v1842
        %v1846 = vcvt.f32.s32 %v1844
        %v1847 = vshll.u32 %v1846, 16
        %v1848 = vadd.s32 %v1847, %v1845
        %v1849 = vadd.s32 %v1708, %v1709
        %v1850 = vand.u32 %v1849, 65535
        %v1851 = vshrl.u32 %v1849, 16
        %v1852 = vcvt.s32.f32 %v1850
        %v1853 = vcvt.s32.f32 %v1851
        %1854 = vadd.xlane.f32.xlu0 %v1852
        %v1855 = vpop.xlane.xlu0 %1854
        %1856 = vadd.xlane.f32.xlu0 %v1853
        %v1857 = vpop.xlane.xlu0 %1856
        %v1858 = vcvt.f32.s32 %v1855
        %v1859 = vcvt.f32.s32 %v1857
        %v1860 = vshll.u32 %v1859, 16
        %v1861 = vadd.s32 %v1860, %v1858
        %v1862 = vadd.s32 %v1710, %v1711
        %v1863 = vand.u32 %v1862, 65535
        %v1864 = vshrl.u32 %v1862, 16
        %v1865 = vcvt.s32.f32 %v1863
        %v1866 = vcvt.s32.f32 %v1864
        %1867 = vadd.xlane.f32.xlu0 %v1865
        %v1868 = vpop.xlane.xlu0 %1867
        %1869 = vadd.xlane.f32.xlu0 %v1866
        %v1870 = vpop.xlane.xlu0 %1869
        %v1871 = vcvt.f32.s32 %v1868
        %v1872 = vcvt.f32.s32 %v1870
        %v1873 = vshll.u32 %v1872, 16
        %v1874 = vadd.s32 %v1873, %v1871
        %v1875 = vadd.s32 %v1712, %v1713
        %v1876 = vand.u32 %v1875, 65535
        %v1877 = vshrl.u32 %v1875, 16
        %v1878 = vcvt.s32.f32 %v1876
        %v1879 = vcvt.s32.f32 %v1877
        %1880 = vadd.xlane.f32.xlu0 %v1878
        %v1881 = vpop.xlane.xlu0 %1880
        %1882 = vadd.xlane.f32.xlu0 %v1879
        %v1883 = vpop.xlane.xlu0 %1882
        %v1884 = vcvt.f32.s32 %v1881
        %v1885 = vcvt.f32.s32 %v1883
        %v1886 = vshll.u32 %v1885, 16
        %v1887 = vadd.s32 %v1886, %v1884
        %v1888 = vadd.s32 %v1714, %v1715
        %v1889 = vand.u32 %v1888, 65535
        %v1890 = vshrl.u32 %v1888, 16
        %v1891 = vcvt.s32.f32 %v1889
        %v1892 = vcvt.s32.f32 %v1890
        %1893 = vadd.xlane.f32.xlu0 %v1891
        %v1894 = vpop.xlane.xlu0 %1893
        %1895 = vadd.xlane.f32.xlu0 %v1892
        %v1896 = vpop.xlane.xlu0 %1895
        %v1897 = vcvt.f32.s32 %v1894
        %v1898 = vcvt.f32.s32 %v1896
        %v1899 = vshll.u32 %v1898, 16
        %v1900 = vadd.s32 %v1899, %v1897
        %v1901 = vadd.s32 %v1716, %v1717
        %v1902 = vand.u32 %v1901, 65535
        %v1903 = vshrl.u32 %v1901, 16
        %v1904 = vcvt.s32.f32 %v1902
        %v1905 = vcvt.s32.f32 %v1903
        %1906 = vadd.xlane.f32.xlu0 %v1904
        %v1907 = vpop.xlane.xlu0 %1906
        %1908 = vadd.xlane.f32.xlu0 %v1905
        %v1909 = vpop.xlane.xlu0 %1908
        %v1910 = vcvt.f32.s32 %v1907
        %v1911 = vcvt.f32.s32 %v1909
        %v1912 = vshll.u32 %v1911, 16
        %v1913 = vadd.s32 %v1912, %v1910
        %v1914 = vadd.s32 %v1718, %v1719
        %v1915 = vand.u32 %v1914, 65535
        %v1916 = vshrl.u32 %v1914, 16
        %v1917 = vcvt.s32.f32 %v1915
        %v1918 = vcvt.s32.f32 %v1916
        %1919 = vadd.xlane.f32.xlu0 %v1917
        %v1920 = vpop.xlane.xlu0 %1919
        %1921 = vadd.xlane.f32.xlu0 %v1918
        %v1922 = vpop.xlane.xlu0 %1921
        %v1923 = vcvt.f32.s32 %v1920
        %v1924 = vcvt.f32.s32 %v1922
        %v1925 = vshll.u32 %v1924, 16
        %v1926 = vadd.s32 %v1925, %v1923
        %v1927 = vadd.s32 %v1720, %v1721
        %v1928 = vand.u32 %v1927, 65535
        %v1929 = vshrl.u32 %v1927, 16
        %v1930 = vcvt.s32.f32 %v1928
        %v1931 = vcvt.s32.f32 %v1929
        %1932 = vadd.xlane.f32.xlu0 %v1930
        %v1933 = vpop.xlane.xlu0 %1932
        %1934 = vadd.xlane.f32.xlu0 %v1931
        %v1935 = vpop.xlane.xlu0 %1934
        %v1936 = vcvt.f32.s32 %v1933
        %v1937 = vcvt.f32.s32 %v1935
        %v1938 = vshll.u32 %v1937, 16
        %v1939 = vadd.s32 %v1938, %v1936
        %v1940 = vadd.s32 %v1722, %v1723
        %v1941 = vand.u32 %v1940, 65535
        %v1942 = vshrl.u32 %v1940, 16
        %v1943 = vcvt.s32.f32 %v1941
        %v1944 = vcvt.s32.f32 %v1942
        %1945 = vadd.xlane.f32.xlu0 %v1943
        %v1946 = vpop.xlane.xlu0 %1945
        %1947 = vadd.xlane.f32.xlu0 %v1944
        %v1948 = vpop.xlane.xlu0 %1947
        %v1949 = vcvt.f32.s32 %v1946
        %v1950 = vcvt.f32.s32 %v1948
        %v1951 = vshll.u32 %v1950, 16
        %v1952 = vadd.s32 %v1951, %v1949
        %v1953 = vadd.s32 %v1724, %v1725
        %v1954 = vand.u32 %v1953, 65535
        %v1955 = vshrl.u32 %v1953, 16
        %v1956 = vcvt.s32.f32 %v1954
        %v1957 = vcvt.s32.f32 %v1955
        %1958 = vadd.xlane.f32.xlu0 %v1956
        %v1959 = vpop.xlane.xlu0 %1958
        %1960 = vadd.xlane.f32.xlu0 %v1957
        %v1961 = vpop.xlane.xlu0 %1960
        %v1962 = vcvt.f32.s32 %v1959
        %v1963 = vcvt.f32.s32 %v1961
        %v1964 = vshll.u32 %v1963, 16
        %v1965 = vadd.s32 %v1964, %v1962
        %v1966 = vadd.s32 %v1726, %v1727
        %v1967 = vand.u32 %v1966, 65535
        %v1968 = vshrl.u32 %v1966, 16
        %v1969 = vcvt.s32.f32 %v1967
        %v1970 = vcvt.s32.f32 %v1968
        %1971 = vadd.xlane.f32.xlu0 %v1969
        %v1972 = vpop.xlane.xlu0 %1971
        %1973 = vadd.xlane.f32.xlu0 %v1970
        %v1974 = vpop.xlane.xlu0 %1973
        %v1975 = vcvt.f32.s32 %v1972
        %v1976 = vcvt.f32.s32 %v1974
        %v1977 = vshll.u32 %v1976, 16
        %v1978 = vadd.s32 %v1977, %v1975
        %v1979 = vadd.s32 %v1728, %v1729
        %v1980 = vand.u32 %v1979, 65535
        %v1981 = vshrl.u32 %v1979, 16
        %v1982 = vcvt.s32.f32 %v1980
        %v1983 = vcvt.s32.f32 %v1981
        %1984 = vadd.xlane.f32.xlu0 %v1982
        %v1985 = vpop.xlane.xlu0 %1984
        %1986 = vadd.xlane.f32.xlu0 %v1983
        %v1987 = vpop.xlane.xlu0 %1986
        %v1988 = vcvt.f32.s32 %v1985
        %v1989 = vcvt.f32.s32 %v1987
        %v1990 = vshll.u32 %v1989, 16
        %v1991 = vadd.s32 %v1990, %v1988
        %v1992 = vadd.s32 %v1730, %v1731
        %v1993 = vand.u32 %v1992, 65535
        %v1994 = vshrl.u32 %v1992, 16
        %v1995 = vcvt.s32.f32 %v1993
        %v1996 = vcvt.s32.f32 %v1994
        %1997 = vadd.xlane.f32.xlu0 %v1995
        %v1998 = vpop.xlane.xlu0 %1997
        %1999 = vadd.xlane.f32.xlu0 %v1996
        %v2000 = vpop.xlane.xlu0 %1999
        %v2001 = vcvt.f32.s32 %v1998
        %v2002 = vcvt.f32.s32 %v2000
        %v2003 = vshll.u32 %v2002, 16
        %v2004 = vadd.s32 %v2003, %v2001
        %v2005 = vadd.s32 %v1732, %v1733
        %v2006 = vand.u32 %v2005, 65535
        %v2007 = vshrl.u32 %v2005, 16
        %v2008 = vcvt.s32.f32 %v2006
        %v2009 = vcvt.s32.f32 %v2007
        %2010 = vadd.xlane.f32.xlu0 %v2008
        %v2011 = vpop.xlane.xlu0 %2010
        %2012 = vadd.xlane.f32.xlu0 %v2009
        %v2013 = vpop.xlane.xlu0 %2012
        %v2014 = vcvt.f32.s32 %v2011
        %v2015 = vcvt.f32.s32 %v2013
        %v2016 = vshll.u32 %v2015, 16
        %v2017 = vadd.s32 %v2016, %v2014
        %v2018 = vadd.s32 %v1734, %v1735
        %v2019 = vand.u32 %v2018, 65535
        %v2020 = vshrl.u32 %v2018, 16
        %v2021 = vcvt.s32.f32 %v2019
        %v2022 = vcvt.s32.f32 %v2020
        %2023 = vadd.xlane.f32.xlu0 %v2021
        %v2024 = vpop.xlane.xlu0 %2023
        %2025 = vadd.xlane.f32.xlu0 %v2022
        %v2026 = vpop.xlane.xlu0 %2025
        %v2027 = vcvt.f32.s32 %v2024
        %v2028 = vcvt.f32.s32 %v2026
        %v2029 = vshll.u32 %v2028, 16
        %v2030 = vadd.s32 %v2029, %v2027
        %v2031 = vadd.s32 %v1736, %v1737
        %v2032 = vand.u32 %v2031, 65535
        %v2033 = vshrl.u32 %v2031, 16
        %v2034 = vcvt.s32.f32 %v2032
        %v2035 = vcvt.s32.f32 %v2033
        %2036 = vadd.xlane.f32.xlu0 %v2034
        %v2037 = vpop.xlane.xlu0 %2036
        %2038 = vadd.xlane.f32.xlu0 %v2035
        %v2039 = vpop.xlane.xlu0 %2038
        %v2040 = vcvt.f32.s32 %v2037
        %v2041 = vcvt.f32.s32 %v2039
        %v2042 = vshll.u32 %v2041, 16
        %v2043 = vadd.s32 %v2042, %v2040
        %v2044 = vadd.s32 %v1738, %v1739
        %v2045 = vand.u32 %v2044, 65535
        %v2046 = vshrl.u32 %v2044, 16
        %v2047 = vcvt.s32.f32 %v2045
        %v2048 = vcvt.s32.f32 %v2046
        %2049 = vadd.xlane.f32.xlu0 %v2047
        %v2050 = vpop.xlane.xlu0 %2049
        %2051 = vadd.xlane.f32.xlu0 %v2048
        %v2052 = vpop.xlane.xlu0 %2051
        %v2053 = vcvt.f32.s32 %v2050
        %v2054 = vcvt.f32.s32 %v2052
        %v2055 = vshll.u32 %v2054, 16
        %v2056 = vadd.s32 %v2055, %v2053
        %v2057 = vadd.s32 %v1740, %v1741
        %v2058 = vand.u32 %v2057, 65535
        %v2059 = vshrl.u32 %v2057, 16
        %v2060 = vcvt.s32.f32 %v2058
        %v2061 = vcvt.s32.f32 %v2059
        %2062 = vadd.xlane.f32.xlu0 %v2060
        %v2063 = vpop.xlane.xlu0 %2062
        %2064 = vadd.xlane.f32.xlu0 %v2061
        %v2065 = vpop.xlane.xlu0 %2064
        %v2066 = vcvt.f32.s32 %v2063
        %v2067 = vcvt.f32.s32 %v2065
        %v2068 = vshll.u32 %v2067, 16
        %v2069 = vadd.s32 %v2068, %v2066
        %v2070 = vadd.s32 %v1742, %v1743
        %v2071 = vand.u32 %v2070, 65535
        %v2072 = vshrl.u32 %v2070, 16
        %v2073 = vcvt.s32.f32 %v2071
        %v2074 = vcvt.s32.f32 %v2072
        %2075 = vadd.xlane.f32.xlu0 %v2073
        %v2076 = vpop.xlane.xlu0 %2075
        %2077 = vadd.xlane.f32.xlu0 %v2074
        %v2078 = vpop.xlane.xlu0 %2077
        %v2079 = vcvt.f32.s32 %v2076
        %v2080 = vcvt.f32.s32 %v2078
        %v2081 = vshll.u32 %v2080, 16
        %v2082 = vadd.s32 %v2081, %v2079
        %v2083 = vadd.s32 %v1744, %v1745
        %v2084 = vand.u32 %v2083, 65535
        %v2085 = vshrl.u32 %v2083, 16
        %v2086 = vcvt.s32.f32 %v2084
        %v2087 = vcvt.s32.f32 %v2085
        %2088 = vadd.xlane.f32.xlu0 %v2086
        %v2089 = vpop.xlane.xlu0 %2088
        %2090 = vadd.xlane.f32.xlu0 %v2087
        %v2091 = vpop.xlane.xlu0 %2090
        %v2092 = vcvt.f32.s32 %v2089
        %v2093 = vcvt.f32.s32 %v2091
        %v2094 = vshll.u32 %v2093, 16
        %v2095 = vadd.s32 %v2094, %v2092
        %v2096 = vadd.s32 %v1746, %v1747
        %v2097 = vand.u32 %v2096, 65535
        %v2098 = vshrl.u32 %v2096, 16
        %v2099 = vcvt.s32.f32 %v2097
        %v2100 = vcvt.s32.f32 %v2098
        %2101 = vadd.xlane.f32.xlu0 %v2099
        %v2102 = vpop.xlane.xlu0 %2101
        %2103 = vadd.xlane.f32.xlu0 %v2100
        %v2104 = vpop.xlane.xlu0 %2103
        %v2105 = vcvt.f32.s32 %v2102
        %v2106 = vcvt.f32.s32 %v2104
        %v2107 = vshll.u32 %v2106, 16
        %v2108 = vadd.s32 %v2107, %v2105
        %v2109 = vadd.s32 %v1748, %v1749
        %v2110 = vand.u32 %v2109, 65535
        %v2111 = vshrl.u32 %v2109, 16
        %v2112 = vcvt.s32.f32 %v2110
        %v2113 = vcvt.s32.f32 %v2111
        %2114 = vadd.xlane.f32.xlu0 %v2112
        %v2115 = vpop.xlane.xlu0 %2114
        %2116 = vadd.xlane.f32.xlu0 %v2113
        %v2117 = vpop.xlane.xlu0 %2116
        %v2118 = vcvt.f32.s32 %v2115
        %v2119 = vcvt.f32.s32 %v2117
        %v2120 = vshll.u32 %v2119, 16
        %v2121 = vadd.s32 %v2120, %v2118
        %v2122 = vadd.s32 %v1750, %v1751
        %v2123 = vand.u32 %v2122, 65535
        %v2124 = vshrl.u32 %v2122, 16
        %v2125 = vcvt.s32.f32 %v2123
        %v2126 = vcvt.s32.f32 %v2124
        %2127 = vadd.xlane.f32.xlu0 %v2125
        %v2128 = vpop.xlane.xlu0 %2127
        %2129 = vadd.xlane.f32.xlu0 %v2126
        %v2130 = vpop.xlane.xlu0 %2129
        %v2131 = vcvt.f32.s32 %v2128
        %v2132 = vcvt.f32.s32 %v2130
        %v2133 = vshll.u32 %v2132, 16
        %v2134 = vadd.s32 %v2133, %v2131
        %v2135 = vadd.s32 %v1752, %v1753
        %v2136 = vand.u32 %v2135, 65535
        %v2137 = vshrl.u32 %v2135, 16
        %v2138 = vcvt.s32.f32 %v2136
        %v2139 = vcvt.s32.f32 %v2137
        %2140 = vadd.xlane.f32.xlu0 %v2138
        %v2141 = vpop.xlane.xlu0 %2140
        %2142 = vadd.xlane.f32.xlu0 %v2139
        %v2143 = vpop.xlane.xlu0 %2142
        %v2144 = vcvt.f32.s32 %v2141
        %v2145 = vcvt.f32.s32 %v2143
        %v2146 = vshll.u32 %v2145, 16
        %v2147 = vadd.s32 %v2146, %v2144
        %v2148 = vadd.s32 %v1754, %v1755
        %v2149 = vand.u32 %v2148, 65535
        %v2150 = vshrl.u32 %v2148, 16
        %v2151 = vcvt.s32.f32 %v2149
        %v2152 = vcvt.s32.f32 %v2150
        %2153 = vadd.xlane.f32.xlu0 %v2151
        %v2154 = vpop.xlane.xlu0 %2153
        %2155 = vadd.xlane.f32.xlu0 %v2152
        %v2156 = vpop.xlane.xlu0 %2155
        %v2157 = vcvt.f32.s32 %v2154
        %v2158 = vcvt.f32.s32 %v2156
        %v2159 = vshll.u32 %v2158, 16
        %v2160 = vadd.s32 %v2159, %v2157
        %v2161 = vadd.s32 %v1756, %v1757
        %v2162 = vand.u32 %v2161, 65535
        %v2163 = vshrl.u32 %v2161, 16
        %v2164 = vcvt.s32.f32 %v2162
        %v2165 = vcvt.s32.f32 %v2163
        %2166 = vadd.xlane.f32.xlu0 %v2164
        %v2167 = vpop.xlane.xlu0 %2166
        %2168 = vadd.xlane.f32.xlu0 %v2165
        %v2169 = vpop.xlane.xlu0 %2168
        %v2170 = vcvt.f32.s32 %v2167
        %v2171 = vcvt.f32.s32 %v2169
        %v2172 = vshll.u32 %v2171, 16
        %v2173 = vadd.s32 %v2172, %v2170
        %v2174 = vcvt.s32.f32 %v1770
        %v2175 = vcvt.s32.f32 %v1783
        %v2176 = vcvt.s32.f32 %v1796
        %v2177 = vcvt.s32.f32 %v1809
        %v2178 = vcvt.s32.f32 %v1822
        %v2179 = vcvt.s32.f32 %v1835
        %v2180 = vcvt.s32.f32 %v1848
        %v2181 = vcvt.s32.f32 %v1861
        %v2182 = vcvt.s32.f32 %v1874
        %v2183 = vcvt.s32.f32 %v1887
        %v2184 = vcvt.s32.f32 %v1900
        %v2185 = vcvt.s32.f32 %v1913
        %v2186 = vcvt.s32.f32 %v1926
        %v2187 = vcvt.s32.f32 %v1939
        %v2188 = vcvt.s32.f32 %v1952
        %v2189 = vcvt.s32.f32 %v1965
        %v2190 = vcvt.s32.f32 %v1978
        %v2191 = vcvt.s32.f32 %v1991
        %v2192 = vcvt.s32.f32 %v2004
        %v2193 = vcvt.s32.f32 %v2017
        %v2194 = vcvt.s32.f32 %v2030
        %v2195 = vcvt.s32.f32 %v2043
        %v2196 = vcvt.s32.f32 %v2056
        %v2197 = vcvt.s32.f32 %v2069
        %v2198 = vcvt.s32.f32 %v2082
        %v2199 = vcvt.s32.f32 %v2095
        %v2200 = vcvt.s32.f32 %v2108
        %v2201 = vcvt.s32.f32 %v2121
        %v2202 = vcvt.s32.f32 %v2134
        %v2203 = vcvt.s32.f32 %v2147
        %v2204 = vcvt.s32.f32 %v2160
        %v2205 = vcvt.s32.f32 %v2173
        %v2206 = vld [vmem:[#allocation2] sm:$0xff]
        %v2207 = vld [vmem:[#allocation2 + $0x8] sm:$0xff]
        %v2208 = vld [vmem:[#allocation2 + $0x10] sm:$0xff]
        %v2209 = vld [vmem:[#allocation2 + $0x18] sm:$0xff]
        %v2210 = vld [vmem:[#allocation2 + $0x20] sm:$0xff]
        %v2211 = vld [vmem:[#allocation2 + $0x28] sm:$0xff]
        %v2212 = vld [vmem:[#allocation2 + $0x30] sm:$0xff]
        %v2213 = vld [vmem:[#allocation2 + $0x38] sm:$0xff]
        %v2214 = vld [vmem:[#allocation2 + $0x40] sm:$0xff]
        %v2215 = vld [vmem:[#allocation2 + $0x48] sm:$0xff]
        %v2216 = vld [vmem:[#allocation2 + $0x50] sm:$0xff]
        %v2217 = vld [vmem:[#allocation2 + $0x58] sm:$0xff]
        %v2218 = vld [vmem:[#allocation2 + $0x60] sm:$0xff]
        %v2219 = vld [vmem:[#allocation2 + $0x68] sm:$0xff]
        %v2220 = vld [vmem:[#allocation2 + $0x70] sm:$0xff]
        %v2221 = vld [vmem:[#allocation2 + $0x78] sm:$0xff]
        %v2222 = vld [vmem:[#allocation2 + $0x80] sm:$0xff]
        %v2223 = vld [vmem:[#allocation2 + $0x88] sm:$0xff]
        %v2224 = vld [vmem:[#allocation2 + $0x90] sm:$0xff]
        %v2225 = vld [vmem:[#allocation2 + $0x98] sm:$0xff]
        %v2226 = vld [vmem:[#allocation2 + $0xa0] sm:$0xff]
        %v2227 = vld [vmem:[#allocation2 + $0xa8] sm:$0xff]
        %v2228 = vld [vmem:[#allocation2 + $0xb0] sm:$0xff]
        %v2229 = vld [vmem:[#allocation2 + $0xb8] sm:$0xff]
        %v2230 = vld [vmem:[#allocation2 + $0xc0] sm:$0xff]
        %v2231 = vld [vmem:[#allocation2 + $0xc8] sm:$0xff]
        %v2232 = vld [vmem:[#allocation2 + $0xd0] sm:$0xff]
        %v2233 = vld [vmem:[#allocation2 + $0xd8] sm:$0xff]
        %v2234 = vld [vmem:[#allocation2 + $0xe0] sm:$0xff]
        %v2235 = vld [vmem:[#allocation2 + $0xe8] sm:$0xff]
        %v2236 = vld [vmem:[#allocation2 + $0xf0] sm:$0xff]
        %v2237 = vld [vmem:[#allocation2 + $0xf8] sm:$0xff]
        %v2238 = vld [vmem:[#allocation3] sm:$0xff]
        %v2239 = vld [vmem:[#allocation3 + $0x8] sm:$0xff]
        %v2240 = vld [vmem:[#allocation3 + $0x10] sm:$0xff]
        %v2241 = vld [vmem:[#allocation3 + $0x18] sm:$0xff]
        %v2242 = vld [vmem:[#allocation3 + $0x20] sm:$0xff]
        %v2243 = vld [vmem:[#allocation3 + $0x28] sm:$0xff]
        %v2244 = vld [vmem:[#allocation3 + $0x30] sm:$0xff]
        %v2245 = vld [vmem:[#allocation3 + $0x38] sm:$0xff]
        %v2246 = vld [vmem:[#allocation3 + $0x40] sm:$0xff]
        %v2247 = vld [vmem:[#allocation3 + $0x48] sm:$0xff]
        %v2248 = vld [vmem:[#allocation3 + $0x50] sm:$0xff]
        %v2249 = vld [vmem:[#allocation3 + $0x58] sm:$0xff]
        %v2250 = vld [vmem:[#allocation3 + $0x60] sm:$0xff]
        %v2251 = vld [vmem:[#allocation3 + $0x68] sm:$0xff]
        %v2252 = vld [vmem:[#allocation3 + $0x70] sm:$0xff]
        %v2253 = vld [vmem:[#allocation3 + $0x78] sm:$0xff]
        %v2254 = vld [vmem:[#allocation3 + $0x80] sm:$0xff]
        %v2255 = vld [vmem:[#allocation3 + $0x88] sm:$0xff]
        %v2256 = vld [vmem:[#allocation3 + $0x90] sm:$0xff]
        %v2257 = vld [vmem:[#allocation3 + $0x98] sm:$0xff]
        %v2258 = vld [vmem:[#allocation3 + $0xa0] sm:$0xff]
        %v2259 = vld [vmem:[#allocation3 + $0xa8] sm:$0xff]
        %v2260 = vld [vmem:[#allocation3 + $0xb0] sm:$0xff]
        %v2261 = vld [vmem:[#allocation3 + $0xb8] sm:$0xff]
        %v2262 = vld [vmem:[#allocation3 + $0xc0] sm:$0xff]
        %v2263 = vld [vmem:[#allocation3 + $0xc8] sm:$0xff]
        %v2264 = vld [vmem:[#allocation3 + $0xd0] sm:$0xff]
        %v2265 = vld [vmem:[#allocation3 + $0xd8] sm:$0xff]
        %v2266 = vld [vmem:[#allocation3 + $0xe0] sm:$0xff]
        %v2267 = vld [vmem:[#allocation3 + $0xe8] sm:$0xff]
        %v2268 = vld [vmem:[#allocation3 + $0xf0] sm:$0xff]
        %v2269 = vld [vmem:[#allocation3 + $0xf8] sm:$0xff]
        %s2270 = sld [smem:[#allocation9]]
        %v2271 = vmul.f32 %v2206, %v2238
        %v2272 = vmul.f32 %v2207, %v2239
        %v2273 = vmul.f32 %v2208, %v2240
        %v2274 = vmul.f32 %v2209, %v2241
        %v2275 = vmul.f32 %v2210, %v2242
        %v2276 = vmul.f32 %v2211, %v2243
        %v2277 = vmul.f32 %v2212, %v2244
        %v2278 = vmul.f32 %v2213, %v2245
        %v2279 = vmul.f32 %v2214, %v2246
        %v2280 = vmul.f32 %v2215, %v2247
        %v2281 = vmul.f32 %v2216, %v2248
        %v2282 = vmul.f32 %v2217, %v2249
        %v2283 = vmul.f32 %v2218, %v2250
        %v2284 = vmul.f32 %v2219, %v2251
        %v2285 = vmul.f32 %v2220, %v2252
        %v2286 = vmul.f32 %v2221, %v2253
        %v2287 = vmul.f32 %v2222, %v2254
        %v2288 = vmul.f32 %v2223, %v2255
        %v2289 = vmul.f32 %v2224, %v2256
        %v2290 = vmul.f32 %v2225, %v2257
        %v2291 = vmul.f32 %v2226, %v2258
        %v2292 = vmul.f32 %v2227, %v2259
        %v2293 = vmul.f32 %v2228, %v2260
        %v2294 = vmul.f32 %v2229, %v2261
        %v2295 = vmul.f32 %v2230, %v2262
        %v2296 = vmul.f32 %v2231, %v2263
        %v2297 = vmul.f32 %v2232, %v2264
        %v2298 = vmul.f32 %v2233, %v2265
        %v2299 = vmul.f32 %v2234, %v2266
        %v2300 = vmul.f32 %v2235, %v2267
        %v2301 = vmul.f32 %v2236, %v2268
        %v2302 = vmul.f32 %v2237, %v2269
        %v2303 = vld [vmem:[%s3] sm:$0xff]
        %v2304 = vld [vmem:[%s3 + $0x8] sm:$0xff]
        %v2305 = vld [vmem:[%s3 + $0x10] sm:$0xff]
        %v2306 = vld [vmem:[%s3 + $0x18] sm:$0xff]
        %v2307 = vld [vmem:[%s3 + $0x20] sm:$0xff]
        %v2308 = vld [vmem:[%s3 + $0x28] sm:$0xff]
        %v2309 = vld [vmem:[%s3 + $0x30] sm:$0xff]
        %v2310 = vld [vmem:[%s3 + $0x38] sm:$0xff]
        %v2311 = vld [vmem:[%s3 + $0x40] sm:$0xff]
        %v2312 = vld [vmem:[%s3 + $0x48] sm:$0xff]
        %v2313 = vld [vmem:[%s3 + $0x50] sm:$0xff]
        %v2314 = vld [vmem:[%s3 + $0x58] sm:$0xff]
        %v2315 = vld [vmem:[%s3 + $0x60] sm:$0xff]
        %v2316 = vld [vmem:[%s3 + $0x68] sm:$0xff]
        %v2317 = vld [vmem:[%s3 + $0x70] sm:$0xff]
        %v2318 = vld [vmem:[%s3 + $0x78] sm:$0xff]
        %v2319 = vld [vmem:[%s4] sm:$0x1]
        %v2321 = vlaneseq
        %v2322 = vshrl.u32 %v2321, 7
        %v2323 = vsub.s32 0, %v2322
        %v2324 = vrot.slane %v2319, %v2323
        %2326 = vmatprep.subr.mxu0 0.0
        %2327 = vmatpush1.msra.mxu0 %v2303
        %2328 = vmatprep.subr.mxu0 0.0
        %2329 = vmatpush1.msra.mxu0 %v2304
        %2330 = vmatprep.subr.mxu0 0.0
        %2331 = vmatpush1.msra.mxu0 %v2305
        %2332 = vmatprep.subr.mxu0 0.0
        %2333 = vmatpush1.msra.mxu0 %v2306
        %2334 = vmatprep.subr.mxu0 0.0
        %2335 = vmatpush1.msra.mxu0 %v2307
        %2336 = vmatprep.subr.mxu0 0.0
        %2337 = vmatpush1.msra.mxu0 %v2308
        %2338 = vmatprep.subr.mxu0 0.0
        %2339 = vmatpush1.msra.mxu0 %v2309
        %2340 = vmatprep.subr.mxu0 0.0
        %2341 = vmatpush1.msra.mxu0 %v2310
        %2342 = vmatprep.subr.mxu0 0.0
        %2343 = vmatpush1.msra.mxu0 %v2311
        %2344 = vmatprep.subr.mxu0 0.0
        %2345 = vmatpush1.msra.mxu0 %v2312
        %2346 = vmatprep.subr.mxu0 0.0
        %2347 = vmatpush1.msra.mxu0 %v2313
        %2348 = vmatprep.subr.mxu0 0.0
        %2349 = vmatpush1.msra.mxu0 %v2314
        %2350 = vmatprep.subr.mxu0 0.0
        %2351 = vmatpush1.msra.mxu0 %v2315
        %2352 = vmatprep.subr.mxu0 0.0
        %2353 = vmatpush1.msra.mxu0 %v2316
        %2354 = vmatprep.subr.mxu0 0.0
        %2355 = vmatpush1.msra.mxu0 %v2317
        %2356 = vmatprep.subr.mxu0 0.0
        %2357 = vmatpush1.msra.mxu0 %v2318
        %2358 = vmatprep.subr.mxu0 0.0
        %2359 = vmatpush1.msra.mxu0 0.0
        %2360 = vmatprep.subr.mxu0 0.0
        %2361 = vmatpush1.msra.mxu0 0.0
        %2362 = vmatprep.subr.mxu0 0.0
        %2363 = vmatpush1.msra.mxu0 0.0
        %2364 = vmatprep.subr.mxu0 0.0
        %2365 = vmatpush1.msra.mxu0 0.0
        %2366 = vmatprep.subr.mxu0 0.0
        %2367 = vmatpush1.msra.mxu0 0.0
        %2368 = vmatprep.subr.mxu0 0.0
        %2369 = vmatpush1.msra.mxu0 0.0
        %2370 = vmatprep.subr.mxu0 0.0
        %2371 = vmatpush1.msra.mxu0 0.0
        %2372 = vmatprep.subr.mxu0 0.0
        %2373 = vmatpush1.msra.mxu0 0.0
        %2374 = vmatprep.subr.mxu0 0.0
        %2375 = vmatpush1.msra.mxu0 0.0
        %2376 = vmatprep.subr.mxu0 0.0
        %2377 = vmatpush1.msra.mxu0 0.0
        %2378 = vmatprep.subr.mxu0 0.0
        %2379 = vmatpush1.msra.mxu0 0.0
        %2380 = vmatprep.subr.mxu0 0.0
        %2381 = vmatpush1.msra.mxu0 0.0
        %2382 = vmatprep.subr.mxu0 0.0
        %2383 = vmatpush1.msra.mxu0 0.0
        %2384 = vmatprep.subr.mxu0 0.0
        %2385 = vmatpush1.msra.mxu0 0.0
        %2386 = vmatprep.subr.mxu0 0.0
        %2387 = vmatpush1.msra.mxu0 0.0
        %2388 = vmatprep.subr.mxu0 0.0
        %2389 = vmatpush1.msra.mxu0 0.0
        %2390 = vmatprep.mubr.f32.mxu0 0.0
        %2391 = vmatmul.mubr.f32.gmra.mrb[0].mxu0 %v2271
        %v2392 = vpop.f32.mrb[0].mxu0
        %v2393 = vadd.f32 %v2324, %v2392
        %v2394 = vpop.f32.mrb[0].mxu0
        %2395 = vmatprep.mubr.f32.mxu0 0.0
        %2396 = vmatmul.mubr.f32.gmra.mrb[0].mxu0 %v2272
        %v2397 = vpop.f32.mrb[0].mxu0
        %v2398 = vadd.f32 %v2324, %v2397
        %v2399 = vpop.f32.mrb[0].mxu0
        %2400 = vmatprep.mubr.f32.mxu0 0.0
        %2401 = vmatmul.mubr.f32.gmra.mrb[0].mxu0 %v2273
        %v2402 = vpop.f32.mrb[0].mxu0
        %v2403 = vadd.f32 %v2324, %v2402
        %v2404 = vpop.f32.mrb[0].mxu0
        %2405 = vmatprep.mubr.f32.mxu0 0.0
        %2406 = vmatmul.mubr.f32.gmra.mrb[0].mxu0 %v2274
        %v2407 = vpop.f32.mrb[0].mxu0
        %v2408 = vadd.f32 %v2324, %v2407
        %v2409 = vpop.f32.mrb[0].mxu0
        %2410 = vmatprep.mubr.f32.mxu0 0.0
        %2411 = vmatmul.mubr.f32.gmra.mrb[0].mxu0 %v2275
        %v2412 = vpop.f32.mrb[0].mxu0
        %v2413 = vadd.f32 %v2324, %v2412
        %v2414 = vpop.f32.mrb[0].mxu0
        %2415 = vmatprep.mubr.f32.mxu0 0.0
        %2416 = vmatmul.mubr.f32.gmra.mrb[0].mxu0 %v2276
        %v2417 = vpop.f32.mrb[0].mxu0
        %v2418 = vadd.f32 %v2324, %v2417
        %v2419 = vpop.f32.mrb[0].mxu0
        %2420 = vmatprep.mubr.f32.mxu0 0.0
        %2421 = vmatmul.mubr.f32.gmra.mrb[0].mxu0 %v2277
        %v2422 = vpop.f32.mrb[0].mxu0
        %v2423 = vadd.f32 %v2324, %v2422
        %v2424 = vpop.f32.mrb[0].mxu0
        %2425 = vmatprep.mubr.f32.mxu0 0.0
        %2426 = vmatmul.mubr.f32.gmra.mrb[0].mxu0 %v2278
        %v2427 = vpop.f32.mrb[0].mxu0
        %v2428 = vadd.f32 %v2324, %v2427
        %v2429 = vpop.f32.mrb[0].mxu0
        %2430 = vmatprep.mubr.f32.mxu0 0.0
        %2431 = vmatmul.mubr.f32.gmra.mrb[0].mxu0 %v2279
        %v2432 = vpop.f32.mrb[0].mxu0
        %v2433 = vadd.f32 %v2324, %v2432
        %v2434 = vpop.f32.mrb[0].mxu0
        %2435 = vmatprep.mubr.f32.mxu0 0.0
        %2436 = vmatmul.mubr.f32.gmra.mrb[0].mxu0 %v2280
        %v2437 = vpop.f32.mrb[0].mxu0
        %v2438 = vadd.f32 %v2324, %v2437
        %v2439 = vpop.f32.mrb[0].mxu0
        %2440 = vmatprep.mubr.f32.mxu0 0.0
        %2441 = vmatmul.mubr.f32.gmra.mrb[0].mxu0 %v2281
        %v2442 = vpop.f32.mrb[0].mxu0
        %v2443 = vadd.f32 %v2324, %v2442
        %v2444 = vpop.f32.mrb[0].mxu0
        %2445 = vmatprep.mubr.f32.mxu0 0.0
        %2446 = vmatmul.mubr.f32.gmra.mrb[0].mxu0 %v2282
        %v2447 = vpop.f32.mrb[0].mxu0
        %v2448 = vadd.f32 %v2324, %v2447
        %v2449 = vpop.f32.mrb[0].mxu0
        %2450 = vmatprep.mubr.f32.mxu0 0.0
        %2451 = vmatmul.mubr.f32.gmra.mrb[0].mxu0 %v2283
        %v2452 = vpop.f32.mrb[0].mxu0
        %v2453 = vadd.f32 %v2324, %v2452
        %v2454 = vpop.f32.mrb[0].mxu0
        %2455 = vmatprep.mubr.f32.mxu0 0.0
        %2456 = vmatmul.mubr.f32.gmra.mrb[0].mxu0 %v2284
        %v2457 = vpop.f32.mrb[0].mxu0
        %v2458 = vadd.f32 %v2324, %v2457
        %v2459 = vpop.f32.mrb[0].mxu0
        %2460 = vmatprep.mubr.f32.mxu0 0.0
        %2461 = vmatmul.mubr.f32.gmra.mrb[0].mxu0 %v2285
        %v2462 = vpop.f32.mrb[0].mxu0
        %v2463 = vadd.f32 %v2324, %v2462
        %v2464 = vpop.f32.mrb[0].mxu0
        %2465 = vmatprep.mubr.f32.mxu0 0.0
        %2466 = vmatmul.mubr.f32.gmra.mrb[0].mxu0 %v2286
        %v2467 = vpop.f32.mrb[0].mxu0
        %v2468 = vadd.f32 %v2324, %v2467
        %v2469 = vpop.f32.mrb[0].mxu0
        %2470 = vmatprep.mubr.f32.mxu0 0.0
        %2471 = vmatmul.mubr.f32.gmra.mrb[0].mxu0 %v2287
        %v2472 = vpop.f32.mrb[0].mxu0
        %v2473 = vadd.f32 %v2324, %v2472
        %v2474 = vpop.f32.mrb[0].mxu0
        %2475 = vmatprep.mubr.f32.mxu0 0.0
        %2476 = vmatmul.mubr.f32.gmra.mrb[0].mxu0 %v2288
        %v2477 = vpop.f32.mrb[0].mxu0
        %v2478 = vadd.f32 %v2324, %v2477
        %v2479 = vpop.f32.mrb[0].mxu0
        %2480 = vmatprep.mubr.f32.mxu0 0.0
        %2481 = vmatmul.mubr.f32.gmra.mrb[0].mxu0 %v2289
        %v2482 = vpop.f32.mrb[0].mxu0
        %v2483 = vadd.f32 %v2324, %v2482
        %v2484 = vpop.f32.mrb[0].mxu0
        %2485 = vmatprep.mubr.f32.mxu0 0.0
        %2486 = vmatmul.mubr.f32.gmra.mrb[0].mxu0 %v2290
        %v2487 = vpop.f32.mrb[0].mxu0
        %v2488 = vadd.f32 %v2324, %v2487
        %v2489 = vpop.f32.mrb[0].mxu0
        %2490 = vmatprep.mubr.f32.mxu0 0.0
        %2491 = vmatmul.mubr.f32.gmra.mrb[0].mxu0 %v2291
        %v2492 = vpop.f32.mrb[0].mxu0
        %v2493 = vadd.f32 %v2324, %v2492
        %v2494 = vpop.f32.mrb[0].mxu0
        %2495 = vmatprep.mubr.f32.mxu0 0.0
        %2496 = vmatmul.mubr.f32.gmra.mrb[0].mxu0 %v2292
        %v2497 = vpop.f32.mrb[0].mxu0
        %v2498 = vadd.f32 %v2324, %v2497
        %v2499 = vpop.f32.mrb[0].mxu0
        %2500 = vmatprep.mubr.f32.mxu0 0.0
        %2501 = vmatmul.mubr.f32.gmra.mrb[0].mxu0 %v2293
        %v2502 = vpop.f32.mrb[0].mxu0
        %v2503 = vadd.f32 %v2324, %v2502
        %v2504 = vpop.f32.mrb[0].mxu0
        %2505 = vmatprep.mubr.f32.mxu0 0.0
        %2506 = vmatmul.mubr.f32.gmra.mrb[0].mxu0 %v2294
        %v2507 = vpop.f32.mrb[0].mxu0
        %v2508 = vadd.f32 %v2324, %v2507
        %v2509 = vpop.f32.mrb[0].mxu0
        %2510 = vmatprep.mubr.f32.mxu0 0.0
        %2511 = vmatmul.mubr.f32.gmra.mrb[0].mxu0 %v2295
        %v2512 = vpop.f32.mrb[0].mxu0
        %v2513 = vadd.f32 %v2324, %v2512
        %v2514 = vpop.f32.mrb[0].mxu0
        %2515 = vmatprep.mubr.f32.mxu0 0.0
        %2516 = vmatmul.mubr.f32.gmra.mrb[0].mxu0 %v2296
        %v2517 = vpop.f32.mrb[0].mxu0
        %v2518 = vadd.f32 %v2324, %v2517
        %v2519 = vpop.f32.mrb[0].mxu0
        %2520 = vmatprep.mubr.f32.mxu0 0.0
        %2521 = vmatmul.mubr.f32.gmra.mrb[0].mxu0 %v2297
        %v2522 = vpop.f32.mrb[0].mxu0
        %v2523 = vadd.f32 %v2324, %v2522
        %v2524 = vpop.f32.mrb[0].mxu0
        %2525 = vmatprep.mubr.f32.mxu0 0.0
        %2526 = vmatmul.mubr.f32.gmra.mrb[0].mxu0 %v2298
        %v2527 = vpop.f32.mrb[0].mxu0
        %v2528 = vadd.f32 %v2324, %v2527
        %v2529 = vpop.f32.mrb[0].mxu0
        %2530 = vmatprep.mubr.f32.mxu0 0.0
        %2531 = vmatmul.mubr.f32.gmra.mrb[0].mxu0 %v2299
        %v2532 = vpop.f32.mrb[0].mxu0
        %v2533 = vadd.f32 %v2324, %v2532
        %v2534 = vpop.f32.mrb[0].mxu0
        %2535 = vmatprep.mubr.f32.mxu0 0.0
        %2536 = vmatmul.mubr.f32.gmra.mrb[0].mxu0 %v2300
        %v2537 = vpop.f32.mrb[0].mxu0
        %v2538 = vadd.f32 %v2324, %v2537
        %v2539 = vpop.f32.mrb[0].mxu0
        %2540 = vmatprep.mubr.f32.mxu0 0.0
        %2541 = vmatmul.mubr.f32.gmra.mrb[0].mxu0 %v2301
        %v2542 = vpop.f32.mrb[0].mxu0
        %v2543 = vadd.f32 %v2324, %v2542
        %v2544 = vpop.f32.mrb[0].mxu0
        %2545 = vmatprep.mubr.f32.mxu0 0.0
        %2546 = vmatmul.mubr.f32.gmra.mrb[0].mxu0 %v2302
        %v2547 = vpop.f32.mrb[0].mxu0
        %v2548 = vadd.f32 %v2324, %v2547
        %v2549 = vpop.f32.mrb[0].mxu0
        %2550 = vdwg.mxu0
        %v2551 = vmax.f32 %v2393, 0.0
        %v2552 = vmax.f32 %v2398, 0.0
        %v2553 = vmax.f32 %v2403, 0.0
        %v2554 = vmax.f32 %v2408, 0.0
        %v2555 = vmax.f32 %v2413, 0.0
        %v2556 = vmax.f32 %v2418, 0.0
        %v2557 = vmax.f32 %v2423, 0.0
        %v2558 = vmax.f32 %v2428, 0.0
        %v2559 = vmax.f32 %v2433, 0.0
        %v2560 = vmax.f32 %v2438, 0.0
        %v2561 = vmax.f32 %v2443, 0.0
        %v2562 = vmax.f32 %v2448, 0.0
        %v2563 = vmax.f32 %v2453, 0.0
        %v2564 = vmax.f32 %v2458, 0.0
        %v2565 = vmax.f32 %v2463, 0.0
        %v2566 = vmax.f32 %v2468, 0.0
        %v2567 = vmax.f32 %v2473, 0.0
        %v2568 = vmax.f32 %v2478, 0.0
        %v2569 = vmax.f32 %v2483, 0.0
        %v2570 = vmax.f32 %v2488, 0.0
        %v2571 = vmax.f32 %v2493, 0.0
        %v2572 = vmax.f32 %v2498, 0.0
        %v2573 = vmax.f32 %v2503, 0.0
        %v2574 = vmax.f32 %v2508, 0.0
        %v2575 = vmax.f32 %v2513, 0.0
        %v2576 = vmax.f32 %v2518, 0.0
        %v2577 = vmax.f32 %v2523, 0.0
        %v2578 = vmax.f32 %v2528, 0.0
        %v2579 = vmax.f32 %v2533, 0.0
        %v2580 = vmax.f32 %v2538, 0.0
        %v2581 = vmax.f32 %v2543, 0.0
        %v2582 = vmax.f32 %v2548, 0.0
        %v2583 = vld [vmem:[#allocation14] sm:$0xff]
        %v2584 = vld [vmem:[#allocation14 + $0x8] sm:$0xff]
        %v2585 = vld [vmem:[#allocation14 + $0x10] sm:$0xff]
        %v2586 = vld [vmem:[#allocation14 + $0x18] sm:$0xff]
        %v2587 = vld [vmem:[#allocation14 + $0x20] sm:$0xff]
        %v2588 = vld [vmem:[#allocation14 + $0x28] sm:$0xff]
        %v2589 = vld [vmem:[#allocation14 + $0x30] sm:$0xff]
        %v2590 = vld [vmem:[#allocation14 + $0x38] sm:$0xff]
        %v2591 = vld [vmem:[#allocation14 + $0x40] sm:$0xff]
        %v2592 = vld [vmem:[#allocation14 + $0x48] sm:$0xff]
        %v2593 = vld [vmem:[#allocation14 + $0x50] sm:$0xff]
        %v2594 = vld [vmem:[#allocation14 + $0x58] sm:$0xff]
        %v2595 = vld [vmem:[#allocation14 + $0x60] sm:$0xff]
        %v2596 = vld [vmem:[#allocation14 + $0x68] sm:$0xff]
        %v2597 = vld [vmem:[#allocation14 + $0x70] sm:$0xff]
        %v2598 = vld [vmem:[#allocation14 + $0x78] sm:$0xff]
        %v2599 = vld [vmem:[%s6] sm:$0x1]
        %v2601 = vlaneseq
        %v2602 = vshrl.u32 %v2601, 7
        %v2603 = vsub.s32 0, %v2602
        %v2604 = vrot.slane %v2599, %v2603
        %2606 = vmatprep.subr.mxu0 0.0
        %2607 = vmatpush1.msra.mxu0 %v2583
        %2608 = vmatprep.subr.mxu0 0.0
        %2609 = vmatpush1.msra.mxu0 %v2584
        %2610 = vmatprep.subr.mxu0 0.0
        %2611 = vmatpush1.msra.mxu0 %v2585
        %2612 = vmatprep.subr.mxu0 0.0
        %2613 = vmatpush1.msra.mxu0 %v2586
        %2614 = vmatprep.subr.mxu0 0.0
        %2615 = vmatpush1.msra.mxu0 %v2587
        %2616 = vmatprep.subr.mxu0 0.0
        %2617 = vmatpush1.msra.mxu0 %v2588
        %2618 = vmatprep.subr.mxu0 0.0
        %2619 = vmatpush1.msra.mxu0 %v2589
        %2620 = vmatprep.subr.mxu0 0.0
        %2621 = vmatpush1.msra.mxu0 %v2590
        %2622 = vmatprep.subr.mxu0 0.0
        %2623 = vmatpush1.msra.mxu0 %v2591
        %2624 = vmatprep.subr.mxu0 0.0
        %2625 = vmatpush1.msra.mxu0 %v2592
        %2626 = vmatprep.subr.mxu0 0.0
        %2627 = vmatpush1.msra.mxu0 %v2593
        %2628 = vmatprep.subr.mxu0 0.0
        %2629 = vmatpush1.msra.mxu0 %v2594
        %2630 = vmatprep.subr.mxu0 0.0
        %2631 = vmatpush1.msra.mxu0 %v2595
        %2632 = vmatprep.subr.mxu0 0.0
        %2633 = vmatpush1.msra.mxu0 %v2596
        %2634 = vmatprep.subr.mxu0 0.0
        %2635 = vmatpush1.msra.mxu0 %v2597
        %2636 = vmatprep.subr.mxu0 0.0
        %2637 = vmatpush1.msra.mxu0 %v2598
        %2638 = vmatprep.subr.mxu0 0.0
        %2639 = vmatpush1.msra.mxu0 0.0
        %2640 = vmatprep.subr.mxu0 0.0
        %2641 = vmatpush1.msra.mxu0 0.0
        %2642 = vmatprep.subr.mxu0 0.0
        %2643 = vmatpush1.msra.mxu0 0.0
        %2644 = vmatprep.subr.mxu0 0.0
        %2645 = vmatpush1.msra.mxu0 0.0
        %2646 = vmatprep.subr.mxu0 0.0
        %2647 = vmatpush1.msra.mxu0 0.0
        %2648 = vmatprep.subr.mxu0 0.0
        %2649 = vmatpush1.msra.mxu0 0.0
        %2650 = vmatprep.subr.mxu0 0.0
        %2651 = vmatpush1.msra.mxu0 0.0
        %2652 = vmatprep.subr.mxu0 0.0
        %2653 = vmatpush1.msra.mxu0 0.0
        %2654 = vmatprep.subr.mxu0 0.0
        %2655 = vmatpush1.msra.mxu0 0.0
        %2656 = vmatprep.subr.mxu0 0.0
        %2657 = vmatpush1.msra.mxu0 0.0
        %2658 = vmatprep.subr.mxu0 0.0
        %2659 = vmatpush1.msra.mxu0 0.0
        %2660 = vmatprep.subr.mxu0 0.0
        %2661 = vmatpush1.msra.mxu0 0.0
        %2662 = vmatprep.subr.mxu0 0.0
        %2663 = vmatpush1.msra.mxu0 0.0
        %2664 = vmatprep.subr.mxu0 0.0
        %2665 = vmatpush1.msra.mxu0 0.0
        %2666 = vmatprep.subr.mxu0 0.0
        %2667 = vmatpush1.msra.mxu0 0.0
        %2668 = vmatprep.subr.mxu0 0.0
        %2669 = vmatpush1.msra.mxu0 0.0
        %2670 = vmatprep.mubr.f32.mxu0 0.0
        %2671 = vmatmul.mubr.f32.gmra.mrb[0].mxu0 %v2551
        %v2672 = vpop.f32.mrb[0].mxu0
        %v2673 = vadd.f32 %v2604, %v2672
        %v2674 = vpop.f32.mrb[0].mxu0
        %2675 = vmatprep.mubr.f32.mxu0 0.0
        %2676 = vmatmul.mubr.f32.gmra.mrb[0].mxu0 %v2552
        %v2677 = vpop.f32.mrb[0].mxu0
        %v2678 = vadd.f32 %v2604, %v2677
        %v2679 = vpop.f32.mrb[0].mxu0
        %2680 = vmatprep.mubr.f32.mxu0 0.0
        %2681 = vmatmul.mubr.f32.gmra.mrb[0].mxu0 %v2553
        %v2682 = vpop.f32.mrb[0].mxu0
        %v2683 = vadd.f32 %v2604, %v2682
        %v2684 = vpop.f32.mrb[0].mxu0
        %2685 = vmatprep.mubr.f32.mxu0 0.0
        %2686 = vmatmul.mubr.f32.gmra.mrb[0].mxu0 %v2554
        %v2687 = vpop.f32.mrb[0].mxu0
        %v2688 = vadd.f32 %v2604, %v2687
        %v2689 = vpop.f32.mrb[0].mxu0
        %2690 = vmatprep.mubr.f32.mxu0 0.0
        %2691 = vmatmul.mubr.f32.gmra.mrb[0].mxu0 %v2555
        %v2692 = vpop.f32.mrb[0].mxu0
        %v2693 = vadd.f32 %v2604, %v2692
        %v2694 = vpop.f32.mrb[0].mxu0
        %2695 = vmatprep.mubr.f32.mxu0 0.0
        %2696 = vmatmul.mubr.f32.gmra.mrb[0].mxu0 %v2556
        %v2697 = vpop.f32.mrb[0].mxu0
        %v2698 = vadd.f32 %v2604, %v2697
        %v2699 = vpop.f32.mrb[0].mxu0
        %2700 = vmatprep.mubr.f32.mxu0 0.0
        %2701 = vmatmul.mubr.f32.gmra.mrb[0].mxu0 %v2557
        %v2702 = vpop.f32.mrb[0].mxu0
        %v2703 = vadd.f32 %v2604, %v2702
        %v2704 = vpop.f32.mrb[0].mxu0
        %2705 = vmatprep.mubr.f32.mxu0 0.0
        %2706 = vmatmul.mubr.f32.gmra.mrb[0].mxu0 %v2558
        %v2707 = vpop.f32.mrb[0].mxu0
        %v2708 = vadd.f32 %v2604, %v2707
        %v2709 = vpop.f32.mrb[0].mxu0
        %2710 = vmatprep.mubr.f32.mxu0 0.0
        %2711 = vmatmul.mubr.f32.gmra.mrb[0].mxu0 %v2559
        %v2712 = vpop.f32.mrb[0].mxu0
        %v2713 = vadd.f32 %v2604, %v2712
        %v2714 = vpop.f32.mrb[0].mxu0
        %2715 = vmatprep.mubr.f32.mxu0 0.0
        %2716 = vmatmul.mubr.f32.gmra.mrb[0].mxu0 %v2560
        %v2717 = vpop.f32.mrb[0].mxu0
        %v2718 = vadd.f32 %v2604, %v2717
        %v2719 = vpop.f32.mrb[0].mxu0
        %2720 = vmatprep.mubr.f32.mxu0 0.0
        %2721 = vmatmul.mubr.f32.gmra.mrb[0].mxu0 %v2561
        %v2722 = vpop.f32.mrb[0].mxu0
        %v2723 = vadd.f32 %v2604, %v2722
        %v2724 = vpop.f32.mrb[0].mxu0
        %2725 = vmatprep.mubr.f32.mxu0 0.0
        %2726 = vmatmul.mubr.f32.gmra.mrb[0].mxu0 %v2562
        %v2727 = vpop.f32.mrb[0].mxu0
        %v2728 = vadd.f32 %v2604, %v2727
        %v2729 = vpop.f32.mrb[0].mxu0
        %2730 = vmatprep.mubr.f32.mxu0 0.0
        %2731 = vmatmul.mubr.f32.gmra.mrb[0].mxu0 %v2563
        %v2732 = vpop.f32.mrb[0].mxu0
        %v2733 = vadd.f32 %v2604, %v2732
        %v2734 = vpop.f32.mrb[0].mxu0
        %2735 = vmatprep.mubr.f32.mxu0 0.0
        %2736 = vmatmul.mubr.f32.gmra.mrb[0].mxu0 %v2564
        %v2737 = vpop.f32.mrb[0].mxu0
        %v2738 = vadd.f32 %v2604, %v2737
        %v2739 = vpop.f32.mrb[0].mxu0
        %2740 = vmatprep.mubr.f32.mxu0 0.0
        %2741 = vmatmul.mubr.f32.gmra.mrb[0].mxu0 %v2565
        %v2742 = vpop.f32.mrb[0].mxu0
        %v2743 = vadd.f32 %v2604, %v2742
        %v2744 = vpop.f32.mrb[0].mxu0
        %2745 = vmatprep.mubr.f32.mxu0 0.0
        %2746 = vmatmul.mubr.f32.gmra.mrb[0].mxu0 %v2566
        %v2747 = vpop.f32.mrb[0].mxu0
        %v2748 = vadd.f32 %v2604, %v2747
        %v2749 = vpop.f32.mrb[0].mxu0
        %2750 = vmatprep.mubr.f32.mxu0 0.0
        %2751 = vmatmul.mubr.f32.gmra.mrb[0].mxu0 %v2567
        %v2752 = vpop.f32.mrb[0].mxu0
        %v2753 = vadd.f32 %v2604, %v2752
        %v2754 = vpop.f32.mrb[0].mxu0
        %2755 = vmatprep.mubr.f32.mxu0 0.0
        %2756 = vmatmul.mubr.f32.gmra.mrb[0].mxu0 %v2568
        %v2757 = vpop.f32.mrb[0].mxu0
        %v2758 = vadd.f32 %v2604, %v2757
        %v2759 = vpop.f32.mrb[0].mxu0
        %2760 = vmatprep.mubr.f32.mxu0 0.0
        %2761 = vmatmul.mubr.f32.gmra.mrb[0].mxu0 %v2569
        %v2762 = vpop.f32.mrb[0].mxu0
        %v2763 = vadd.f32 %v2604, %v2762
        %v2764 = vpop.f32.mrb[0].mxu0
        %2765 = vmatprep.mubr.f32.mxu0 0.0
        %2766 = vmatmul.mubr.f32.gmra.mrb[0].mxu0 %v2570
        %v2767 = vpop.f32.mrb[0].mxu0
        %v2768 = vadd.f32 %v2604, %v2767
        %v2769 = vpop.f32.mrb[0].mxu0
        %2770 = vmatprep.mubr.f32.mxu0 0.0
        %2771 = vmatmul.mubr.f32.gmra.mrb[0].mxu0 %v2571
        %v2772 = vpop.f32.mrb[0].mxu0
        %v2773 = vadd.f32 %v2604, %v2772
        %v2774 = vpop.f32.mrb[0].mxu0
        %2775 = vmatprep.mubr.f32.mxu0 0.0
        %2776 = vmatmul.mubr.f32.gmra.mrb[0].mxu0 %v2572
        %v2777 = vpop.f32.mrb[0].mxu0
        %v2778 = vadd.f32 %v2604, %v2777
        %v2779 = vpop.f32.mrb[0].mxu0
        %2780 = vmatprep.mubr.f32.mxu0 0.0
        %2781 = vmatmul.mubr.f32.gmra.mrb[0].mxu0 %v2573
        %v2782 = vpop.f32.mrb[0].mxu0
        %v2783 = vadd.f32 %v2604, %v2782
        %v2784 = vpop.f32.mrb[0].mxu0
        %2785 = vmatprep.mubr.f32.mxu0 0.0
        %2786 = vmatmul.mubr.f32.gmra.mrb[0].mxu0 %v2574
        %v2787 = vpop.f32.mrb[0].mxu0
        %v2788 = vadd.f32 %v2604, %v2787
        %v2789 = vpop.f32.mrb[0].mxu0
        %2790 = vmatprep.mubr.f32.mxu0 0.0
        %2791 = vmatmul.mubr.f32.gmra.mrb[0].mxu0 %v2575
        %v2792 = vpop.f32.mrb[0].mxu0
        %v2793 = vadd.f32 %v2604, %v2792
        %v2794 = vpop.f32.mrb[0].mxu0
        %2795 = vmatprep.mubr.f32.mxu0 0.0
        %2796 = vmatmul.mubr.f32.gmra.mrb[0].mxu0 %v2576
        %v2797 = vpop.f32.mrb[0].mxu0
        %v2798 = vadd.f32 %v2604, %v2797
        %v2799 = vpop.f32.mrb[0].mxu0
        %2800 = vmatprep.mubr.f32.mxu0 0.0
        %2801 = vmatmul.mubr.f32.gmra.mrb[0].mxu0 %v2577
        %v2802 = vpop.f32.mrb[0].mxu0
        %v2803 = vadd.f32 %v2604, %v2802
        %v2804 = vpop.f32.mrb[0].mxu0
        %2805 = vmatprep.mubr.f32.mxu0 0.0
        %2806 = vmatmul.mubr.f32.gmra.mrb[0].mxu0 %v2578
        %v2807 = vpop.f32.mrb[0].mxu0
        %v2808 = vadd.f32 %v2604, %v2807
        %v2809 = vpop.f32.mrb[0].mxu0
        %2810 = vmatprep.mubr.f32.mxu0 0.0
        %2811 = vmatmul.mubr.f32.gmra.mrb[0].mxu0 %v2579
        %v2812 = vpop.f32.mrb[0].mxu0
        %v2813 = vadd.f32 %v2604, %v2812
        %v2814 = vpop.f32.mrb[0].mxu0
        %2815 = vmatprep.mubr.f32.mxu0 0.0
        %2816 = vmatmul.mubr.f32.gmra.mrb[0].mxu0 %v2580
        %v2817 = vpop.f32.mrb[0].mxu0
        %v2818 = vadd.f32 %v2604, %v2817
        %v2819 = vpop.f32.mrb[0].mxu0
        %2820 = vmatprep.mubr.f32.mxu0 0.0
        %2821 = vmatmul.mubr.f32.gmra.mrb[0].mxu0 %v2581
        %v2822 = vpop.f32.mrb[0].mxu0
        %v2823 = vadd.f32 %v2604, %v2822
        %v2824 = vpop.f32.mrb[0].mxu0
        %2825 = vmatprep.mubr.f32.mxu0 0.0
        %2826 = vmatmul.mubr.f32.gmra.mrb[0].mxu0 %v2582
        %v2827 = vpop.f32.mrb[0].mxu0
        %v2828 = vadd.f32 %v2604, %v2827
        %v2829 = vpop.f32.mrb[0].mxu0
        %2830 = vdwg.mxu0
        %v2831 = vld [vmem:[%s7] sm:$0x1]
        %v2833 = vlaneseq
        %v2834 = vshrl.u32 %v2833, 7
        %v2835 = vsub.s32 0, %v2834
        %v2836 = vrot.slane %v2831, %v2835
        %v2838 = vmul.f32 %v2174, %v2836
        %v2839 = vmul.f32 %v2175, %v2836
        %v2840 = vmul.f32 %v2176, %v2836
        %v2841 = vmul.f32 %v2177, %v2836
        %v2842 = vmul.f32 %v2178, %v2836
        %v2843 = vmul.f32 %v2179, %v2836
        %v2844 = vmul.f32 %v2180, %v2836
        %v2845 = vmul.f32 %v2181, %v2836
        %v2846 = vmul.f32 %v2182, %v2836
        %v2847 = vmul.f32 %v2183, %v2836
        %v2848 = vmul.f32 %v2184, %v2836
        %v2849 = vmul.f32 %v2185, %v2836
        %v2850 = vmul.f32 %v2186, %v2836
        %v2851 = vmul.f32 %v2187, %v2836
        %v2852 = vmul.f32 %v2188, %v2836
        %v2853 = vmul.f32 %v2189, %v2836
        %v2854 = vmul.f32 %v2190, %v2836
        %v2855 = vmul.f32 %v2191, %v2836
        %v2856 = vmul.f32 %v2192, %v2836
        %v2857 = vmul.f32 %v2193, %v2836
        %v2858 = vmul.f32 %v2194, %v2836
        %v2859 = vmul.f32 %v2195, %v2836
        %v2860 = vmul.f32 %v2196, %v2836
        %v2861 = vmul.f32 %v2197, %v2836
        %v2862 = vmul.f32 %v2198, %v2836
        %v2863 = vmul.f32 %v2199, %v2836
        %v2864 = vmul.f32 %v2200, %v2836
        %v2865 = vmul.f32 %v2201, %v2836
        %v2866 = vmul.f32 %v2202, %v2836
        %v2867 = vmul.f32 %v2203, %v2836
        %v2868 = vmul.f32 %v2204, %v2836
        %v2869 = vmul.f32 %v2205, %v2836
        %v2870 = vld [vmem:[%s8] sm:$0x1]
        %v2872 = vlaneseq
        %v2873 = vshrl.u32 %v2872, 7
        %v2874 = vsub.s32 0, %v2873
        %v2875 = vrot.slane %v2870, %v2874
        %v2877 = vadd.f32 %v2838, %v2875
        %v2878 = vadd.f32 %v2839, %v2875
        %v2879 = vadd.f32 %v2840, %v2875
        %v2880 = vadd.f32 %v2841, %v2875
        %v2881 = vadd.f32 %v2842, %v2875
        %v2882 = vadd.f32 %v2843, %v2875
        %v2883 = vadd.f32 %v2844, %v2875
        %v2884 = vadd.f32 %v2845, %v2875
        %v2885 = vadd.f32 %v2846, %v2875
        %v2886 = vadd.f32 %v2847, %v2875
        %v2887 = vadd.f32 %v2848, %v2875
        %v2888 = vadd.f32 %v2849, %v2875
        %v2889 = vadd.f32 %v2850, %v2875
        %v2890 = vadd.f32 %v2851, %v2875
        %v2891 = vadd.f32 %v2852, %v2875
        %v2892 = vadd.f32 %v2853, %v2875
        %v2893 = vadd.f32 %v2854, %v2875
        %v2894 = vadd.f32 %v2855, %v2875
        %v2895 = vadd.f32 %v2856, %v2875
        %v2896 = vadd.f32 %v2857, %v2875
        %v2897 = vadd.f32 %v2858, %v2875
        %v2898 = vadd.f32 %v2859, %v2875
        %v2899 = vadd.f32 %v2860, %v2875
        %v2900 = vadd.f32 %v2861, %v2875
        %v2901 = vadd.f32 %v2862, %v2875
        %v2902 = vadd.f32 %v2863, %v2875
        %v2903 = vadd.f32 %v2864, %v2875
        %v2904 = vadd.f32 %v2865, %v2875
        %v2905 = vadd.f32 %v2866, %v2875
        %v2906 = vadd.f32 %v2867, %v2875
        %v2907 = vadd.f32 %v2868, %v2875
        %v2908 = vadd.f32 %v2869, %v2875
        %v2909 = vmax.f32 %v2877, 0.0
        %v2910 = vmax.f32 %v2878, 0.0
        %v2911 = vmax.f32 %v2879, 0.0
        %v2912 = vmax.f32 %v2880, 0.0
        %v2913 = vmax.f32 %v2881, 0.0
        %v2914 = vmax.f32 %v2882, 0.0
        %v2915 = vmax.f32 %v2883, 0.0
        %v2916 = vmax.f32 %v2884, 0.0
        %v2917 = vmax.f32 %v2885, 0.0
        %v2918 = vmax.f32 %v2886, 0.0
        %v2919 = vmax.f32 %v2887, 0.0
        %v2920 = vmax.f32 %v2888, 0.0
        %v2921 = vmax.f32 %v2889, 0.0
        %v2922 = vmax.f32 %v2890, 0.0
        %v2923 = vmax.f32 %v2891, 0.0
        %v2924 = vmax.f32 %v2892, 0.0
        %v2925 = vmax.f32 %v2893, 0.0
        %v2926 = vmax.f32 %v2894, 0.0
        %v2927 = vmax.f32 %v2895, 0.0
        %v2928 = vmax.f32 %v2896, 0.0
        %v2929 = vmax.f32 %v2897, 0.0
        %v2930 = vmax.f32 %v2898, 0.0
        %v2931 = vmax.f32 %v2899, 0.0
        %v2932 = vmax.f32 %v2900, 0.0
        %v2933 = vmax.f32 %v2901, 0.0
        %v2934 = vmax.f32 %v2902, 0.0
        %v2935 = vmax.f32 %v2903, 0.0
        %v2936 = vmax.f32 %v2904, 0.0
        %v2937 = vmax.f32 %v2905, 0.0
        %v2938 = vmax.f32 %v2906, 0.0
        %v2939 = vmax.f32 %v2907, 0.0
        %v2940 = vmax.f32 %v2908, 0.0
        %v2941 = vld [vmem:[#allocation15] sm:$0xff]
        %v2942 = vld [vmem:[#allocation15 + $0x8] sm:$0xff]
        %v2943 = vld [vmem:[#allocation15 + $0x10] sm:$0xff]
        %v2944 = vld [vmem:[#allocation15 + $0x18] sm:$0xff]
        %v2945 = vld [vmem:[#allocation15 + $0x20] sm:$0xff]
        %v2946 = vld [vmem:[#allocation15 + $0x28] sm:$0xff]
        %v2947 = vld [vmem:[#allocation15 + $0x30] sm:$0xff]
        %v2948 = vld [vmem:[#allocation15 + $0x38] sm:$0xff]
        %v2949 = vld [vmem:[#allocation15 + $0x40] sm:$0xff]
        %v2950 = vld [vmem:[#allocation15 + $0x48] sm:$0xff]
        %v2951 = vld [vmem:[#allocation15 + $0x50] sm:$0xff]
        %v2952 = vld [vmem:[#allocation15 + $0x58] sm:$0xff]
        %v2953 = vld [vmem:[#allocation15 + $0x60] sm:$0xff]
        %v2954 = vld [vmem:[#allocation15 + $0x68] sm:$0xff]
        %v2955 = vld [vmem:[#allocation15 + $0x70] sm:$0xff]
        %v2956 = vld [vmem:[#allocation15 + $0x78] sm:$0xff]
        %v2957 = vld [vmem:[%s10] sm:$0x1]
        %v2959 = vlaneseq
        %v2960 = vshrl.u32 %v2959, 7
        %v2961 = vsub.s32 0, %v2960
        %v2962 = vrot.slane %v2957, %v2961
        %2964 = vmatprep.subr.mxu0 0.0
        %2965 = vmatpush1.msra.mxu0 %v2941
        %2966 = vmatprep.subr.mxu0 0.0
        %2967 = vmatpush1.msra.mxu0 %v2942
        %2968 = vmatprep.subr.mxu0 0.0
        %2969 = vmatpush1.msra.mxu0 %v2943
        %2970 = vmatprep.subr.mxu0 0.0
        %2971 = vmatpush1.msra.mxu0 %v2944
        %2972 = vmatprep.subr.mxu0 0.0
        %2973 = vmatpush1.msra.mxu0 %v2945
        %2974 = vmatprep.subr.mxu0 0.0
        %2975 = vmatpush1.msra.mxu0 %v2946
        %2976 = vmatprep.subr.mxu0 0.0
        %2977 = vmatpush1.msra.mxu0 %v2947
        %2978 = vmatprep.subr.mxu0 0.0
        %2979 = vmatpush1.msra.mxu0 %v2948
        %2980 = vmatprep.subr.mxu0 0.0
        %2981 = vmatpush1.msra.mxu0 %v2949
        %2982 = vmatprep.subr.mxu0 0.0
        %2983 = vmatpush1.msra.mxu0 %v2950
        %2984 = vmatprep.subr.mxu0 0.0
        %2985 = vmatpush1.msra.mxu0 %v2951
        %2986 = vmatprep.subr.mxu0 0.0
        %2987 = vmatpush1.msra.mxu0 %v2952
        %2988 = vmatprep.subr.mxu0 0.0
        %2989 = vmatpush1.msra.mxu0 %v2953
        %2990 = vmatprep.subr.mxu0 0.0
        %2991 = vmatpush1.msra.mxu0 %v2954
        %2992 = vmatprep.subr.mxu0 0.0
        %2993 = vmatpush1.msra.mxu0 %v2955
        %2994 = vmatprep.subr.mxu0 0.0
        %2995 = vmatpush1.msra.mxu0 %v2956
        %2996 = vmatprep.subr.mxu0 0.0
        %2997 = vmatpush1.msra.mxu0 0.0
        %2998 = vmatprep.subr.mxu0 0.0
        %2999 = vmatpush1.msra.mxu0 0.0
        %3000 = vmatprep.subr.mxu0 0.0
        %3001 = vmatpush1.msra.mxu0 0.0
        %3002 = vmatprep.subr.mxu0 0.0
        %3003 = vmatpush1.msra.mxu0 0.0
        %3004 = vmatprep.subr.mxu0 0.0
        %3005 = vmatpush1.msra.mxu0 0.0
        %3006 = vmatprep.subr.mxu0 0.0
        %3007 = vmatpush1.msra.mxu0 0.0
        %3008 = vmatprep.subr.mxu0 0.0
        %3009 = vmatpush1.msra.mxu0 0.0
        %3010 = vmatprep.subr.mxu0 0.0
        %3011 = vmatpush1.msra.mxu0 0.0
        %3012 = vmatprep.subr.mxu0 0.0
        %3013 = vmatpush1.msra.mxu0 0.0
        %3014 = vmatprep.subr.mxu0 0.0
        %3015 = vmatpush1.msra.mxu0 0.0
        %3016 = vmatprep.subr.mxu0 0.0
        %3017 = vmatpush1.msra.mxu0 0.0
        %3018 = vmatprep.subr.mxu0 0.0
        %3019 = vmatpush1.msra.mxu0 0.0
        %3020 = vmatprep.subr.mxu0 0.0
        %3021 = vmatpush1.msra.mxu0 0.0
        %3022 = vmatprep.subr.mxu0 0.0
        %3023 = vmatpush1.msra.mxu0 0.0
        %3024 = vmatprep.subr.mxu0 0.0
        %3025 = vmatpush1.msra.mxu0 0.0
        %3026 = vmatprep.subr.mxu0 0.0
        %3027 = vmatpush1.msra.mxu0 0.0
        %3028 = vmatprep.mubr.f32.mxu0 0.0
        %3029 = vmatmul.mubr.f32.gmra.mrb[0].mxu0 %v2909
        %v3030 = vpop.f32.mrb[0].mxu0
        %v3031 = vadd.f32 %v2962, %v3030
        %v3032 = vpop.f32.mrb[0].mxu0
        %3033 = vmatprep.mubr.f32.mxu0 0.0
        %3034 = vmatmul.mubr.f32.gmra.mrb[0].mxu0 %v2910
        %v3035 = vpop.f32.mrb[0].mxu0
        %v3036 = vadd.f32 %v2962, %v3035
        %v3037 = vpop.f32.mrb[0].mxu0
        %3038 = vmatprep.mubr.f32.mxu0 0.0
        %3039 = vmatmul.mubr.f32.gmra.mrb[0].mxu0 %v2911
        %v3040 = vpop.f32.mrb[0].mxu0
        %v3041 = vadd.f32 %v2962, %v3040
        %v3042 = vpop.f32.mrb[0].mxu0
        %3043 = vmatprep.mubr.f32.mxu0 0.0
        %3044 = vmatmul.mubr.f32.gmra.mrb[0].mxu0 %v2912
        %v3045 = vpop.f32.mrb[0].mxu0
        %v3046 = vadd.f32 %v2962, %v3045
        %v3047 = vpop.f32.mrb[0].mxu0
        %3048 = vmatprep.mubr.f32.mxu0 0.0
        %3049 = vmatmul.mubr.f32.gmra.mrb[0].mxu0 %v2913
        %v3050 = vpop.f32.mrb[0].mxu0
        %v3051 = vadd.f32 %v2962, %v3050
        %v3052 = vpop.f32.mrb[0].mxu0
        %3053 = vmatprep.mubr.f32.mxu0 0.0
        %3054 = vmatmul.mubr.f32.gmra.mrb[0].mxu0 %v2914
        %v3055 = vpop.f32.mrb[0].mxu0
        %v3056 = vadd.f32 %v2962, %v3055
        %v3057 = vpop.f32.mrb[0].mxu0
        %3058 = vmatprep.mubr.f32.mxu0 0.0
        %3059 = vmatmul.mubr.f32.gmra.mrb[0].mxu0 %v2915
        %v3060 = vpop.f32.mrb[0].mxu0
        %v3061 = vadd.f32 %v2962, %v3060
        %v3062 = vpop.f32.mrb[0].mxu0
        %3063 = vmatprep.mubr.f32.mxu0 0.0
        %3064 = vmatmul.mubr.f32.gmra.mrb[0].mxu0 %v2916
        %v3065 = vpop.f32.mrb[0].mxu0
        %v3066 = vadd.f32 %v2962, %v3065
        %v3067 = vpop.f32.mrb[0].mxu0
        %3068 = vmatprep.mubr.f32.mxu0 0.0
        %3069 = vmatmul.mubr.f32.gmra.mrb[0].mxu0 %v2917
        %v3070 = vpop.f32.mrb[0].mxu0
        %v3071 = vadd.f32 %v2962, %v3070
        %v3072 = vpop.f32.mrb[0].mxu0
        %3073 = vmatprep.mubr.f32.mxu0 0.0
        %3074 = vmatmul.mubr.f32.gmra.mrb[0].mxu0 %v2918
        %v3075 = vpop.f32.mrb[0].mxu0
        %v3076 = vadd.f32 %v2962, %v3075
        %v3077 = vpop.f32.mrb[0].mxu0
        %3078 = vmatprep.mubr.f32.mxu0 0.0
        %3079 = vmatmul.mubr.f32.gmra.mrb[0].mxu0 %v2919
        %v3080 = vpop.f32.mrb[0].mxu0
        %v3081 = vadd.f32 %v2962, %v3080
        %v3082 = vpop.f32.mrb[0].mxu0
        %3083 = vmatprep.mubr.f32.mxu0 0.0
        %3084 = vmatmul.mubr.f32.gmra.mrb[0].mxu0 %v2920
        %v3085 = vpop.f32.mrb[0].mxu0
        %v3086 = vadd.f32 %v2962, %v3085
        %v3087 = vpop.f32.mrb[0].mxu0
        %3088 = vmatprep.mubr.f32.mxu0 0.0
        %3089 = vmatmul.mubr.f32.gmra.mrb[0].mxu0 %v2921
        %v3090 = vpop.f32.mrb[0].mxu0
        %v3091 = vadd.f32 %v2962, %v3090
        %v3092 = vpop.f32.mrb[0].mxu0
        %3093 = vmatprep.mubr.f32.mxu0 0.0
        %3094 = vmatmul.mubr.f32.gmra.mrb[0].mxu0 %v2922
        %v3095 = vpop.f32.mrb[0].mxu0
        %v3096 = vadd.f32 %v2962, %v3095
        %v3097 = vpop.f32.mrb[0].mxu0
        %3098 = vmatprep.mubr.f32.mxu0 0.0
        %3099 = vmatmul.mubr.f32.gmra.mrb[0].mxu0 %v2923
        %v3100 = vpop.f32.mrb[0].mxu0
        %v3101 = vadd.f32 %v2962, %v3100
        %v3102 = vpop.f32.mrb[0].mxu0
        %3103 = vmatprep.mubr.f32.mxu0 0.0
        %3104 = vmatmul.mubr.f32.gmra.mrb[0].mxu0 %v2924
        %v3105 = vpop.f32.mrb[0].mxu0
        %v3106 = vadd.f32 %v2962, %v3105
        %v3107 = vpop.f32.mrb[0].mxu0
        %3108 = vmatprep.mubr.f32.mxu0 0.0
        %3109 = vmatmul.mubr.f32.gmra.mrb[0].mxu0 %v2925
        %v3110 = vpop.f32.mrb[0].mxu0
        %v3111 = vadd.f32 %v2962, %v3110
        %v3112 = vpop.f32.mrb[0].mxu0
        %3113 = vmatprep.mubr.f32.mxu0 0.0
        %3114 = vmatmul.mubr.f32.gmra.mrb[0].mxu0 %v2926
        %v3115 = vpop.f32.mrb[0].mxu0
        %v3116 = vadd.f32 %v2962, %v3115
        %v3117 = vpop.f32.mrb[0].mxu0
        %3118 = vmatprep.mubr.f32.mxu0 0.0
        %3119 = vmatmul.mubr.f32.gmra.mrb[0].mxu0 %v2927
        %v3120 = vpop.f32.mrb[0].mxu0
        %v3121 = vadd.f32 %v2962, %v3120
        %v3122 = vpop.f32.mrb[0].mxu0
        %3123 = vmatprep.mubr.f32.mxu0 0.0
        %3124 = vmatmul.mubr.f32.gmra.mrb[0].mxu0 %v2928
        %v3125 = vpop.f32.mrb[0].mxu0
        %v3126 = vadd.f32 %v2962, %v3125
        %v3127 = vpop.f32.mrb[0].mxu0
        %3128 = vmatprep.mubr.f32.mxu0 0.0
        %3129 = vmatmul.mubr.f32.gmra.mrb[0].mxu0 %v2929
        %v3130 = vpop.f32.mrb[0].mxu0
        %v3131 = vadd.f32 %v2962, %v3130
        %v3132 = vpop.f32.mrb[0].mxu0
        %3133 = vmatprep.mubr.f32.mxu0 0.0
        %3134 = vmatmul.mubr.f32.gmra.mrb[0].mxu0 %v2930
        %v3135 = vpop.f32.mrb[0].mxu0
        %v3136 = vadd.f32 %v2962, %v3135
        %v3137 = vpop.f32.mrb[0].mxu0
        %3138 = vmatprep.mubr.f32.mxu0 0.0
        %3139 = vmatmul.mubr.f32.gmra.mrb[0].mxu0 %v2931
        %v3140 = vpop.f32.mrb[0].mxu0
        %v3141 = vadd.f32 %v2962, %v3140
        %v3142 = vpop.f32.mrb[0].mxu0
        %3143 = vmatprep.mubr.f32.mxu0 0.0
        %3144 = vmatmul.mubr.f32.gmra.mrb[0].mxu0 %v2932
        %v3145 = vpop.f32.mrb[0].mxu0
        %v3146 = vadd.f32 %v2962, %v3145
        %v3147 = vpop.f32.mrb[0].mxu0
        %3148 = vmatprep.mubr.f32.mxu0 0.0
        %3149 = vmatmul.mubr.f32.gmra.mrb[0].mxu0 %v2933
        %v3150 = vpop.f32.mrb[0].mxu0
        %v3151 = vadd.f32 %v2962, %v3150
        %v3152 = vpop.f32.mrb[0].mxu0
        %3153 = vmatprep.mubr.f32.mxu0 0.0
        %3154 = vmatmul.mubr.f32.gmra.mrb[0].mxu0 %v2934
        %v3155 = vpop.f32.mrb[0].mxu0
        %v3156 = vadd.f32 %v2962, %v3155
        %v3157 = vpop.f32.mrb[0].mxu0
        %3158 = vmatprep.mubr.f32.mxu0 0.0
        %3159 = vmatmul.mubr.f32.gmra.mrb[0].mxu0 %v2935
        %v3160 = vpop.f32.mrb[0].mxu0
        %v3161 = vadd.f32 %v2962, %v3160
        %v3162 = vpop.f32.mrb[0].mxu0
        %3163 = vmatprep.mubr.f32.mxu0 0.0
        %3164 = vmatmul.mubr.f32.gmra.mrb[0].mxu0 %v2936
        %v3165 = vpop.f32.mrb[0].mxu0
        %v3166 = vadd.f32 %v2962, %v3165
        %v3167 = vpop.f32.mrb[0].mxu0
        %3168 = vmatprep.mubr.f32.mxu0 0.0
        %3169 = vmatmul.mubr.f32.gmra.mrb[0].mxu0 %v2937
        %v3170 = vpop.f32.mrb[0].mxu0
        %v3171 = vadd.f32 %v2962, %v3170
        %v3172 = vpop.f32.mrb[0].mxu0
        %3173 = vmatprep.mubr.f32.mxu0 0.0
        %3174 = vmatmul.mubr.f32.gmra.mrb[0].mxu0 %v2938
        %v3175 = vpop.f32.mrb[0].mxu0
        %v3176 = vadd.f32 %v2962, %v3175
        %v3177 = vpop.f32.mrb[0].mxu0
        %3178 = vmatprep.mubr.f32.mxu0 0.0
        %3179 = vmatmul.mubr.f32.gmra.mrb[0].mxu0 %v2939
        %v3180 = vpop.f32.mrb[0].mxu0
        %v3181 = vadd.f32 %v2962, %v3180
        %v3182 = vpop.f32.mrb[0].mxu0
        %3183 = vmatprep.mubr.f32.mxu0 0.0
        %3184 = vmatmul.mubr.f32.gmra.mrb[0].mxu0 %v2940
        %v3185 = vpop.f32.mrb[0].mxu0
        %v3186 = vadd.f32 %v2962, %v3185
        %v3187 = vpop.f32.mrb[0].mxu0
        %3188 = vdwg.mxu0
        %v3189 = vmax.f32 %v3031, 0.0
        %v3190 = vmax.f32 %v3036, 0.0
        %v3191 = vmax.f32 %v3041, 0.0
        %v3192 = vmax.f32 %v3046, 0.0
        %v3193 = vmax.f32 %v3051, 0.0
        %v3194 = vmax.f32 %v3056, 0.0
        %v3195 = vmax.f32 %v3061, 0.0
        %v3196 = vmax.f32 %v3066, 0.0
        %v3197 = vmax.f32 %v3071, 0.0
        %v3198 = vmax.f32 %v3076, 0.0
        %v3199 = vmax.f32 %v3081, 0.0
        %v3200 = vmax.f32 %v3086, 0.0
        %v3201 = vmax.f32 %v3091, 0.0
        %v3202 = vmax.f32 %v3096, 0.0
        %v3203 = vmax.f32 %v3101, 0.0
        %v3204 = vmax.f32 %v3106, 0.0
        %v3205 = vmax.f32 %v3111, 0.0
        %v3206 = vmax.f32 %v3116, 0.0
        %v3207 = vmax.f32 %v3121, 0.0
        %v3208 = vmax.f32 %v3126, 0.0
        %v3209 = vmax.f32 %v3131, 0.0
        %v3210 = vmax.f32 %v3136, 0.0
        %v3211 = vmax.f32 %v3141, 0.0
        %v3212 = vmax.f32 %v3146, 0.0
        %v3213 = vmax.f32 %v3151, 0.0
        %v3214 = vmax.f32 %v3156, 0.0
        %v3215 = vmax.f32 %v3161, 0.0
        %v3216 = vmax.f32 %v3166, 0.0
        %v3217 = vmax.f32 %v3171, 0.0
        %v3218 = vmax.f32 %v3176, 0.0
        %v3219 = vmax.f32 %v3181, 0.0
        %v3220 = vmax.f32 %v3186, 0.0
        %v3221 = vld [vmem:[#allocation17] sm:$0xff]
        %v3222 = vld [vmem:[#allocation17 + $0x8] sm:$0xff]
        %v3223 = vld [vmem:[#allocation17 + $0x10] sm:$0xff]
        %v3224 = vld [vmem:[#allocation17 + $0x18] sm:$0xff]
        %v3225 = vld [vmem:[#allocation17 + $0x20] sm:$0xff]
        %v3226 = vld [vmem:[#allocation17 + $0x28] sm:$0xff]
        %v3227 = vld [vmem:[#allocation17 + $0x30] sm:$0xff]
        %v3228 = vld [vmem:[#allocation17 + $0x38] sm:$0xff]
        %v3229 = vld [vmem:[#allocation17 + $0x40] sm:$0xff]
        %v3230 = vld [vmem:[#allocation17 + $0x48] sm:$0xff]
        %v3231 = vld [vmem:[#allocation17 + $0x50] sm:$0xff]
        %v3232 = vld [vmem:[#allocation17 + $0x58] sm:$0xff]
        %v3233 = vld [vmem:[#allocation17 + $0x60] sm:$0xff]
        %v3234 = vld [vmem:[#allocation17 + $0x68] sm:$0xff]
        %v3235 = vld [vmem:[#allocation17 + $0x70] sm:$0xff]
        %v3236 = vld [vmem:[#allocation17 + $0x78] sm:$0xff]
        %v3237 = vld [vmem:[%s12] sm:$0x1]
        %v3239 = vlaneseq
        %v3240 = vshrl.u32 %v3239, 7
        %v3241 = vsub.s32 0, %v3240
        %v3242 = vrot.slane %v3237, %v3241
        %3244 = vmatprep.subr.mxu0 0.0
        %3245 = vmatpush1.msra.mxu0 %v3221
        %3246 = vmatprep.subr.mxu0 0.0
        %3247 = vmatpush1.msra.mxu0 %v3222
        %3248 = vmatprep.subr.mxu0 0.0
        %3249 = vmatpush1.msra.mxu0 %v3223
        %3250 = vmatprep.subr.mxu0 0.0
        %3251 = vmatpush1.msra.mxu0 %v3224
        %3252 = vmatprep.subr.mxu0 0.0
        %3253 = vmatpush1.msra.mxu0 %v3225
        %3254 = vmatprep.subr.mxu0 0.0
        %3255 = vmatpush1.msra.mxu0 %v3226
        %3256 = vmatprep.subr.mxu0 0.0
        %3257 = vmatpush1.msra.mxu0 %v3227
        %3258 = vmatprep.subr.mxu0 0.0
        %3259 = vmatpush1.msra.mxu0 %v3228
        %3260 = vmatprep.subr.mxu0 0.0
        %3261 = vmatpush1.msra.mxu0 %v3229
        %3262 = vmatprep.subr.mxu0 0.0
        %3263 = vmatpush1.msra.mxu0 %v3230
        %3264 = vmatprep.subr.mxu0 0.0
        %3265 = vmatpush1.msra.mxu0 %v3231
        %3266 = vmatprep.subr.mxu0 0.0
        %3267 = vmatpush1.msra.mxu0 %v3232
        %3268 = vmatprep.subr.mxu0 0.0
        %3269 = vmatpush1.msra.mxu0 %v3233
        %3270 = vmatprep.subr.mxu0 0.0
        %3271 = vmatpush1.msra.mxu0 %v3234
        %3272 = vmatprep.subr.mxu0 0.0
        %3273 = vmatpush1.msra.mxu0 %v3235
        %3274 = vmatprep.subr.mxu0 0.0
        %3275 = vmatpush1.msra.mxu0 %v3236
        %3276 = vmatprep.subr.mxu0 0.0
        %3277 = vmatpush1.msra.mxu0 0.0
        %3278 = vmatprep.subr.mxu0 0.0
        %3279 = vmatpush1.msra.mxu0 0.0
        %3280 = vmatprep.subr.mxu0 0.0
        %3281 = vmatpush1.msra.mxu0 0.0
        %3282 = vmatprep.subr.mxu0 0.0
        %3283 = vmatpush1.msra.mxu0 0.0
        %3284 = vmatprep.subr.mxu0 0.0
        %3285 = vmatpush1.msra.mxu0 0.0
        %3286 = vmatprep.subr.mxu0 0.0
        %3287 = vmatpush1.msra.mxu0 0.0
        %3288 = vmatprep.subr.mxu0 0.0
        %3289 = vmatpush1.msra.mxu0 0.0
        %3290 = vmatprep.subr.mxu0 0.0
        %3291 = vmatpush1.msra.mxu0 0.0
        %3292 = vmatprep.subr.mxu0 0.0
        %3293 = vmatpush1.msra.mxu0 0.0
        %3294 = vmatprep.subr.mxu0 0.0
        %3295 = vmatpush1.msra.mxu0 0.0
        %3296 = vmatprep.subr.mxu0 0.0
        %3297 = vmatpush1.msra.mxu0 0.0
        %3298 = vmatprep.subr.mxu0 0.0
        %3299 = vmatpush1.msra.mxu0 0.0
        %3300 = vmatprep.subr.mxu0 0.0
        %3301 = vmatpush1.msra.mxu0 0.0
        %3302 = vmatprep.subr.mxu0 0.0
        %3303 = vmatpush1.msra.mxu0 0.0
        %3304 = vmatprep.subr.mxu0 0.0
        %3305 = vmatpush1.msra.mxu0 0.0
        %3306 = vmatprep.subr.mxu0 0.0
        %3307 = vmatpush1.msra.mxu0 0.0
        %3308 = vmatprep.mubr.f32.mxu0 0.0
        %3309 = vmatmul.mubr.f32.gmra.mrb[0].mxu0 %v3189
        %v3310 = vpop.f32.mrb[0].mxu0
        %v3311 = vadd.f32 %v3242, %v3310
        %v3312 = vpop.f32.mrb[0].mxu0
        %3313 = vmatprep.mubr.f32.mxu0 0.0
        %3314 = vmatmul.mubr.f32.gmra.mrb[0].mxu0 %v3190
        %v3315 = vpop.f32.mrb[0].mxu0
        %v3316 = vadd.f32 %v3242, %v3315
        %v3317 = vpop.f32.mrb[0].mxu0
        %3318 = vmatprep.mubr.f32.mxu0 0.0
        %3319 = vmatmul.mubr.f32.gmra.mrb[0].mxu0 %v3191
        %v3320 = vpop.f32.mrb[0].mxu0
        %v3321 = vadd.f32 %v3242, %v3320
        %v3322 = vpop.f32.mrb[0].mxu0
        %3323 = vmatprep.mubr.f32.mxu0 0.0
        %3324 = vmatmul.mubr.f32.gmra.mrb[0].mxu0 %v3192
        %v3325 = vpop.f32.mrb[0].mxu0
        %v3326 = vadd.f32 %v3242, %v3325
        %v3327 = vpop.f32.mrb[0].mxu0
        %3328 = vmatprep.mubr.f32.mxu0 0.0
        %3329 = vmatmul.mubr.f32.gmra.mrb[0].mxu0 %v3193
        %v3330 = vpop.f32.mrb[0].mxu0
        %v3331 = vadd.f32 %v3242, %v3330
        %v3332 = vpop.f32.mrb[0].mxu0
        %3333 = vmatprep.mubr.f32.mxu0 0.0
        %3334 = vmatmul.mubr.f32.gmra.mrb[0].mxu0 %v3194
        %v3335 = vpop.f32.mrb[0].mxu0
        %v3336 = vadd.f32 %v3242, %v3335
        %v3337 = vpop.f32.mrb[0].mxu0
        %3338 = vmatprep.mubr.f32.mxu0 0.0
        %3339 = vmatmul.mubr.f32.gmra.mrb[0].mxu0 %v3195
        %v3340 = vpop.f32.mrb[0].mxu0
        %v3341 = vadd.f32 %v3242, %v3340
        %v3342 = vpop.f32.mrb[0].mxu0
        %3343 = vmatprep.mubr.f32.mxu0 0.0
        %3344 = vmatmul.mubr.f32.gmra.mrb[0].mxu0 %v3196
        %v3345 = vpop.f32.mrb[0].mxu0
        %v3346 = vadd.f32 %v3242, %v3345
        %v3347 = vpop.f32.mrb[0].mxu0
        %3348 = vmatprep.mubr.f32.mxu0 0.0
        %3349 = vmatmul.mubr.f32.gmra.mrb[0].mxu0 %v3197
        %v3350 = vpop.f32.mrb[0].mxu0
        %v3351 = vadd.f32 %v3242, %v3350
        %v3352 = vpop.f32.mrb[0].mxu0
        %3353 = vmatprep.mubr.f32.mxu0 0.0
        %3354 = vmatmul.mubr.f32.gmra.mrb[0].mxu0 %v3198
        %v3355 = vpop.f32.mrb[0].mxu0
        %v3356 = vadd.f32 %v3242, %v3355
        %v3357 = vpop.f32.mrb[0].mxu0
        %3358 = vmatprep.mubr.f32.mxu0 0.0
        %3359 = vmatmul.mubr.f32.gmra.mrb[0].mxu0 %v3199
        %v3360 = vpop.f32.mrb[0].mxu0
        %v3361 = vadd.f32 %v3242, %v3360
        %v3362 = vpop.f32.mrb[0].mxu0
        %3363 = vmatprep.mubr.f32.mxu0 0.0
        %3364 = vmatmul.mubr.f32.gmra.mrb[0].mxu0 %v3200
        %v3365 = vpop.f32.mrb[0].mxu0
        %v3366 = vadd.f32 %v3242, %v3365
        %v3367 = vpop.f32.mrb[0].mxu0
        %3368 = vmatprep.mubr.f32.mxu0 0.0
        %3369 = vmatmul.mubr.f32.gmra.mrb[0].mxu0 %v3201
        %v3370 = vpop.f32.mrb[0].mxu0
        %v3371 = vadd.f32 %v3242, %v3370
        %v3372 = vpop.f32.mrb[0].mxu0
        %3373 = vmatprep.mubr.f32.mxu0 0.0
        %3374 = vmatmul.mubr.f32.gmra.mrb[0].mxu0 %v3202
        %v3375 = vpop.f32.mrb[0].mxu0
        %v3376 = vadd.f32 %v3242, %v3375
        %v3377 = vpop.f32.mrb[0].mxu0
        %3378 = vmatprep.mubr.f32.mxu0 0.0
        %3379 = vmatmul.mubr.f32.gmra.mrb[0].mxu0 %v3203
        %v3380 = vpop.f32.mrb[0].mxu0
        %v3381 = vadd.f32 %v3242, %v3380
        %v3382 = vpop.f32.mrb[0].mxu0
        %3383 = vmatprep.mubr.f32.mxu0 0.0
        %3384 = vmatmul.mubr.f32.gmra.mrb[0].mxu0 %v3204
        %v3385 = vpop.f32.mrb[0].mxu0
        %v3386 = vadd.f32 %v3242, %v3385
        %v3387 = vpop.f32.mrb[0].mxu0
        %3388 = vmatprep.mubr.f32.mxu0 0.0
        %3389 = vmatmul.mubr.f32.gmra.mrb[0].mxu0 %v3205
        %v3390 = vpop.f32.mrb[0].mxu0
        %v3391 = vadd.f32 %v3242, %v3390
        %v3392 = vpop.f32.mrb[0].mxu0
        %3393 = vmatprep.mubr.f32.mxu0 0.0
        %3394 = vmatmul.mubr.f32.gmra.mrb[0].mxu0 %v3206
        %v3395 = vpop.f32.mrb[0].mxu0
        %v3396 = vadd.f32 %v3242, %v3395
        %v3397 = vpop.f32.mrb[0].mxu0
        %3398 = vmatprep.mubr.f32.mxu0 0.0
        %3399 = vmatmul.mubr.f32.gmra.mrb[0].mxu0 %v3207
        %v3400 = vpop.f32.mrb[0].mxu0
        %v3401 = vadd.f32 %v3242, %v3400
        %v3402 = vpop.f32.mrb[0].mxu0
        %3403 = vmatprep.mubr.f32.mxu0 0.0
        %3404 = vmatmul.mubr.f32.gmra.mrb[0].mxu0 %v3208
        %v3405 = vpop.f32.mrb[0].mxu0
        %v3406 = vadd.f32 %v3242, %v3405
        %v3407 = vpop.f32.mrb[0].mxu0
        %3408 = vmatprep.mubr.f32.mxu0 0.0
        %3409 = vmatmul.mubr.f32.gmra.mrb[0].mxu0 %v3209
        %v3410 = vpop.f32.mrb[0].mxu0
        %v3411 = vadd.f32 %v3242, %v3410
        %v3412 = vpop.f32.mrb[0].mxu0
        %3413 = vmatprep.mubr.f32.mxu0 0.0
        %3414 = vmatmul.mubr.f32.gmra.mrb[0].mxu0 %v3210
        %v3415 = vpop.f32.mrb[0].mxu0
        %v3416 = vadd.f32 %v3242, %v3415
        %v3417 = vpop.f32.mrb[0].mxu0
        %3418 = vmatprep.mubr.f32.mxu0 0.0
        %3419 = vmatmul.mubr.f32.gmra.mrb[0].mxu0 %v3211
        %v3420 = vpop.f32.mrb[0].mxu0
        %v3421 = vadd.f32 %v3242, %v3420
        %v3422 = vpop.f32.mrb[0].mxu0
        %3423 = vmatprep.mubr.f32.mxu0 0.0
        %3424 = vmatmul.mubr.f32.gmra.mrb[0].mxu0 %v3212
        %v3425 = vpop.f32.mrb[0].mxu0
        %v3426 = vadd.f32 %v3242, %v3425
        %v3427 = vpop.f32.mrb[0].mxu0
        %3428 = vmatprep.mubr.f32.mxu0 0.0
        %3429 = vmatmul.mubr.f32.gmra.mrb[0].mxu0 %v3213
        %v3430 = vpop.f32.mrb[0].mxu0
        %v3431 = vadd.f32 %v3242, %v3430
        %v3432 = vpop.f32.mrb[0].mxu0
        %3433 = vmatprep.mubr.f32.mxu0 0.0
        %3434 = vmatmul.mubr.f32.gmra.mrb[0].mxu0 %v3214
        %v3435 = vpop.f32.mrb[0].mxu0
        %v3436 = vadd.f32 %v3242, %v3435
        %v3437 = vpop.f32.mrb[0].mxu0
        %3438 = vmatprep.mubr.f32.mxu0 0.0
        %3439 = vmatmul.mubr.f32.gmra.mrb[0].mxu0 %v3215
        %v3440 = vpop.f32.mrb[0].mxu0
        %v3441 = vadd.f32 %v3242, %v3440
        %v3442 = vpop.f32.mrb[0].mxu0
        %3443 = vmatprep.mubr.f32.mxu0 0.0
        %3444 = vmatmul.mubr.f32.gmra.mrb[0].mxu0 %v3216
        %v3445 = vpop.f32.mrb[0].mxu0
        %v3446 = vadd.f32 %v3242, %v3445
        %v3447 = vpop.f32.mrb[0].mxu0
        %3448 = vmatprep.mubr.f32.mxu0 0.0
        %3449 = vmatmul.mubr.f32.gmra.mrb[0].mxu0 %v3217
        %v3450 = vpop.f32.mrb[0].mxu0
        %v3451 = vadd.f32 %v3242, %v3450
        %v3452 = vpop.f32.mrb[0].mxu0
        %3453 = vmatprep.mubr.f32.mxu0 0.0
        %3454 = vmatmul.mubr.f32.gmra.mrb[0].mxu0 %v3218
        %v3455 = vpop.f32.mrb[0].mxu0
        %v3456 = vadd.f32 %v3242, %v3455
        %v3457 = vpop.f32.mrb[0].mxu0
        %3458 = vmatprep.mubr.f32.mxu0 0.0
        %3459 = vmatmul.mubr.f32.gmra.mrb[0].mxu0 %v3219
        %v3460 = vpop.f32.mrb[0].mxu0
        %v3461 = vadd.f32 %v3242, %v3460
        %v3462 = vpop.f32.mrb[0].mxu0
        %3463 = vmatprep.mubr.f32.mxu0 0.0
        %3464 = vmatmul.mubr.f32.gmra.mrb[0].mxu0 %v3220
        %v3465 = vpop.f32.mrb[0].mxu0
        %v3466 = vadd.f32 %v3242, %v3465
        %v3467 = vpop.f32.mrb[0].mxu0
        %3468 = vdwg.mxu0
        %v3469 = vstv %s2270
        %v3470 = vmul.f32 %v3311, %v3469
        %v3471 = vmul.f32 %v3316, %v3469
        %v3472 = vmul.f32 %v3321, %v3469
        %v3473 = vmul.f32 %v3326, %v3469
        %v3474 = vmul.f32 %v3331, %v3469
        %v3475 = vmul.f32 %v3336, %v3469
        %v3476 = vmul.f32 %v3341, %v3469
        %v3477 = vmul.f32 %v3346, %v3469
        %v3478 = vmul.f32 %v3351, %v3469
        %v3479 = vmul.f32 %v3356, %v3469
        %v3480 = vmul.f32 %v3361, %v3469
        %v3481 = vmul.f32 %v3366, %v3469
        %v3482 = vmul.f32 %v3371, %v3469
        %v3483 = vmul.f32 %v3376, %v3469
        %v3484 = vmul.f32 %v3381, %v3469
        %v3485 = vmul.f32 %v3386, %v3469
        %v3486 = vmul.f32 %v3391, %v3469
        %v3487 = vmul.f32 %v3396, %v3469
        %v3488 = vmul.f32 %v3401, %v3469
        %v3489 = vmul.f32 %v3406, %v3469
        %v3490 = vmul.f32 %v3411, %v3469
        %v3491 = vmul.f32 %v3416, %v3469
        %v3492 = vmul.f32 %v3421, %v3469
        %v3493 = vmul.f32 %v3426, %v3469
        %v3494 = vmul.f32 %v3431, %v3469
        %v3495 = vmul.f32 %v3436, %v3469
        %v3496 = vmul.f32 %v3441, %v3469
        %v3497 = vmul.f32 %v3446, %v3469
        %v3498 = vmul.f32 %v3451, %v3469
        %v3499 = vmul.f32 %v3456, %v3469
        %v3500 = vmul.f32 %v3461, %v3469
        %v3501 = vmul.f32 %v3466, %v3469
        %v3502 = vadd.f32 %v3470, %v2673
        %v3503 = vadd.f32 %v3471, %v2678
        %v3504 = vadd.f32 %v3472, %v2683
        %v3505 = vadd.f32 %v3473, %v2688
        %v3506 = vadd.f32 %v3474, %v2693
        %v3507 = vadd.f32 %v3475, %v2698
        %v3508 = vadd.f32 %v3476, %v2703
        %v3509 = vadd.f32 %v3477, %v2708
        %v3510 = vadd.f32 %v3478, %v2713
        %v3511 = vadd.f32 %v3479, %v2718
        %v3512 = vadd.f32 %v3480, %v2723
        %v3513 = vadd.f32 %v3481, %v2728
        %v3514 = vadd.f32 %v3482, %v2733
        %v3515 = vadd.f32 %v3483, %v2738
        %v3516 = vadd.f32 %v3484, %v2743
        %v3517 = vadd.f32 %v3485, %v2748
        %v3518 = vadd.f32 %v3486, %v2753
        %v3519 = vadd.f32 %v3487, %v2758
        %v3520 = vadd.f32 %v3488, %v2763
        %v3521 = vadd.f32 %v3489, %v2768
        %v3522 = vadd.f32 %v3490, %v2773
        %v3523 = vadd.f32 %v3491, %v2778
        %v3524 = vadd.f32 %v3492, %v2783
        %v3525 = vadd.f32 %v3493, %v2788
        %v3526 = vadd.f32 %v3494, %v2793
        %v3527 = vadd.f32 %v3495, %v2798
        %v3528 = vadd.f32 %v3496, %v2803
        %v3529 = vadd.f32 %v3497, %v2808
        %v3530 = vadd.f32 %v3498, %v2813
        %v3531 = vadd.f32 %v3499, %v2818
        %v3532 = vadd.f32 %v3500, %v2823
        %v3533 = vadd.f32 %v3501, %v2828
        %v3534 = vld [vmem:[#allocation18] sm:$0xff]
        %v3535 = vld [vmem:[#allocation18 + $0x8] sm:$0xff]
        %v3536 = vld [vmem:[#allocation18 + $0x10] sm:$0xff]
        %v3537 = vld [vmem:[#allocation18 + $0x18] sm:$0xff]
        %v3538 = vld [vmem:[#allocation18 + $0x20] sm:$0xff]
        %v3539 = vld [vmem:[#allocation18 + $0x28] sm:$0xff]
        %v3540 = vld [vmem:[#allocation18 + $0x30] sm:$0xff]
        %v3541 = vld [vmem:[#allocation18 + $0x38] sm:$0xff]
        %v3542 = vld [vmem:[#allocation18 + $0x40] sm:$0xff]
        %v3543 = vld [vmem:[#allocation18 + $0x48] sm:$0xff]
        %v3544 = vld [vmem:[#allocation18 + $0x50] sm:$0xff]
        %v3545 = vld [vmem:[#allocation18 + $0x58] sm:$0xff]
        %v3546 = vld [vmem:[#allocation18 + $0x60] sm:$0xff]
        %v3547 = vld [vmem:[#allocation18 + $0x68] sm:$0xff]
        %v3548 = vld [vmem:[#allocation18 + $0x70] sm:$0xff]
        %v3549 = vld [vmem:[#allocation18 + $0x78] sm:$0xff]
        %v3550 = vld [vmem:[%s14] sm:$0x1]
        %v3552 = vlaneseq
        %v3553 = vshrl.u32 %v3552, 7
        %v3554 = vsub.s32 0, %v3553
        %v3555 = vrot.slane %v3550, %v3554
        %3557 = vmatprep.subr.mxu0 0.0
        %3558 = vmatpush1.msra.mxu0 %v3534
        %3559 = vmatprep.subr.mxu0 0.0
        %3560 = vmatpush1.msra.mxu0 %v3535
        %3561 = vmatprep.subr.mxu0 0.0
        %3562 = vmatpush1.msra.mxu0 %v3536
        %3563 = vmatprep.subr.mxu0 0.0
        %3564 = vmatpush1.msra.mxu0 %v3537
        %3565 = vmatprep.subr.mxu0 0.0
        %3566 = vmatpush1.msra.mxu0 %v3538
        %3567 = vmatprep.subr.mxu0 0.0
        %3568 = vmatpush1.msra.mxu0 %v3539
        %3569 = vmatprep.subr.mxu0 0.0
        %3570 = vmatpush1.msra.mxu0 %v3540
        %3571 = vmatprep.subr.mxu0 0.0
        %3572 = vmatpush1.msra.mxu0 %v3541
        %3573 = vmatprep.subr.mxu0 0.0
        %3574 = vmatpush1.msra.mxu0 %v3542
        %3575 = vmatprep.subr.mxu0 0.0
        %3576 = vmatpush1.msra.mxu0 %v3543
        %3577 = vmatprep.subr.mxu0 0.0
        %3578 = vmatpush1.msra.mxu0 %v3544
        %3579 = vmatprep.subr.mxu0 0.0
        %3580 = vmatpush1.msra.mxu0 %v3545
        %3581 = vmatprep.subr.mxu0 0.0
        %3582 = vmatpush1.msra.mxu0 %v3546
        %3583 = vmatprep.subr.mxu0 0.0
        %3584 = vmatpush1.msra.mxu0 %v3547
        %3585 = vmatprep.subr.mxu0 0.0
        %3586 = vmatpush1.msra.mxu0 %v3548
        %3587 = vmatprep.subr.mxu0 0.0
        %3588 = vmatpush1.msra.mxu0 %v3549
        %3589 = vmatprep.subr.mxu0 0.0
        %3590 = vmatpush1.msra.mxu0 0.0
        %3591 = vmatprep.subr.mxu0 0.0
        %3592 = vmatpush1.msra.mxu0 0.0
        %3593 = vmatprep.subr.mxu0 0.0
        %3594 = vmatpush1.msra.mxu0 0.0
        %3595 = vmatprep.subr.mxu0 0.0
        %3596 = vmatpush1.msra.mxu0 0.0
        %3597 = vmatprep.subr.mxu0 0.0
        %3598 = vmatpush1.msra.mxu0 0.0
        %3599 = vmatprep.subr.mxu0 0.0
        %3600 = vmatpush1.msra.mxu0 0.0
        %3601 = vmatprep.subr.mxu0 0.0
        %3602 = vmatpush1.msra.mxu0 0.0
        %3603 = vmatprep.subr.mxu0 0.0
        %3604 = vmatpush1.msra.mxu0 0.0
        %3605 = vmatprep.subr.mxu0 0.0
        %3606 = vmatpush1.msra.mxu0 0.0
        %3607 = vmatprep.subr.mxu0 0.0
        %3608 = vmatpush1.msra.mxu0 0.0
        %3609 = vmatprep.subr.mxu0 0.0
        %3610 = vmatpush1.msra.mxu0 0.0
        %3611 = vmatprep.subr.mxu0 0.0
        %3612 = vmatpush1.msra.mxu0 0.0
        %3613 = vmatprep.subr.mxu0 0.0
        %3614 = vmatpush1.msra.mxu0 0.0
        %3615 = vmatprep.subr.mxu0 0.0
        %3616 = vmatpush1.msra.mxu0 0.0
        %3617 = vmatprep.subr.mxu0 0.0
        %3618 = vmatpush1.msra.mxu0 0.0
        %3619 = vmatprep.subr.mxu0 0.0
        %3620 = vmatpush1.msra.mxu0 0.0
        %3621 = vmatprep.mubr.f32.mxu0 0.0
        %3622 = vmatmul.mubr.f32.gmra.mrb[0].mxu0 %v3502
        %v3623 = vpop.f32.mrb[0].mxu0
        %v3624 = vadd.f32 %v3555, %v3623
        %v3625 = vpop.f32.mrb[0].mxu0
        %3626 = vmatprep.mubr.f32.mxu0 0.0
        %3627 = vmatmul.mubr.f32.gmra.mrb[0].mxu0 %v3503
        %v3628 = vpop.f32.mrb[0].mxu0
        %v3629 = vadd.f32 %v3555, %v3628
        %v3630 = vpop.f32.mrb[0].mxu0
        %3631 = vmatprep.mubr.f32.mxu0 0.0
        %3632 = vmatmul.mubr.f32.gmra.mrb[0].mxu0 %v3504
        %v3633 = vpop.f32.mrb[0].mxu0
        %v3634 = vadd.f32 %v3555, %v3633
        %v3635 = vpop.f32.mrb[0].mxu0
        %3636 = vmatprep.mubr.f32.mxu0 0.0
        %3637 = vmatmul.mubr.f32.gmra.mrb[0].mxu0 %v3505
        %v3638 = vpop.f32.mrb[0].mxu0
        %v3639 = vadd.f32 %v3555, %v3638
        %v3640 = vpop.f32.mrb[0].mxu0
        %3641 = vmatprep.mubr.f32.mxu0 0.0
        %3642 = vmatmul.mubr.f32.gmra.mrb[0].mxu0 %v3506
        %v3643 = vpop.f32.mrb[0].mxu0
        %v3644 = vadd.f32 %v3555, %v3643
        %v3645 = vpop.f32.mrb[0].mxu0
        %3646 = vmatprep.mubr.f32.mxu0 0.0
        %3647 = vmatmul.mubr.f32.gmra.mrb[0].mxu0 %v3507
        %v3648 = vpop.f32.mrb[0].mxu0
        %v3649 = vadd.f32 %v3555, %v3648
        %v3650 = vpop.f32.mrb[0].mxu0
        %3651 = vmatprep.mubr.f32.mxu0 0.0
        %3652 = vmatmul.mubr.f32.gmra.mrb[0].mxu0 %v3508
        %v3653 = vpop.f32.mrb[0].mxu0
        %v3654 = vadd.f32 %v3555, %v3653
        %v3655 = vpop.f32.mrb[0].mxu0
        %3656 = vmatprep.mubr.f32.mxu0 0.0
        %3657 = vmatmul.mubr.f32.gmra.mrb[0].mxu0 %v3509
        %v3658 = vpop.f32.mrb[0].mxu0
        %v3659 = vadd.f32 %v3555, %v3658
        %v3660 = vpop.f32.mrb[0].mxu0
        %3661 = vmatprep.mubr.f32.mxu0 0.0
        %3662 = vmatmul.mubr.f32.gmra.mrb[0].mxu0 %v3510
        %v3663 = vpop.f32.mrb[0].mxu0
        %v3664 = vadd.f32 %v3555, %v3663
        %v3665 = vpop.f32.mrb[0].mxu0
        %3666 = vmatprep.mubr.f32.mxu0 0.0
        %3667 = vmatmul.mubr.f32.gmra.mrb[0].mxu0 %v3511
        %v3668 = vpop.f32.mrb[0].mxu0
        %v3669 = vadd.f32 %v3555, %v3668
        %v3670 = vpop.f32.mrb[0].mxu0
        %3671 = vmatprep.mubr.f32.mxu0 0.0
        %3672 = vmatmul.mubr.f32.gmra.mrb[0].mxu0 %v3512
        %v3673 = vpop.f32.mrb[0].mxu0
        %v3674 = vadd.f32 %v3555, %v3673
        %v3675 = vpop.f32.mrb[0].mxu0
        %3676 = vmatprep.mubr.f32.mxu0 0.0
        %3677 = vmatmul.mubr.f32.gmra.mrb[0].mxu0 %v3513
        %v3678 = vpop.f32.mrb[0].mxu0
        %v3679 = vadd.f32 %v3555, %v3678
        %v3680 = vpop.f32.mrb[0].mxu0
        %3681 = vmatprep.mubr.f32.mxu0 0.0
        %3682 = vmatmul.mubr.f32.gmra.mrb[0].mxu0 %v3514
        %v3683 = vpop.f32.mrb[0].mxu0
        %v3684 = vadd.f32 %v3555, %v3683
        %v3685 = vpop.f32.mrb[0].mxu0
        %3686 = vmatprep.mubr.f32.mxu0 0.0
        %3687 = vmatmul.mubr.f32.gmra.mrb[0].mxu0 %v3515
        %v3688 = vpop.f32.mrb[0].mxu0
        %v3689 = vadd.f32 %v3555, %v3688
        %v3690 = vpop.f32.mrb[0].mxu0
        %3691 = vmatprep.mubr.f32.mxu0 0.0
        %3692 = vmatmul.mubr.f32.gmra.mrb[0].mxu0 %v3516
        %v3693 = vpop.f32.mrb[0].mxu0
        %v3694 = vadd.f32 %v3555, %v3693
        %v3695 = vpop.f32.mrb[0].mxu0
        %3696 = vmatprep.mubr.f32.mxu0 0.0
        %3697 = vmatmul.mubr.f32.gmra.mrb[0].mxu0 %v3517
        %v3698 = vpop.f32.mrb[0].mxu0
        %v3699 = vadd.f32 %v3555, %v3698
        %v3700 = vpop.f32.mrb[0].mxu0
        %3701 = vmatprep.mubr.f32.mxu0 0.0
        %3702 = vmatmul.mubr.f32.gmra.mrb[0].mxu0 %v3518
        %v3703 = vpop.f32.mrb[0].mxu0
        %v3704 = vadd.f32 %v3555, %v3703
        %v3705 = vpop.f32.mrb[0].mxu0
        %3706 = vmatprep.mubr.f32.mxu0 0.0
        %3707 = vmatmul.mubr.f32.gmra.mrb[0].mxu0 %v3519
        %v3708 = vpop.f32.mrb[0].mxu0
        %v3709 = vadd.f32 %v3555, %v3708
        %v3710 = vpop.f32.mrb[0].mxu0
        %3711 = vmatprep.mubr.f32.mxu0 0.0
        %3712 = vmatmul.mubr.f32.gmra.mrb[0].mxu0 %v3520
        %v3713 = vpop.f32.mrb[0].mxu0
        %v3714 = vadd.f32 %v3555, %v3713
        %v3715 = vpop.f32.mrb[0].mxu0
        %3716 = vmatprep.mubr.f32.mxu0 0.0
        %3717 = vmatmul.mubr.f32.gmra.mrb[0].mxu0 %v3521
        %v3718 = vpop.f32.mrb[0].mxu0
        %v3719 = vadd.f32 %v3555, %v3718
        %v3720 = vpop.f32.mrb[0].mxu0
        %3721 = vmatprep.mubr.f32.mxu0 0.0
        %3722 = vmatmul.mubr.f32.gmra.mrb[0].mxu0 %v3522
        %v3723 = vpop.f32.mrb[0].mxu0
        %v3724 = vadd.f32 %v3555, %v3723
        %v3725 = vpop.f32.mrb[0].mxu0
        %3726 = vmatprep.mubr.f32.mxu0 0.0
        %3727 = vmatmul.mubr.f32.gmra.mrb[0].mxu0 %v3523
        %v3728 = vpop.f32.mrb[0].mxu0
        %v3729 = vadd.f32 %v3555, %v3728
        %v3730 = vpop.f32.mrb[0].mxu0
        %3731 = vmatprep.mubr.f32.mxu0 0.0
        %3732 = vmatmul.mubr.f32.gmra.mrb[0].mxu0 %v3524
        %v3733 = vpop.f32.mrb[0].mxu0
        %v3734 = vadd.f32 %v3555, %v3733
        %v3735 = vpop.f32.mrb[0].mxu0
        %3736 = vmatprep.mubr.f32.mxu0 0.0
        %3737 = vmatmul.mubr.f32.gmra.mrb[0].mxu0 %v3525
        %v3738 = vpop.f32.mrb[0].mxu0
        %v3739 = vadd.f32 %v3555, %v3738
        %v3740 = vpop.f32.mrb[0].mxu0
        %3741 = vmatprep.mubr.f32.mxu0 0.0
        %3742 = vmatmul.mubr.f32.gmra.mrb[0].mxu0 %v3526
        %v3743 = vpop.f32.mrb[0].mxu0
        %v3744 = vadd.f32 %v3555, %v3743
        %v3745 = vpop.f32.mrb[0].mxu0
        %3746 = vmatprep.mubr.f32.mxu0 0.0
        %3747 = vmatmul.mubr.f32.gmra.mrb[0].mxu0 %v3527
        %v3748 = vpop.f32.mrb[0].mxu0
        %v3749 = vadd.f32 %v3555, %v3748
        %v3750 = vpop.f32.mrb[0].mxu0
        %3751 = vmatprep.mubr.f32.mxu0 0.0
        %3752 = vmatmul.mubr.f32.gmra.mrb[0].mxu0 %v3528
        %v3753 = vpop.f32.mrb[0].mxu0
        %v3754 = vadd.f32 %v3555, %v3753
        %v3755 = vpop.f32.mrb[0].mxu0
        %3756 = vmatprep.mubr.f32.mxu0 0.0
        %3757 = vmatmul.mubr.f32.gmra.mrb[0].mxu0 %v3529
        %v3758 = vpop.f32.mrb[0].mxu0
        %v3759 = vadd.f32 %v3555, %v3758
        %v3760 = vpop.f32.mrb[0].mxu0
        %3761 = vmatprep.mubr.f32.mxu0 0.0
        %3762 = vmatmul.mubr.f32.gmra.mrb[0].mxu0 %v3530
        %v3763 = vpop.f32.mrb[0].mxu0
        %v3764 = vadd.f32 %v3555, %v3763
        %v3765 = vpop.f32.mrb[0].mxu0
        %3766 = vmatprep.mubr.f32.mxu0 0.0
        %3767 = vmatmul.mubr.f32.gmra.mrb[0].mxu0 %v3531
        %v3768 = vpop.f32.mrb[0].mxu0
        %v3769 = vadd.f32 %v3555, %v3768
        %v3770 = vpop.f32.mrb[0].mxu0
        %3771 = vmatprep.mubr.f32.mxu0 0.0
        %3772 = vmatmul.mubr.f32.gmra.mrb[0].mxu0 %v3532
        %v3773 = vpop.f32.mrb[0].mxu0
        %v3774 = vadd.f32 %v3555, %v3773
        %v3775 = vpop.f32.mrb[0].mxu0
        %3776 = vmatprep.mubr.f32.mxu0 0.0
        %3777 = vmatmul.mubr.f32.gmra.mrb[0].mxu0 %v3533
        %v3778 = vpop.f32.mrb[0].mxu0
        %v3779 = vadd.f32 %v3555, %v3778
        %v3780 = vpop.f32.mrb[0].mxu0
        %3781 = vdwg.mxu0
        %v3782 = vmax.f32 %v3624, 0.0
        %v3783 = vmax.f32 %v3629, 0.0
        %v3784 = vmax.f32 %v3634, 0.0
        %v3785 = vmax.f32 %v3639, 0.0
        %v3786 = vmax.f32 %v3644, 0.0
        %v3787 = vmax.f32 %v3649, 0.0
        %v3788 = vmax.f32 %v3654, 0.0
        %v3789 = vmax.f32 %v3659, 0.0
        %v3790 = vmax.f32 %v3664, 0.0
        %v3791 = vmax.f32 %v3669, 0.0
        %v3792 = vmax.f32 %v3674, 0.0
        %v3793 = vmax.f32 %v3679, 0.0
        %v3794 = vmax.f32 %v3684, 0.0
        %v3795 = vmax.f32 %v3689, 0.0
        %v3796 = vmax.f32 %v3694, 0.0
        %v3797 = vmax.f32 %v3699, 0.0
        %v3798 = vmax.f32 %v3704, 0.0
        %v3799 = vmax.f32 %v3709, 0.0
        %v3800 = vmax.f32 %v3714, 0.0
        %v3801 = vmax.f32 %v3719, 0.0
        %v3802 = vmax.f32 %v3724, 0.0
        %v3803 = vmax.f32 %v3729, 0.0
        %v3804 = vmax.f32 %v3734, 0.0
        %v3805 = vmax.f32 %v3739, 0.0
        %v3806 = vmax.f32 %v3744, 0.0
        %v3807 = vmax.f32 %v3749, 0.0
        %v3808 = vmax.f32 %v3754, 0.0
        %v3809 = vmax.f32 %v3759, 0.0
        %v3810 = vmax.f32 %v3764, 0.0
        %v3811 = vmax.f32 %v3769, 0.0
        %v3812 = vmax.f32 %v3774, 0.0
        %v3813 = vmax.f32 %v3779, 0.0
        %v3814 = vld [vmem:[%s15] sm:$0xff]
        %v3815 = vld [vmem:[%s15 + $0x8] sm:$0xff]
        %v3816 = vld [vmem:[%s15 + $0x10] sm:$0xff]
        %v3817 = vld [vmem:[%s15 + $0x18] sm:$0xff]
        %v3818 = vld [vmem:[%s15 + $0x20] sm:$0xff]
        %v3819 = vld [vmem:[%s15 + $0x28] sm:$0xff]
        %v3820 = vld [vmem:[%s15 + $0x30] sm:$0xff]
        %v3821 = vld [vmem:[%s15 + $0x38] sm:$0xff]
        %v3822 = vld [vmem:[%s15 + $0x40] sm:$0xff]
        %v3823 = vld [vmem:[%s15 + $0x48] sm:$0xff]
        %v3824 = vld [vmem:[%s15 + $0x50] sm:$0xff]
        %v3825 = vld [vmem:[%s15 + $0x58] sm:$0xff]
        %v3826 = vld [vmem:[%s15 + $0x60] sm:$0xff]
        %v3827 = vld [vmem:[%s15 + $0x68] sm:$0xff]
        %v3828 = vld [vmem:[%s15 + $0x70] sm:$0xff]
        %v3829 = vld [vmem:[%s15 + $0x78] sm:$0xff]
        %v3830 = vld [vmem:[#allocation8] sm:$0x1]
        %v3832 = vlaneseq
        %v3833 = vshrl.u32 %v3832, 7
        %v3834 = vsub.s32 0, %v3833
        %v3835 = vrot.slane %v3830, %v3834
        %3837 = vmatprep.subr.mxu0 0.0
        %3838 = vmatpush1.msra.mxu0 %v3814
        %3839 = vmatprep.subr.mxu0 0.0
        %3840 = vmatpush1.msra.mxu0 %v3815
        %3841 = vmatprep.subr.mxu0 0.0
        %3842 = vmatpush1.msra.mxu0 %v3816
        %3843 = vmatprep.subr.mxu0 0.0
        %3844 = vmatpush1.msra.mxu0 %v3817
        %3845 = vmatprep.subr.mxu0 0.0
        %3846 = vmatpush1.msra.mxu0 %v3818
        %3847 = vmatprep.subr.mxu0 0.0
        %3848 = vmatpush1.msra.mxu0 %v3819
        %3849 = vmatprep.subr.mxu0 0.0
        %3850 = vmatpush1.msra.mxu0 %v3820
        %3851 = vmatprep.subr.mxu0 0.0
        %3852 = vmatpush1.msra.mxu0 %v3821
        %3853 = vmatprep.subr.mxu0 0.0
        %3854 = vmatpush1.msra.mxu0 %v3822
        %3855 = vmatprep.subr.mxu0 0.0
        %3856 = vmatpush1.msra.mxu0 %v3823
        %3857 = vmatprep.subr.mxu0 0.0
        %3858 = vmatpush1.msra.mxu0 %v3824
        %3859 = vmatprep.subr.mxu0 0.0
        %3860 = vmatpush1.msra.mxu0 %v3825
        %3861 = vmatprep.subr.mxu0 0.0
        %3862 = vmatpush1.msra.mxu0 %v3826
        %3863 = vmatprep.subr.mxu0 0.0
        %3864 = vmatpush1.msra.mxu0 %v3827
        %3865 = vmatprep.subr.mxu0 0.0
        %3866 = vmatpush1.msra.mxu0 %v3828
        %3867 = vmatprep.subr.mxu0 0.0
        %3868 = vmatpush1.msra.mxu0 %v3829
        %3869 = vmatprep.subr.mxu0 0.0
        %3870 = vmatpush1.msra.mxu0 0.0
        %3871 = vmatprep.subr.mxu0 0.0
        %3872 = vmatpush1.msra.mxu0 0.0
        %3873 = vmatprep.subr.mxu0 0.0
        %3874 = vmatpush1.msra.mxu0 0.0
        %3875 = vmatprep.subr.mxu0 0.0
        %3876 = vmatpush1.msra.mxu0 0.0
        %3877 = vmatprep.subr.mxu0 0.0
        %3878 = vmatpush1.msra.mxu0 0.0
        %3879 = vmatprep.subr.mxu0 0.0
        %3880 = vmatpush1.msra.mxu0 0.0
        %3881 = vmatprep.subr.mxu0 0.0
        %3882 = vmatpush1.msra.mxu0 0.0
        %3883 = vmatprep.subr.mxu0 0.0
        %3884 = vmatpush1.msra.mxu0 0.0
        %3885 = vmatprep.subr.mxu0 0.0
        %3886 = vmatpush1.msra.mxu0 0.0
        %3887 = vmatprep.subr.mxu0 0.0
        %3888 = vmatpush1.msra.mxu0 0.0
        %3889 = vmatprep.subr.mxu0 0.0
        %3890 = vmatpush1.msra.mxu0 0.0
        %3891 = vmatprep.subr.mxu0 0.0
        %3892 = vmatpush1.msra.mxu0 0.0
        %3893 = vmatprep.subr.mxu0 0.0
        %3894 = vmatpush1.msra.mxu0 0.0
        %3895 = vmatprep.subr.mxu0 0.0
        %3896 = vmatpush1.msra.mxu0 0.0
        %3897 = vmatprep.subr.mxu0 0.0
        %3898 = vmatpush1.msra.mxu0 0.0
        %3899 = vmatprep.subr.mxu0 0.0
        %3900 = vmatpush1.msra.mxu0 0.0
        %3901 = vmatprep.mubr.f32.mxu0 0.0
        %3902 = vmatmul.mubr.f32.gmra.mrb[0].mxu0 %v3782
        %v3903 = vpop.f32.mrb[0].mxu0
        %v3904 = vadd.f32 %v3835, %v3903
        %v3905 = vpop.f32.mrb[0].mxu0
        %3906 = vmatprep.mubr.f32.mxu0 0.0
        %3907 = vmatmul.mubr.f32.gmra.mrb[0].mxu0 %v3783
        %v3908 = vpop.f32.mrb[0].mxu0
        %v3909 = vadd.f32 %v3835, %v3908
        %v3910 = vpop.f32.mrb[0].mxu0
        %3911 = vmatprep.mubr.f32.mxu0 0.0
        %3912 = vmatmul.mubr.f32.gmra.mrb[0].mxu0 %v3784
        %v3913 = vpop.f32.mrb[0].mxu0
        %v3914 = vadd.f32 %v3835, %v3913
        %v3915 = vpop.f32.mrb[0].mxu0
        %3916 = vmatprep.mubr.f32.mxu0 0.0
        %3917 = vmatmul.mubr.f32.gmra.mrb[0].mxu0 %v3785
        %v3918 = vpop.f32.mrb[0].mxu0
        %v3919 = vadd.f32 %v3835, %v3918
        %v3920 = vpop.f32.mrb[0].mxu0
        %3921 = vmatprep.mubr.f32.mxu0 0.0
        %3922 = vmatmul.mubr.f32.gmra.mrb[0].mxu0 %v3786
        %v3923 = vpop.f32.mrb[0].mxu0
        %v3924 = vadd.f32 %v3835, %v3923
        %v3925 = vpop.f32.mrb[0].mxu0
        %3926 = vmatprep.mubr.f32.mxu0 0.0
        %3927 = vmatmul.mubr.f32.gmra.mrb[0].mxu0 %v3787
        %v3928 = vpop.f32.mrb[0].mxu0
        %v3929 = vadd.f32 %v3835, %v3928
        %v3930 = vpop.f32.mrb[0].mxu0
        %3931 = vmatprep.mubr.f32.mxu0 0.0
        %3932 = vmatmul.mubr.f32.gmra.mrb[0].mxu0 %v3788
        %v3933 = vpop.f32.mrb[0].mxu0
        %v3934 = vadd.f32 %v3835, %v3933
        %v3935 = vpop.f32.mrb[0].mxu0
        %3936 = vmatprep.mubr.f32.mxu0 0.0
        %3937 = vmatmul.mubr.f32.gmra.mrb[0].mxu0 %v3789
        %v3938 = vpop.f32.mrb[0].mxu0
        %v3939 = vadd.f32 %v3835, %v3938
        %v3940 = vpop.f32.mrb[0].mxu0
        %3941 = vmatprep.mubr.f32.mxu0 0.0
        %3942 = vmatmul.mubr.f32.gmra.mrb[0].mxu0 %v3790
        %v3943 = vpop.f32.mrb[0].mxu0
        %v3944 = vadd.f32 %v3835, %v3943
        %v3945 = vpop.f32.mrb[0].mxu0
        %3946 = vmatprep.mubr.f32.mxu0 0.0
        %3947 = vmatmul.mubr.f32.gmra.mrb[0].mxu0 %v3791
        %v3948 = vpop.f32.mrb[0].mxu0
        %v3949 = vadd.f32 %v3835, %v3948
        %v3950 = vpop.f32.mrb[0].mxu0
        %3951 = vmatprep.mubr.f32.mxu0 0.0
        %3952 = vmatmul.mubr.f32.gmra.mrb[0].mxu0 %v3792
        %v3953 = vpop.f32.mrb[0].mxu0
        %v3954 = vadd.f32 %v3835, %v3953
        %v3955 = vpop.f32.mrb[0].mxu0
        %3956 = vmatprep.mubr.f32.mxu0 0.0
        %3957 = vmatmul.mubr.f32.gmra.mrb[0].mxu0 %v3793
        %v3958 = vpop.f32.mrb[0].mxu0
        %v3959 = vadd.f32 %v3835, %v3958
        %v3960 = vpop.f32.mrb[0].mxu0
        %3961 = vmatprep.mubr.f32.mxu0 0.0
        %3962 = vmatmul.mubr.f32.gmra.mrb[0].mxu0 %v3794
        %v3963 = vpop.f32.mrb[0].mxu0
        %v3964 = vadd.f32 %v3835, %v3963
        %v3965 = vpop.f32.mrb[0].mxu0
        %3966 = vmatprep.mubr.f32.mxu0 0.0
        %3967 = vmatmul.mubr.f32.gmra.mrb[0].mxu0 %v3795
        %v3968 = vpop.f32.mrb[0].mxu0
        %v3969 = vadd.f32 %v3835, %v3968
        %v3970 = vpop.f32.mrb[0].mxu0
        %3971 = vmatprep.mubr.f32.mxu0 0.0
        %3972 = vmatmul.mubr.f32.gmra.mrb[0].mxu0 %v3796
        %v3973 = vpop.f32.mrb[0].mxu0
        %v3974 = vadd.f32 %v3835, %v3973
        %v3975 = vpop.f32.mrb[0].mxu0
        %3976 = vmatprep.mubr.f32.mxu0 0.0
        %3977 = vmatmul.mubr.f32.gmra.mrb[0].mxu0 %v3797
        %v3978 = vpop.f32.mrb[0].mxu0
        %v3979 = vadd.f32 %v3835, %v3978
        %v3980 = vpop.f32.mrb[0].mxu0
        %3981 = vmatprep.mubr.f32.mxu0 0.0
        %3982 = vmatmul.mubr.f32.gmra.mrb[0].mxu0 %v3798
        %v3983 = vpop.f32.mrb[0].mxu0
        %v3984 = vadd.f32 %v3835, %v3983
        %v3985 = vpop.f32.mrb[0].mxu0
        %3986 = vmatprep.mubr.f32.mxu0 0.0
        %3987 = vmatmul.mubr.f32.gmra.mrb[0].mxu0 %v3799
        %v3988 = vpop.f32.mrb[0].mxu0
        %v3989 = vadd.f32 %v3835, %v3988
        %v3990 = vpop.f32.mrb[0].mxu0
        %3991 = vmatprep.mubr.f32.mxu0 0.0
        %3992 = vmatmul.mubr.f32.gmra.mrb[0].mxu0 %v3800
        %v3993 = vpop.f32.mrb[0].mxu0
        %v3994 = vadd.f32 %v3835, %v3993
        %v3995 = vpop.f32.mrb[0].mxu0
        %3996 = vmatprep.mubr.f32.mxu0 0.0
        %3997 = vmatmul.mubr.f32.gmra.mrb[0].mxu0 %v3801
        %v3998 = vpop.f32.mrb[0].mxu0
        %v3999 = vadd.f32 %v3835, %v3998
        %v4000 = vpop.f32.mrb[0].mxu0
        %4001 = vmatprep.mubr.f32.mxu0 0.0
        %4002 = vmatmul.mubr.f32.gmra.mrb[0].mxu0 %v3802
        %v4003 = vpop.f32.mrb[0].mxu0
        %v4004 = vadd.f32 %v3835, %v4003
        %v4005 = vpop.f32.mrb[0].mxu0
        %4006 = vmatprep.mubr.f32.mxu0 0.0
        %4007 = vmatmul.mubr.f32.gmra.mrb[0].mxu0 %v3803
        %v4008 = vpop.f32.mrb[0].mxu0
        %v4009 = vadd.f32 %v3835, %v4008
        %v4010 = vpop.f32.mrb[0].mxu0
        %4011 = vmatprep.mubr.f32.mxu0 0.0
        %4012 = vmatmul.mubr.f32.gmra.mrb[0].mxu0 %v3804
        %v4013 = vpop.f32.mrb[0].mxu0
        %v4014 = vadd.f32 %v3835, %v4013
        %v4015 = vpop.f32.mrb[0].mxu0
        %4016 = vmatprep.mubr.f32.mxu0 0.0
        %4017 = vmatmul.mubr.f32.gmra.mrb[0].mxu0 %v3805
        %v4018 = vpop.f32.mrb[0].mxu0
        %v4019 = vadd.f32 %v3835, %v4018
        %v4020 = vpop.f32.mrb[0].mxu0
        %4021 = vmatprep.mubr.f32.mxu0 0.0
        %4022 = vmatmul.mubr.f32.gmra.mrb[0].mxu0 %v3806
        %v4023 = vpop.f32.mrb[0].mxu0
        %v4024 = vadd.f32 %v3835, %v4023
        %v4025 = vpop.f32.mrb[0].mxu0
        %4026 = vmatprep.mubr.f32.mxu0 0.0
        %4027 = vmatmul.mubr.f32.gmra.mrb[0].mxu0 %v3807
        %v4028 = vpop.f32.mrb[0].mxu0
        %v4029 = vadd.f32 %v3835, %v4028
        %v4030 = vpop.f32.mrb[0].mxu0
        %4031 = vmatprep.mubr.f32.mxu0 0.0
        %4032 = vmatmul.mubr.f32.gmra.mrb[0].mxu0 %v3808
        %v4033 = vpop.f32.mrb[0].mxu0
        %v4034 = vadd.f32 %v3835, %v4033
        %v4035 = vpop.f32.mrb[0].mxu0
        %4036 = vmatprep.mubr.f32.mxu0 0.0
        %4037 = vmatmul.mubr.f32.gmra.mrb[0].mxu0 %v3809
        %v4038 = vpop.f32.mrb[0].mxu0
        %v4039 = vadd.f32 %v3835, %v4038
        %v4040 = vpop.f32.mrb[0].mxu0
        %4041 = vmatprep.mubr.f32.mxu0 0.0
        %4042 = vmatmul.mubr.f32.gmra.mrb[0].mxu0 %v3810
        %v4043 = vpop.f32.mrb[0].mxu0
        %v4044 = vadd.f32 %v3835, %v4043
        %v4045 = vpop.f32.mrb[0].mxu0
        %4046 = vmatprep.mubr.f32.mxu0 0.0
        %4047 = vmatmul.mubr.f32.gmra.mrb[0].mxu0 %v3811
        %v4048 = vpop.f32.mrb[0].mxu0
        %v4049 = vadd.f32 %v3835, %v4048
        %v4050 = vpop.f32.mrb[0].mxu0
        %4051 = vmatprep.mubr.f32.mxu0 0.0
        %4052 = vmatmul.mubr.f32.gmra.mrb[0].mxu0 %v3812
        %v4053 = vpop.f32.mrb[0].mxu0
        %v4054 = vadd.f32 %v3835, %v4053
        %v4055 = vpop.f32.mrb[0].mxu0
        %4056 = vmatprep.mubr.f32.mxu0 0.0
        %4057 = vmatmul.mubr.f32.gmra.mrb[0].mxu0 %v3813
        %v4058 = vpop.f32.mrb[0].mxu0
        %v4059 = vadd.f32 %v3835, %v4058
        %v4060 = vpop.f32.mrb[0].mxu0
        %4061 = vdwg.mxu0
        %vm4062 = vcmask 7168
        %4063 = vst.msk [vmem:[%s626] sm:$0xff] %vm4062, %v3904
        %4064 = vst.msk [vmem:[%s626 + $0x8] sm:$0xff] %vm4062, %v3909
        %4065 = vst.msk [vmem:[%s626 + $0x10] sm:$0xff] %vm4062, %v3914
        %4066 = vst.msk [vmem:[%s626 + $0x18] sm:$0xff] %vm4062, %v3919
        %4067 = vst.msk [vmem:[%s626 + $0x20] sm:$0xff] %vm4062, %v3924
        %4068 = vst.msk [vmem:[%s626 + $0x28] sm:$0xff] %vm4062, %v3929
        %4069 = vst.msk [vmem:[%s626 + $0x30] sm:$0xff] %vm4062, %v3934
        %4070 = vst.msk [vmem:[%s626 + $0x38] sm:$0xff] %vm4062, %v3939
        %4071 = vst.msk [vmem:[%s626 + $0x40] sm:$0xff] %vm4062, %v3944
        %4072 = vst.msk [vmem:[%s626 + $0x48] sm:$0xff] %vm4062, %v3949
        %4073 = vst.msk [vmem:[%s626 + $0x50] sm:$0xff] %vm4062, %v3954
        %4074 = vst.msk [vmem:[%s626 + $0x58] sm:$0xff] %vm4062, %v3959
        %4075 = vst.msk [vmem:[%s626 + $0x60] sm:$0xff] %vm4062, %v3964
        %4076 = vst.msk [vmem:[%s626 + $0x68] sm:$0xff] %vm4062, %v3969
        %4077 = vst.msk [vmem:[%s626 + $0x70] sm:$0xff] %vm4062, %v3974
        %4078 = vst.msk [vmem:[%s626 + $0x78] sm:$0xff] %vm4062, %v3979
        %4079 = vst.msk [vmem:[%s626 + $0x80] sm:$0xff] %vm4062, %v3984
        %4080 = vst.msk [vmem:[%s626 + $0x88] sm:$0xff] %vm4062, %v3989
        %4081 = vst.msk [vmem:[%s626 + $0x90] sm:$0xff] %vm4062, %v3994
        %4082 = vst.msk [vmem:[%s626 + $0x98] sm:$0xff] %vm4062, %v3999
        %4083 = vst.msk [vmem:[%s626 + $0xa0] sm:$0xff] %vm4062, %v4004
        %4084 = vst.msk [vmem:[%s626 + $0xa8] sm:$0xff] %vm4062, %v4009
        %4085 = vst.msk [vmem:[%s626 + $0xb0] sm:$0xff] %vm4062, %v4014
        %4086 = vst.msk [vmem:[%s626 + $0xb8] sm:$0xff] %vm4062, %v4019
        %4087 = vst.msk [vmem:[%s626 + $0xc0] sm:$0xff] %vm4062, %v4024
        %4088 = vst.msk [vmem:[%s626 + $0xc8] sm:$0xff] %vm4062, %v4029
        %4089 = vst.msk [vmem:[%s626 + $0xd0] sm:$0xff] %vm4062, %v4034
        %4090 = vst.msk [vmem:[%s626 + $0xd8] sm:$0xff] %vm4062, %v4039
        %4091 = vst.msk [vmem:[%s626 + $0xe0] sm:$0xff] %vm4062, %v4044
        %4092 = vst.msk [vmem:[%s626 + $0xe8] sm:$0xff] %vm4062, %v4049
        %4093 = vst.msk [vmem:[%s626 + $0xf0] sm:$0xff] %vm4062, %v4054
        %4094 = vst.msk [vmem:[%s626 + $0xf8] sm:$0xff] %vm4062, %v4059
        %s4095 = smul.u32 32, %s42
        %p4096 = scmp.lt.s32.totalorder %s4095, 127
        %s4097 = scalar_select %p4096, %s4095, 127
        %s4098 = smul.addr %s4097, 8
        %s4099 = scalar_lea.vmem %s18, %s4098
        // Predicated region
        $region120: #{tpu_custom_call.1} parent=87 // pred_check
          %p4100 = pneg %p417
        $region121: #{tpu_custom_call.1} parent=87 // pred_check_branch
          %4102 = sbr.rel (%p4100) target = $region123
        $region122: #{tpu_custom_call.1} parent=87 // pred_region
          %s4103 = smul.u32 32, %s42
        $region123: #{tpu_custom_call.1} parent=87 // pred_fallthru
          _
      $region88: #{tpu_custom_call.1} parent=5 // pred_fallthru
        _
      %p4104 = scmp.le.s32.totalorder 2, %s37
      // Predicated region
      $region124: #{tpu_custom_call.1} parent=5 // pred_check
        %p4105 = pneg %p4104
      $region125: #{tpu_custom_call.1} parent=5 // pred_check_branch
        %4107 = sbr.rel (%p4105) target = $region127
      $region126: #{tpu_custom_call.1} parent=5 // pred_region
        %s4108 = ssub.s32 %s37, 2
        // Predicated region
        $region128: #{tpu_custom_call.1} parent=126 // pred_check
          %p4109 = pneg %p423
        $region129: #{tpu_custom_call.1} parent=126 // pred_check_branch
          %4111 = sbr.rel (%p4109) target = $region131
        $region130: #{tpu_custom_call.1} parent=126 // pred_region
          %s4112 = smul.u32 32, %s43
          %p4113 = scmp.lt.s32.totalorder %s4112, 127
          %s4114 = scalar_select %p4113, %s4112, 127
          %s4115 = smul.addr %s4114, 8
          %s4116 = scalar_lea.vmem %s18, %s4115
        $region131: #{tpu_custom_call.1} parent=126 // pred_fallthru
          _
      $region127: #{tpu_custom_call.1} parent=5 // pred_fallthru
        _
    $region6: #{tpu_custom_call.1} parent=1 // loop_footer
      %s41 = sadd.s32 1, %s37
    $region7: #{tpu_custom_call.1} parent=1 // loop_footer_branch
      %36 = sbr.rel target = $region3
    $region8: #{tpu_custom_call.1} parent=1 // loop_exit
      _
    %4117 = vsyncpa [#allocation11], 1
    %s4118 = scalar_lea.sflag [#allocation11], 1
    %4119 = vsyncpa %s4118, 1
    %4120 = vsyncpa [#allocation13], 1
    %4121 = vsyncpa [#allocation16], 1
    %4122 = vsyncpa [#allocation19], 1

</llo_original>
